<compile_context>
chip_gen: v7x
topology: tpu7x:2x2x1
jax: 0.10.0
libtpu: 0.0.40
codegen_flags: <defaults>
</compile_context>

<pallas_src>
import functools
import numpy as np

import jax
import jax.numpy as jnp
from jax.experimental import pallas as pl
from jax.experimental.pallas import tpu as pltpu


K_SEG = 4                     # PointNetDenseCls per-point classes (small stand-in)
N_POINTS = 64
IMG_FEAT = 512
CTRL_H0 = 128                 # controller first hidden width
CTRL_IN = K_SEG * N_POINTS + IMG_FEAT + 128 + 128   # 1024 (split-weight fan-in)

_PARAM_ORDER = (
    "pn_w1", "pn_w2", "pn_w3", "pn_ws1h", "pn_ws1g", "pn_ws2", "pn_ws3", "pn_wc0", "pn_bias",
    "im_w1", "im_w2", "im_wfc", "im_wc0", "im_bias",
    "h_wg0", "h_wg1", "h_wp0", "h_wp1", "h_wc0g", "h_wc0p", "h_wc1", "h_wc2", "h_wc3", "h_bias",
)


# --------------------------------------------------------------------------
# Single fused Pallas kernel (one batch element per grid step)
# --------------------------------------------------------------------------
def _bc_fused_kernel(pcl_ref, patch_ref, goal_ref, prev_ref,
                     pn_w1, pn_w2, pn_w3, pn_ws1h, pn_ws1g, pn_ws2, pn_ws3, pn_wc0, pn_bias,
                     im_w1, im_w2, im_wfc, im_wc0, im_bias,
                     h_wg0, h_wg1, h_wp0, h_wp1, h_wc0g, h_wc0p, h_wc1, h_wc2, h_wc3, h_bias,
                     o_ref):
    dot = lambda a, b: jnp.dot(a, b, preferred_element_type=jnp.float32)
    relu = lambda v: jnp.maximum(v, 0.0)
    pcol = lambda r, n: pn_bias[0:n, r:r + 1]        # packed pcl bias slab, column r -> (n, 1)
    hrow = lambda r, n: h_bias[r:r + 1, 0:n]         # packed head bias slab, row r -> (1, n)

    # ---- PointNet branch (feature-major: (channels, points)) ----
    x = pcl_ref[0]                                                         # (3, N)
    h1 = relu(dot(pn_w1[...], x) + pcol(0, pn_w1.shape[0]))                # (32, N)
    h2 = relu(dot(pn_w2[...], h1) + pcol(1, pn_w2.shape[0]))               # (64, N)
    h3 = dot(pn_w3[...], h2) + pcol(2, pn_w3.shape[0])                     # (128, N)
    g = jnp.max(h3, axis=1, keepdims=True)                                 # (128, 1) global feat

    # seg head: [local | global] concat replaced by a split-weight sum
    s1 = relu(dot(pn_ws1h[...], h1) + dot(pn_ws1g[...], g)
              + pcol(3, pn_ws1h.shape[0]))                                 # (64, N)
    s2 = relu(dot(pn_ws2[...], s1) + pcol(4, pn_ws2.shape[0]))             # (32, N)
    lg = dot(pn_ws3[...], s2) + pcol(5, pn_ws3.shape[0])                   # (K, N) logits
    lg = lg - jnp.max(lg, axis=0, keepdims=True)
    lp = lg - jnp.log(jnp.sum(jnp.exp(lg), axis=0, keepdims=True))         # per-point log-softmax

    # controller layer-0 partial, pcl branch (class-major weight rows; no (1,K*N) reshape)
    k_cls, n_pts = lp.shape
    acc_pcl = jnp.zeros((1, CTRL_H0), jnp.float32)
    for k in range(k_cls):
        acc_pcl = acc_pcl + dot(lp[k:k + 1, :], pn_wc0[k * n_pts:(k + 1) * n_pts, :])

    # ---- image stem: conv1 & conv2 as 9 per-offset matmuls over pre-gathered patches ----
    n_off = 9
    n_pos = patch_ref.shape[0] // n_off                   # conv2 output pixels (4*4)
    c1 = im_w1.shape[1]                                   # conv1 output channels (16)
    acc = jnp.zeros((n_pos, im_w2.shape[1]), jnp.float32)
    for k in range(n_off):
        pk = patch_ref[k * n_pos:(k + 1) * n_pos, :]      # (16, 128) conv1 patches, offset k
        h1k = relu(dot(pk, im_w1[...]))                   # conv1 + folded bias + ReLU
        acc = acc + dot(h1k, im_w2[k * c1:(k + 1) * c1, :])
    s2i = relu(acc + im_bias[0:1, 0:im_w2.shape[1]])      # conv2 bias + ReLU
    gap = jnp.mean(s2i, axis=0, keepdims=True)            # (1, 32) global avg pool
    feat = dot(gap, im_wfc[...]) + im_bias[1:2, :]        # (1, 512) image feature
    acc_img = dot(feat, im_wc0[...])                      # (1, 128) controller-l0 partial (image)

    # ---- goal / prev-cmd encoders + controller MLP ----
    gl = goal_ref[0]                                      # (1, 2)
    pv = prev_ref[0]                                      # (1, 40)
    g_enc = relu(dot(gl, h_wg0[...]) + hrow(0, h_wg0.shape[1]))
    g_enc = dot(g_enc, h_wg1[...]) + hrow(1, h_wg1.shape[1])        # goal encoder (l_act=False)
    p_enc = relu(dot(pv, h_wp0[...]) + hrow(2, h_wp0.shape[1]))
    p_enc = dot(p_enc, h_wp1[...]) + hrow(3, h_wp1.shape[1])        # prev-cmd encoder

    c = relu(acc_pcl + acc_img + dot(g_enc, h_wc0g[...]) + dot(p_enc, h_wc0p[...])
             + hrow(4, h_wc0g.shape[1]))                            # controller layer 0
    c = relu(dot(c, h_wc1[...]) + hrow(5, h_wc1.shape[1]))
    c = relu(dot(c, h_wc2[...]) + hrow(6, h_wc2.shape[1]))
    out = dot(c, h_wc3[...]) + hrow(7, h_wc3.shape[1])              # (1, 128) lane-padded result
    o_ref[...] = out.reshape(1, 1, CTRL_H0)


# --------------------------------------------------------------------------
# pallas_call wrapper
# --------------------------------------------------------------------------
def _const_spec(a):
    nd = a.ndim
    return pl.BlockSpec(a.shape, lambda *_: (0,) * nd)


def bc_model_pcl_forward(params, pcl, stacked_images, local_goal, prev_cmd_vel):
    B = pcl.shape[0]
    patches = build_image_patches(stacked_images)                     # (B*144, 128)
    rows = patches.shape[0] // B
    goal3 = local_goal.astype(jnp.float32).reshape(B, 1, -1)          # (B, 1, 2)
    prev3 = prev_cmd_vel.astype(jnp.float32).reshape(B, 1, -1)        # (B, 1, 40)
    ws = [params[k] for k in _PARAM_ORDER]

    out = pl.pallas_call(
        _bc_fused_kernel,
        grid=(B,),
        in_specs=[
            pl.BlockSpec((1, pcl.shape[1], pcl.shape[2]), lambda b: (b, 0, 0)),
            pl.BlockSpec((rows, patches.shape[1]), lambda b: (b, 0)),
            pl.BlockSpec((1, 1, goal3.shape[-1]), lambda b: (b, 0, 0)),
            pl.BlockSpec((1, 1, prev3.shape[-1]), lambda b: (b, 0, 0)),
        ] + [_const_spec(w) for w in ws],
        out_specs=pl.BlockSpec((1, 1, CTRL_H0), lambda b: (b, 0, 0)),
        out_shape=jax.ShapeDtypeStruct((B, 1, CTRL_H0), jnp.float32),
        compiler_params=pltpu.CompilerParams(dimension_semantics=("parallel",)),
    )(pcl.astype(jnp.float32), patches, goal3, prev3, *ws)
    return out[:, 0, :2]                                              # (B, 2)


# --------------------------------------------------------------------------
# Glue: NCHW images -> per-offset conv1 patches (pure JAX gather, no compute)
# --------------------------------------------------------------------------
def build_image_patches(imgs_nchw):
    """Rows (per batch element) ordered (conv2 kernel offset k, conv2 output pixel);
    each row = [108 conv1-patch values | 1.0 valid flag | zero pad] (width 128).
    Rows created by conv2's zero padding are all-zero (flag 0), so the bias-folded
    conv1 matmul yields exactly 0 there — matching zero padding of conv1's output."""
    B, C, H, W = imgs_nchw.shape
    x = imgs_nchw.astype(jnp.float32).transpose(0, 2, 3, 1)          # NHWC, done once
    xp = jnp.pad(x, ((0, 0), (1, 1), (1, 1), (0, 0)))                # conv1 padding
    ho1 = (H + 2 - 3) // 2 + 1
    wo1 = (W + 2 - 3) // 2 + 1
    cols = [xp[:, i:i + 2 * ho1:2, j:j + 2 * wo1:2, :] for i in range(3) for j in range(3)]
    p1 = jnp.concatenate(cols, axis=-1)                              # (B, 8, 8, C*9) (kh,kw,cin)
    kdim = p1.shape[-1]
    assert kdim + 1 <= 128, "conv1 patch width must fit the 128-wide padded K"
    flag = jnp.ones(p1.shape[:-1] + (1,), p1.dtype)
    pad = jnp.zeros(p1.shape[:-1] + (128 - kdim - 1,), p1.dtype)
    p1 = jnp.concatenate([p1, flag, pad], axis=-1)                   # (B, 8, 8, 128)
    p1p = jnp.pad(p1, ((0, 0), (1, 1), (1, 1), (0, 0)))              # conv2 zero padding
    ho2 = (ho1 + 2 - 3) // 2 + 1
    wo2 = (wo1 + 2 - 3) // 2 + 1
    cols2 = [p1p[:, i:i + 2 * ho2:2, j:j + 2 * wo2:2, :] for i in range(3) for j in range(3)]
    pn = jnp.stack(cols2, axis=1)                                    # (B, 9, 4, 4, 128)
    return pn.reshape(B * 9 * ho2 * wo2, 128)


# --------------------------------------------------------------------------
# Deterministic parameter init (synthetic weights, stored in kernel layout)
# --------------------------------------------------------------------------
def _w(key, shape, fan_in):
    return jax.random.normal(key, shape, jnp.float32) / np.sqrt(fan_in)


def _b(key, n):
    return jax.random.normal(key, (n,), jnp.float32) * 0.01


def init_params(key):
    ks = iter(jax.random.split(key, 48))
    p = {}
    # ---- PointNet (weights feature-major: (out_ch, in_ch)) ----
    p["pn_w1"] = _w(next(ks), (32, 3), 3)
    p["pn_w2"] = _w(next(ks), (64, 32), 32)
    p["pn_w3"] = _w(next(ks), (128, 64), 64)
    p["pn_ws1h"] = _w(next(ks), (64, 32), 160)     # seg1 split weight: per-point half
    p["pn_ws1g"] = _w(next(ks), (64, 128), 160)    # seg1 split weight: global-feature half
    p["pn_ws2"] = _w(next(ks), (32, 64), 64)
    p["pn_ws3"] = _w(next(ks), (K_SEG, 32), 32)
    p["pn_wc0"] = _w(next(ks), (K_SEG * N_POINTS, CTRL_H0), CTRL_IN)   # class-major rows
    slab = jnp.zeros((128, 8), jnp.float32)        # packed per-layer bias columns
    for r, n in enumerate((32, 64, 128, 64, 32, K_SEG)):
        slab = slab.at[:n, r].set(_b(next(ks), n))
    p["pn_bias"] = slab
    # ---- image stem (conv weights flattened (kh, kw, cin)-major) ----
    w1 = _w(next(ks), (108, 16), 108)
    b1 = _b(next(ks), 16)
    p["im_w1"] = jnp.concatenate(                  # conv1 bias folded into row 108, K padded to 128
        [w1, b1[None, :], jnp.zeros((128 - 109, 16), jnp.float32)], axis=0)
    p["im_w2"] = _w(next(ks), (9 * 16, 32), 144)   # rows ordered (kernel offset, conv1 channel)
    p["im_wfc"] = _w(next(ks), (32, IMG_FEAT), 32)
    p["im_wc0"] = _w(next(ks), (IMG_FEAT, CTRL_H0), CTRL_IN)
    slab = jnp.zeros((8, IMG_FEAT), jnp.float32)
    slab = slab.at[0, :32].set(_b(next(ks), 32))
    slab = slab.at[1, :].set(_b(next(ks), IMG_FEAT))
    p["im_bias"] = slab
    # ---- goal / prev-cmd encoders + controller ----
    p["h_wg0"] = _w(next(ks), (2, 256), 2)
    p["h_wg1"] = _w(next(ks), (256, 128), 256)
    p["h_wp0"] = _w(next(ks), (2 * 20, 64), 2 * 20)
    p["h_wp1"] = _w(next(ks), (64, 128), 64)
    p["h_wc0g"] = _w(next(ks), (128, CTRL_H0), CTRL_IN)
    p["h_wc0p"] = _w(next(ks), (128, CTRL_H0), CTRL_IN)
    p["h_wc1"] = _w(next(ks), (CTRL_H0, 64), CTRL_H0)
    p["h_wc2"] = _w(next(ks), (64, 32), 64)
    wc3 = _w(next(ks), (32, 2), 32)                # final layer lane-padded to 128 cols
    p["h_wc3"] = jnp.concatenate([wc3, jnp.zeros((32, CTRL_H0 - 2), jnp.float32)], axis=1)
    slab = jnp.zeros((8, 256), jnp.float32)
    for r, n in enumerate((256, 128, 64, 128, 128, 64, 32, 2)):
        slab = slab.at[r, :n].set(_b(next(ks), n))
    p["h_bias"] = slab
    return p


# --------------------------------------------------------------------------
if __name__ == "__main__":
    B = 2
    key = jax.random.PRNGKey(0)
    k1, k2, k3, k4 = jax.random.split(key, 4)
    pcl = jax.random.normal(k1, (B, 3, N_POINTS), jnp.float32)               # (B, 3, N)
    stacked_images = jax.random.normal(k2, (B, 4 * 3, 16, 16), jnp.float32)  # NCHW
    local_goal = jax.random.normal(k3, (B, 2), jnp.float32)
    prev_cmd_vel = jax.random.normal(k4, (B, 2 * 20), jnp.float32)

    params = init_params(jax.random.PRNGKey(42))

    fwd = jax.jit(functools.partial(bc_model_pcl_forward, params))
    out = fwd(pcl, stacked_images, local_goal, prev_cmd_vel)
    jax.block_until_ready(out)
    assert out.shape == (B, 2) and out.dtype == jnp.float32
    assert bool(jnp.all(jnp.isfinite(out)))
    print("KERNEL_OK")
</pallas_src>

<mosaic_0001>
module attributes {stable_mosaic.version = 11 : i64} {
  func.func @_bc_fused_kernel(%arg0: i32, %arg1: memref<1x3x64xf32, #tpu.memory_space<vmem>>, %arg2: memref<144x128xf32, #tpu.memory_space<vmem>>, %arg3: memref<1x1x2xf32, #tpu.memory_space<vmem>>, %arg4: memref<1x1x40xf32, #tpu.memory_space<vmem>>, %arg5: memref<32x3xf32, #tpu.memory_space<vmem>>, %arg6: memref<64x32xf32, #tpu.memory_space<vmem>>, %arg7: memref<128x64xf32, #tpu.memory_space<vmem>>, %arg8: memref<64x32xf32, #tpu.memory_space<vmem>>, %arg9: memref<64x128xf32, #tpu.memory_space<vmem>>, %arg10: memref<32x64xf32, #tpu.memory_space<vmem>>, %arg11: memref<4x32xf32, #tpu.memory_space<vmem>>, %arg12: memref<256x128xf32, #tpu.memory_space<vmem>>, %arg13: memref<128x8xf32, #tpu.memory_space<vmem>>, %arg14: memref<128x16xf32, #tpu.memory_space<vmem>>, %arg15: memref<144x32xf32, #tpu.memory_space<vmem>>, %arg16: memref<32x512xf32, #tpu.memory_space<vmem>>, %arg17: memref<512x128xf32, #tpu.memory_space<vmem>>, %arg18: memref<8x512xf32, #tpu.memory_space<vmem>>, %arg19: memref<2x256xf32, #tpu.memory_space<vmem>>, %arg20: memref<256x128xf32, #tpu.memory_space<vmem>>, %arg21: memref<40x64xf32, #tpu.memory_space<vmem>>, %arg22: memref<64x128xf32, #tpu.memory_space<vmem>>, %arg23: memref<128x128xf32, #tpu.memory_space<vmem>>, %arg24: memref<128x128xf32, #tpu.memory_space<vmem>>, %arg25: memref<128x64xf32, #tpu.memory_space<vmem>>, %arg26: memref<64x32xf32, #tpu.memory_space<vmem>>, %arg27: memref<32x128xf32, #tpu.memory_space<vmem>>, %arg28: memref<8x256xf32, #tpu.memory_space<vmem>>, %arg29: memref<1x1x128xf32, #tpu.memory_space<vmem>>) attributes {dimension_semantics = [#tpu.dimension_semantics<parallel>], iteration_bounds = array<i64: 2>, scalar_prefetch = 0 : i64, scratch_operands = 0 : i64, tpu.core_type = #tpu.core_type<tc>, window_params = [{transform_indices = @transform_0, window_bounds = array<i64: 1, 3, 64>}, {transform_indices = @transform_1, window_bounds = array<i64: 144, 128>}, {transform_indices = @transform_2, window_bounds = array<i64: 1, 1, 2>}, {transform_indices = @transform_3, window_bounds = array<i64: 1, 1, 40>}, {pipeline_mode = #tpu.pipeline_mode<synchronous>, transform_indices = @transform_4, window_bounds = array<i64: 32, 3>}, {pipeline_mode = #tpu.pipeline_mode<synchronous>, transform_indices = @transform_5, window_bounds = array<i64: 64, 32>}, {pipeline_mode = #tpu.pipeline_mode<synchronous>, transform_indices = @transform_6, window_bounds = array<i64: 128, 64>}, {pipeline_mode = #tpu.pipeline_mode<synchronous>, transform_indices = @transform_7, window_bounds = array<i64: 64, 32>}, {pipeline_mode = #tpu.pipeline_mode<synchronous>, transform_indices = @transform_8, window_bounds = array<i64: 64, 128>}, {pipeline_mode = #tpu.pipeline_mode<synchronous>, transform_indices = @transform_9, window_bounds = array<i64: 32, 64>}, {pipeline_mode = #tpu.pipeline_mode<synchronous>, transform_indices = @transform_10, window_bounds = array<i64: 4, 32>}, {pipeline_mode = #tpu.pipeline_mode<synchronous>, transform_indices = @transform_11, window_bounds = array<i64: 256, 128>}, {pipeline_mode = #tpu.pipeline_mode<synchronous>, transform_indices = @transform_12, window_bounds = array<i64: 128, 8>}, {pipeline_mode = #tpu.pipeline_mode<synchronous>, transform_indices = @transform_13, window_bounds = array<i64: 128, 16>}, {pipeline_mode = #tpu.pipeline_mode<synchronous>, transform_indices = @transform_14, window_bounds = array<i64: 144, 32>}, {pipeline_mode = #tpu.pipeline_mode<synchronous>, transform_indices = @transform_15, window_bounds = array<i64: 32, 512>}, {pipeline_mode = #tpu.pipeline_mode<synchronous>, transform_indices = @transform_16, window_bounds = array<i64: 512, 128>}, {pipeline_mode = #tpu.pipeline_mode<synchronous>, transform_indices = @transform_17, window_bounds = array<i64: 8, 512>}, {pipeline_mode = #tpu.pipeline_mode<synchronous>, transform_indices = @transform_18, window_bounds = array<i64: 2, 256>}, {pipeline_mode = #tpu.pipeline_mode<synchronous>, transform_indices = @transform_19, window_bounds = array<i64: 256, 128>}, {pipeline_mode = #tpu.pipeline_mode<synchronous>, transform_indices = @transform_20, window_bounds = array<i64: 40, 64>}, {pipeline_mode = #tpu.pipeline_mode<synchronous>, transform_indices = @transform_21, window_bounds = array<i64: 64, 128>}, {pipeline_mode = #tpu.pipeline_mode<synchronous>, transform_indices = @transform_22, window_bounds = array<i64: 128, 128>}, {pipeline_mode = #tpu.pipeline_mode<synchronous>, transform_indices = @transform_23, window_bounds = array<i64: 128, 128>}, {pipeline_mode = #tpu.pipeline_mode<synchronous>, transform_indices = @transform_24, window_bounds = array<i64: 128, 64>}, {pipeline_mode = #tpu.pipeline_mode<synchronous>, transform_indices = @transform_25, window_bounds = array<i64: 64, 32>}, {pipeline_mode = #tpu.pipeline_mode<synchronous>, transform_indices = @transform_26, window_bounds = array<i64: 32, 128>}, {pipeline_mode = #tpu.pipeline_mode<synchronous>, transform_indices = @transform_27, window_bounds = array<i64: 8, 256>}, {transform_indices = @transform_28, window_bounds = array<i64: 1, 1, 128>}]} {
    %c0 = arith.constant 0 : index
    %c0_0 = arith.constant 0 : index
    %c0_1 = arith.constant 0 : index
    %0 = vector.load %arg1[%c0, %c0_0, %c0_1] : memref<1x3x64xf32, #tpu.memory_space<vmem>>, vector<1x3x64xf32>
    %1 = vector.shape_cast %0 : vector<1x3x64xf32> to vector<3x64xf32>
    %c0_2 = arith.constant 0 : index
    %c0_3 = arith.constant 0 : index
    %2 = vector.load %arg5[%c0_2, %c0_3] : memref<32x3xf32, #tpu.memory_space<vmem>>, vector<32x3xf32>
    %cst = arith.constant dense<0.000000e+00> : vector<32x64xf32>
    %3 = tpu.matmul %2, %1, %cst {dimension_numbers = #tpu.dot_dimension_numbers<[1], [0], [0], [1], [0, 0, 1, 1], [], []>} : vector<32x3xf32>, vector<3x64xf32>, vector<32x64xf32> -> vector<32x64xf32>
    %c0_4 = arith.constant 0 : index
    %c0_5 = arith.constant 0 : index
    %4 = vector.load %arg13[%c0_4, %c0_5] : memref<128x8xf32, #tpu.memory_space<vmem>>, vector<32x1xf32>
    %5 = vector.broadcast %4 : vector<32x1xf32> to vector<32x64xf32>
    %6 = arith.addf %3, %5 : vector<32x64xf32>
    %cst_6 = arith.constant 0.000000e+00 : f32
    %7 = vector.broadcast %cst_6 : f32 to vector<32x64xf32>
    %8 = arith.maximumf %6, %7 : vector<32x64xf32>
    %c0_7 = arith.constant 0 : index
    %c0_8 = arith.constant 0 : index
    %9 = vector.load %arg6[%c0_7, %c0_8] : memref<64x32xf32, #tpu.memory_space<vmem>>, vector<64x32xf32>
    %cst_9 = arith.constant dense<0.000000e+00> : vector<64x64xf32>
    %10 = tpu.matmul %9, %8, %cst_9 {dimension_numbers = #tpu.dot_dimension_numbers<[1], [0], [0], [1], [0, 0, 1, 1], [], []>} : vector<64x32xf32>, vector<32x64xf32>, vector<64x64xf32> -> vector<64x64xf32>
    %c0_10 = arith.constant 0 : index
    %c1 = arith.constant 1 : index
    %11 = vector.load %arg13[%c0_10, %c1] : memref<128x8xf32, #tpu.memory_space<vmem>>, vector<64x1xf32>
    %12 = vector.broadcast %11 : vector<64x1xf32> to vector<64x64xf32>
    %13 = arith.addf %10, %12 : vector<64x64xf32>
    %cst_11 = arith.constant 0.000000e+00 : f32
    %14 = vector.broadcast %cst_11 : f32 to vector<64x64xf32>
    %15 = arith.maximumf %13, %14 : vector<64x64xf32>
    %c0_12 = arith.constant 0 : index
    %c0_13 = arith.constant 0 : index
    %16 = vector.load %arg7[%c0_12, %c0_13] : memref<128x64xf32, #tpu.memory_space<vmem>>, vector<128x64xf32>
    %cst_14 = arith.constant dense<0.000000e+00> : vector<128x64xf32>
    %17 = tpu.matmul %16, %15, %cst_14 {dimension_numbers = #tpu.dot_dimension_numbers<[1], [0], [0], [1], [0, 0, 1, 1], [], []>} : vector<128x64xf32>, vector<64x64xf32>, vector<128x64xf32> -> vector<128x64xf32>
    %c0_15 = arith.constant 0 : index
    %c2 = arith.constant 2 : index
    %18 = vector.load %arg13[%c0_15, %c2] : memref<128x8xf32, #tpu.memory_space<vmem>>, vector<128x1xf32>
    %19 = vector.broadcast %18 : vector<128x1xf32> to vector<128x64xf32>
    %20 = arith.addf %17, %19 : vector<128x64xf32>
    %cst_16 = arith.constant dense<0xFF800000> : vector<128xf32>
    %21 = vector.multi_reduction <maximumf>, %20, %cst_16 [1] : vector<128x64xf32> to vector<128xf32>
    %22 = vector.shape_cast %21 : vector<128xf32> to vector<128x1xf32>
    %c0_17 = arith.constant 0 : index
    %c0_18 = arith.constant 0 : index
    %23 = vector.load %arg8[%c0_17, %c0_18] : memref<64x32xf32, #tpu.memory_space<vmem>>, vector<64x32xf32>
    %cst_19 = arith.constant dense<0.000000e+00> : vector<64x64xf32>
    %24 = tpu.matmul %23, %8, %cst_19 {dimension_numbers = #tpu.dot_dimension_numbers<[1], [0], [0], [1], [0, 0, 1, 1], [], []>} : vector<64x32xf32>, vector<32x64xf32>, vector<64x64xf32> -> vector<64x64xf32>
    %c0_20 = arith.constant 0 : index
    %c0_21 = arith.constant 0 : index
    %25 = vector.load %arg9[%c0_20, %c0_21] : memref<64x128xf32, #tpu.memory_space<vmem>>, vector<64x128xf32>
    %cst_22 = arith.constant dense<0.000000e+00> : vector<64x1xf32>
    %26 = tpu.matmul %25, %22, %cst_22 {dimension_numbers = #tpu.dot_dimension_numbers<[1], [0], [0], [1], [0, 0, 1, 1], [], []>} : vector<64x128xf32>, vector<128x1xf32>, vector<64x1xf32> -> vector<64x1xf32>
    %27 = vector.broadcast %26 : vector<64x1xf32> to vector<64x64xf32>
    %28 = arith.addf %24, %27 : vector<64x64xf32>
    %c0_23 = arith.constant 0 : index
    %c3 = arith.constant 3 : index
    %29 = vector.load %arg13[%c0_23, %c3] : memref<128x8xf32, #tpu.memory_space<vmem>>, vector<64x1xf32>
    %30 = vector.broadcast %29 : vector<64x1xf32> to vector<64x64xf32>
    %31 = arith.addf %28, %30 : vector<64x64xf32>
    %cst_24 = arith.constant 0.000000e+00 : f32
    %32 = vector.broadcast %cst_24 : f32 to vector<64x64xf32>
    %33 = arith.maximumf %31, %32 : vector<64x64xf32>
    %c0_25 = arith.constant 0 : index
    %c0_26 = arith.constant 0 : index
    %34 = vector.load %arg10[%c0_25, %c0_26] : memref<32x64xf32, #tpu.memory_space<vmem>>, vector<32x64xf32>
    %cst_27 = arith.constant dense<0.000000e+00> : vector<32x64xf32>
    %35 = tpu.matmul %34, %33, %cst_27 {dimension_numbers = #tpu.dot_dimension_numbers<[1], [0], [0], [1], [0, 0, 1, 1], [], []>} : vector<32x64xf32>, vector<64x64xf32>, vector<32x64xf32> -> vector<32x64xf32>
    %c0_28 = arith.constant 0 : index
    %c4 = arith.constant 4 : index
    %36 = vector.load %arg13[%c0_28, %c4] : memref<128x8xf32, #tpu.memory_space<vmem>>, vector<32x1xf32>
    %37 = vector.broadcast %36 : vector<32x1xf32> to vector<32x64xf32>
    %38 = arith.addf %35, %37 : vector<32x64xf32>
    %cst_29 = arith.constant 0.000000e+00 : f32
    %39 = vector.broadcast %cst_29 : f32 to vector<32x64xf32>
    %40 = arith.maximumf %38, %39 : vector<32x64xf32>
    %c0_30 = arith.constant 0 : index
    %c0_31 = arith.constant 0 : index
    %41 = vector.load %arg11[%c0_30, %c0_31] : memref<4x32xf32, #tpu.memory_space<vmem>>, vector<4x32xf32>
    %cst_32 = arith.constant dense<0.000000e+00> : vector<4x64xf32>
    %42 = tpu.matmul %41, %40, %cst_32 {dimension_numbers = #tpu.dot_dimension_numbers<[1], [0], [0], [1], [0, 0, 1, 1], [], []>} : vector<4x32xf32>, vector<32x64xf32>, vector<4x64xf32> -> vector<4x64xf32>
    %c0_33 = arith.constant 0 : index
    %c5 = arith.constant 5 : index
    %43 = vector.load %arg13[%c0_33, %c5] : memref<128x8xf32, #tpu.memory_space<vmem>>, vector<4x1xf32>
    %44 = vector.broadcast %43 : vector<4x1xf32> to vector<4x64xf32>
    %45 = arith.addf %42, %44 : vector<4x64xf32>
    %cst_34 = arith.constant dense<0xFF800000> : vector<64xf32>
    %46 = vector.multi_reduction <maximumf>, %45, %cst_34 [0] : vector<4x64xf32> to vector<64xf32>
    %47 = vector.shape_cast %46 : vector<64xf32> to vector<1x64xf32>
    %48 = vector.broadcast %47 : vector<1x64xf32> to vector<4x64xf32>
    %49 = arith.subf %45, %48 : vector<4x64xf32>
    %50 = math.exp %49 : vector<4x64xf32>
    %cst_35 = arith.constant dense<0.000000e+00> : vector<64xf32>
    %51 = vector.multi_reduction <add>, %50, %cst_35 [0] : vector<4x64xf32> to vector<64xf32>
    %52 = vector.shape_cast %51 : vector<64xf32> to vector<1x64xf32>
    %53 = math.log %52 : vector<1x64xf32>
    %54 = vector.broadcast %53 : vector<1x64xf32> to vector<4x64xf32>
    %55 = arith.subf %49, %54 : vector<4x64xf32>
    %cst_36 = arith.constant 0.000000e+00 : f32
    %56 = vector.broadcast %cst_36 : f32 to vector<1x128xf32>
    %57 = vector.extract_strided_slice %55 {offsets = [0, 0], sizes = [1, 64], strides = [1, 1]} : vector<4x64xf32> to vector<1x64xf32>
    %c0_37 = arith.constant 0 : index
    %c0_38 = arith.constant 0 : index
    %58 = vector.load %arg12[%c0_37, %c0_38] : memref<256x128xf32, #tpu.memory_space<vmem>>, vector<64x128xf32>
    %cst_39 = arith.constant dense<0.000000e+00> : vector<1x128xf32>
    %59 = tpu.matmul %57, %58, %cst_39 {dimension_numbers = #tpu.dot_dimension_numbers<[1], [0], [0], [1], [0, 0, 1, 1], [], []>} : vector<1x64xf32>, vector<64x128xf32>, vector<1x128xf32> -> vector<1x128xf32>
    %60 = arith.addf %56, %59 : vector<1x128xf32>
    %61 = vector.extract_strided_slice %55 {offsets = [1, 0], sizes = [1, 64], strides = [1, 1]} : vector<4x64xf32> to vector<1x64xf32>
    %c64 = arith.constant 64 : index
    %c0_40 = arith.constant 0 : index
    %62 = vector.load %arg12[%c64, %c0_40] : memref<256x128xf32, #tpu.memory_space<vmem>>, vector<64x128xf32>
    %cst_41 = arith.constant dense<0.000000e+00> : vector<1x128xf32>
    %63 = tpu.matmul %61, %62, %cst_41 {dimension_numbers = #tpu.dot_dimension_numbers<[1], [0], [0], [1], [0, 0, 1, 1], [], []>} : vector<1x64xf32>, vector<64x128xf32>, vector<1x128xf32> -> vector<1x128xf32>
    %64 = arith.addf %60, %63 : vector<1x128xf32>
    %65 = vector.extract_strided_slice %55 {offsets = [2, 0], sizes = [1, 64], strides = [1, 1]} : vector<4x64xf32> to vector<1x64xf32>
    %c128 = arith.constant 128 : index
    %c0_42 = arith.constant 0 : index
    %66 = vector.load %arg12[%c128, %c0_42] : memref<256x128xf32, #tpu.memory_space<vmem>>, vector<64x128xf32>
    %cst_43 = arith.constant dense<0.000000e+00> : vector<1x128xf32>
    %67 = tpu.matmul %65, %66, %cst_43 {dimension_numbers = #tpu.dot_dimension_numbers<[1], [0], [0], [1], [0, 0, 1, 1], [], []>} : vector<1x64xf32>, vector<64x128xf32>, vector<1x128xf32> -> vector<1x128xf32>
    %68 = arith.addf %64, %67 : vector<1x128xf32>
    %69 = vector.extract_strided_slice %55 {offsets = [3, 0], sizes = [1, 64], strides = [1, 1]} : vector<4x64xf32> to vector<1x64xf32>
    %c192 = arith.constant 192 : index
    %c0_44 = arith.constant 0 : index
    %70 = vector.load %arg12[%c192, %c0_44] : memref<256x128xf32, #tpu.memory_space<vmem>>, vector<64x128xf32>
    %cst_45 = arith.constant dense<0.000000e+00> : vector<1x128xf32>
    %71 = tpu.matmul %69, %70, %cst_45 {dimension_numbers = #tpu.dot_dimension_numbers<[1], [0], [0], [1], [0, 0, 1, 1], [], []>} : vector<1x64xf32>, vector<64x128xf32>, vector<1x128xf32> -> vector<1x128xf32>
    %72 = arith.addf %68, %71 : vector<1x128xf32>
    %cst_46 = arith.constant 0.000000e+00 : f32
    %73 = vector.broadcast %cst_46 : f32 to vector<16x32xf32>
    %c0_47 = arith.constant 0 : index
    %c0_48 = arith.constant 0 : index
    %74 = vector.load %arg2[%c0_47, %c0_48] : memref<144x128xf32, #tpu.memory_space<vmem>>, vector<16x128xf32>
    %c0_49 = arith.constant 0 : index
    %c0_50 = arith.constant 0 : index
    %75 = vector.load %arg14[%c0_49, %c0_50] : memref<128x16xf32, #tpu.memory_space<vmem>>, vector<128x16xf32>
    %cst_51 = arith.constant dense<0.000000e+00> : vector<16x16xf32>
    %76 = tpu.matmul %74, %75, %cst_51 {dimension_numbers = #tpu.dot_dimension_numbers<[1], [0], [0], [1], [0, 0, 1, 1], [], []>} : vector<16x128xf32>, vector<128x16xf32>, vector<16x16xf32> -> vector<16x16xf32>
    %cst_52 = arith.constant 0.000000e+00 : f32
    %77 = vector.broadcast %cst_52 : f32 to vector<16x16xf32>
    %78 = arith.maximumf %76, %77 : vector<16x16xf32>
    %c0_53 = arith.constant 0 : index
    %c0_54 = arith.constant 0 : index
    %79 = vector.load %arg15[%c0_53, %c0_54] : memref<144x32xf32, #tpu.memory_space<vmem>>, vector<16x32xf32>
    %cst_55 = arith.constant dense<0.000000e+00> : vector<16x32xf32>
    %80 = tpu.matmul %78, %79, %cst_55 {dimension_numbers = #tpu.dot_dimension_numbers<[1], [0], [0], [1], [0, 0, 1, 1], [], []>} : vector<16x16xf32>, vector<16x32xf32>, vector<16x32xf32> -> vector<16x32xf32>
    %81 = arith.addf %73, %80 : vector<16x32xf32>
    %c16 = arith.constant 16 : index
    %c0_56 = arith.constant 0 : index
    %82 = vector.load %arg2[%c16, %c0_56] : memref<144x128xf32, #tpu.memory_space<vmem>>, vector<16x128xf32>
    %c0_57 = arith.constant 0 : index
    %c0_58 = arith.constant 0 : index
    %83 = vector.load %arg14[%c0_57, %c0_58] : memref<128x16xf32, #tpu.memory_space<vmem>>, vector<128x16xf32>
    %cst_59 = arith.constant dense<0.000000e+00> : vector<16x16xf32>
    %84 = tpu.matmul %82, %83, %cst_59 {dimension_numbers = #tpu.dot_dimension_numbers<[1], [0], [0], [1], [0, 0, 1, 1], [], []>} : vector<16x128xf32>, vector<128x16xf32>, vector<16x16xf32> -> vector<16x16xf32>
    %cst_60 = arith.constant 0.000000e+00 : f32
    %85 = vector.broadcast %cst_60 : f32 to vector<16x16xf32>
    %86 = arith.maximumf %84, %85 : vector<16x16xf32>
    %c16_61 = arith.constant 16 : index
    %c0_62 = arith.constant 0 : index
    %87 = vector.load %arg15[%c16_61, %c0_62] : memref<144x32xf32, #tpu.memory_space<vmem>>, vector<16x32xf32>
    %cst_63 = arith.constant dense<0.000000e+00> : vector<16x32xf32>
    %88 = tpu.matmul %86, %87, %cst_63 {dimension_numbers = #tpu.dot_dimension_numbers<[1], [0], [0], [1], [0, 0, 1, 1], [], []>} : vector<16x16xf32>, vector<16x32xf32>, vector<16x32xf32> -> vector<16x32xf32>
    %89 = arith.addf %81, %88 : vector<16x32xf32>
    %c32 = arith.constant 32 : index
    %c0_64 = arith.constant 0 : index
    %90 = vector.load %arg2[%c32, %c0_64] : memref<144x128xf32, #tpu.memory_space<vmem>>, vector<16x128xf32>
    %c0_65 = arith.constant 0 : index
    %c0_66 = arith.constant 0 : index
    %91 = vector.load %arg14[%c0_65, %c0_66] : memref<128x16xf32, #tpu.memory_space<vmem>>, vector<128x16xf32>
    %cst_67 = arith.constant dense<0.000000e+00> : vector<16x16xf32>
    %92 = tpu.matmul %90, %91, %cst_67 {dimension_numbers = #tpu.dot_dimension_numbers<[1], [0], [0], [1], [0, 0, 1, 1], [], []>} : vector<16x128xf32>, vector<128x16xf32>, vector<16x16xf32> -> vector<16x16xf32>
    %cst_68 = arith.constant 0.000000e+00 : f32
    %93 = vector.broadcast %cst_68 : f32 to vector<16x16xf32>
    %94 = arith.maximumf %92, %93 : vector<16x16xf32>
    %c32_69 = arith.constant 32 : index
    %c0_70 = arith.constant 0 : index
    %95 = vector.load %arg15[%c32_69, %c0_70] : memref<144x32xf32, #tpu.memory_space<vmem>>, vector<16x32xf32>
    %cst_71 = arith.constant dense<0.000000e+00> : vector<16x32xf32>
    %96 = tpu.matmul %94, %95, %cst_71 {dimension_numbers = #tpu.dot_dimension_numbers<[1], [0], [0], [1], [0, 0, 1, 1], [], []>} : vector<16x16xf32>, vector<16x32xf32>, vector<16x32xf32> -> vector<16x32xf32>
    %97 = arith.addf %89, %96 : vector<16x32xf32>
    %c48 = arith.constant 48 : index
    %c0_72 = arith.constant 0 : index
    %98 = vector.load %arg2[%c48, %c0_72] : memref<144x128xf32, #tpu.memory_space<vmem>>, vector<16x128xf32>
    %c0_73 = arith.constant 0 : index
    %c0_74 = arith.constant 0 : index
    %99 = vector.load %arg14[%c0_73, %c0_74] : memref<128x16xf32, #tpu.memory_space<vmem>>, vector<128x16xf32>
    %cst_75 = arith.constant dense<0.000000e+00> : vector<16x16xf32>
    %100 = tpu.matmul %98, %99, %cst_75 {dimension_numbers = #tpu.dot_dimension_numbers<[1], [0], [0], [1], [0, 0, 1, 1], [], []>} : vector<16x128xf32>, vector<128x16xf32>, vector<16x16xf32> -> vector<16x16xf32>
    %cst_76 = arith.constant 0.000000e+00 : f32
    %101 = vector.broadcast %cst_76 : f32 to vector<16x16xf32>
    %102 = arith.maximumf %100, %101 : vector<16x16xf32>
    %c48_77 = arith.constant 48 : index
    %c0_78 = arith.constant 0 : index
    %103 = vector.load %arg15[%c48_77, %c0_78] : memref<144x32xf32, #tpu.memory_space<vmem>>, vector<16x32xf32>
    %cst_79 = arith.constant dense<0.000000e+00> : vector<16x32xf32>
    %104 = tpu.matmul %102, %103, %cst_79 {dimension_numbers = #tpu.dot_dimension_numbers<[1], [0], [0], [1], [0, 0, 1, 1], [], []>} : vector<16x16xf32>, vector<16x32xf32>, vector<16x32xf32> -> vector<16x32xf32>
    %105 = arith.addf %97, %104 : vector<16x32xf32>
    %c64_80 = arith.constant 64 : index
    %c0_81 = arith.constant 0 : index
    %106 = vector.load %arg2[%c64_80, %c0_81] : memref<144x128xf32, #tpu.memory_space<vmem>>, vector<16x128xf32>
    %c0_82 = arith.constant 0 : index
    %c0_83 = arith.constant 0 : index
    %107 = vector.load %arg14[%c0_82, %c0_83] : memref<128x16xf32, #tpu.memory_space<vmem>>, vector<128x16xf32>
    %cst_84 = arith.constant dense<0.000000e+00> : vector<16x16xf32>
    %108 = tpu.matmul %106, %107, %cst_84 {dimension_numbers = #tpu.dot_dimension_numbers<[1], [0], [0], [1], [0, 0, 1, 1], [], []>} : vector<16x128xf32>, vector<128x16xf32>, vector<16x16xf32> -> vector<16x16xf32>
    %cst_85 = arith.constant 0.000000e+00 : f32
    %109 = vector.broadcast %cst_85 : f32 to vector<16x16xf32>
    %110 = arith.maximumf %108, %109 : vector<16x16xf32>
    %c64_86 = arith.constant 64 : index
    %c0_87 = arith.constant 0 : index
    %111 = vector.load %arg15[%c64_86, %c0_87] : memref<144x32xf32, #tpu.memory_space<vmem>>, vector<16x32xf32>
    %cst_88 = arith.constant dense<0.000000e+00> : vector<16x32xf32>
    %112 = tpu.matmul %110, %111, %cst_88 {dimension_numbers = #tpu.dot_dimension_numbers<[1], [0], [0], [1], [0, 0, 1, 1], [], []>} : vector<16x16xf32>, vector<16x32xf32>, vector<16x32xf32> -> vector<16x32xf32>
    %113 = arith.addf %105, %112 : vector<16x32xf32>
    %c80 = arith.constant 80 : index
    %c0_89 = arith.constant 0 : index
    %114 = vector.load %arg2[%c80, %c0_89] : memref<144x128xf32, #tpu.memory_space<vmem>>, vector<16x128xf32>
    %c0_90 = arith.constant 0 : index
    %c0_91 = arith.constant 0 : index
    %115 = vector.load %arg14[%c0_90, %c0_91] : memref<128x16xf32, #tpu.memory_space<vmem>>, vector<128x16xf32>
    %cst_92 = arith.constant dense<0.000000e+00> : vector<16x16xf32>
    %116 = tpu.matmul %114, %115, %cst_92 {dimension_numbers = #tpu.dot_dimension_numbers<[1], [0], [0], [1], [0, 0, 1, 1], [], []>} : vector<16x128xf32>, vector<128x16xf32>, vector<16x16xf32> -> vector<16x16xf32>
    %cst_93 = arith.constant 0.000000e+00 : f32
    %117 = vector.broadcast %cst_93 : f32 to vector<16x16xf32>
    %118 = arith.maximumf %116, %117 : vector<16x16xf32>
    %c80_94 = arith.constant 80 : index
    %c0_95 = arith.constant 0 : index
    %119 = vector.load %arg15[%c80_94, %c0_95] : memref<144x32xf32, #tpu.memory_space<vmem>>, vector<16x32xf32>
    %cst_96 = arith.constant dense<0.000000e+00> : vector<16x32xf32>
    %120 = tpu.matmul %118, %119, %cst_96 {dimension_numbers = #tpu.dot_dimension_numbers<[1], [0], [0], [1], [0, 0, 1, 1], [], []>} : vector<16x16xf32>, vector<16x32xf32>, vector<16x32xf32> -> vector<16x32xf32>
    %121 = arith.addf %113, %120 : vector<16x32xf32>
    %c96 = arith.constant 96 : index
    %c0_97 = arith.constant 0 : index
    %122 = vector.load %arg2[%c96, %c0_97] : memref<144x128xf32, #tpu.memory_space<vmem>>, vector<16x128xf32>
    %c0_98 = arith.constant 0 : index
    %c0_99 = arith.constant 0 : index
    %123 = vector.load %arg14[%c0_98, %c0_99] : memref<128x16xf32, #tpu.memory_space<vmem>>, vector<128x16xf32>
    %cst_100 = arith.constant dense<0.000000e+00> : vector<16x16xf32>
    %124 = tpu.matmul %122, %123, %cst_100 {dimension_numbers = #tpu.dot_dimension_numbers<[1], [0], [0], [1], [0, 0, 1, 1], [], []>} : vector<16x128xf32>, vector<128x16xf32>, vector<16x16xf32> -> vector<16x16xf32>
    %cst_101 = arith.constant 0.000000e+00 : f32
    %125 = vector.broadcast %cst_101 : f32 to vector<16x16xf32>
    %126 = arith.maximumf %124, %125 : vector<16x16xf32>
    %c96_102 = arith.constant 96 : index
    %c0_103 = arith.constant 0 : index
    %127 = vector.load %arg15[%c96_102, %c0_103] : memref<144x32xf32, #tpu.memory_space<vmem>>, vector<16x32xf32>
    %cst_104 = arith.constant dense<0.000000e+00> : vector<16x32xf32>
    %128 = tpu.matmul %126, %127, %cst_104 {dimension_numbers = #tpu.dot_dimension_numbers<[1], [0], [0], [1], [0, 0, 1, 1], [], []>} : vector<16x16xf32>, vector<16x32xf32>, vector<16x32xf32> -> vector<16x32xf32>
    %129 = arith.addf %121, %128 : vector<16x32xf32>
    %c112 = arith.constant 112 : index
    %c0_105 = arith.constant 0 : index
    %130 = vector.load %arg2[%c112, %c0_105] : memref<144x128xf32, #tpu.memory_space<vmem>>, vector<16x128xf32>
    %c0_106 = arith.constant 0 : index
    %c0_107 = arith.constant 0 : index
    %131 = vector.load %arg14[%c0_106, %c0_107] : memref<128x16xf32, #tpu.memory_space<vmem>>, vector<128x16xf32>
    %cst_108 = arith.constant dense<0.000000e+00> : vector<16x16xf32>
    %132 = tpu.matmul %130, %131, %cst_108 {dimension_numbers = #tpu.dot_dimension_numbers<[1], [0], [0], [1], [0, 0, 1, 1], [], []>} : vector<16x128xf32>, vector<128x16xf32>, vector<16x16xf32> -> vector<16x16xf32>
    %cst_109 = arith.constant 0.000000e+00 : f32
    %133 = vector.broadcast %cst_109 : f32 to vector<16x16xf32>
    %134 = arith.maximumf %132, %133 : vector<16x16xf32>
    %c112_110 = arith.constant 112 : index
    %c0_111 = arith.constant 0 : index
    %135 = vector.load %arg15[%c112_110, %c0_111] : memref<144x32xf32, #tpu.memory_space<vmem>>, vector<16x32xf32>
    %cst_112 = arith.constant dense<0.000000e+00> : vector<16x32xf32>
    %136 = tpu.matmul %134, %135, %cst_112 {dimension_numbers = #tpu.dot_dimension_numbers<[1], [0], [0], [1], [0, 0, 1, 1], [], []>} : vector<16x16xf32>, vector<16x32xf32>, vector<16x32xf32> -> vector<16x32xf32>
    %137 = arith.addf %129, %136 : vector<16x32xf32>
    %c128_113 = arith.constant 128 : index
    %c0_114 = arith.constant 0 : index
    %138 = vector.load %arg2[%c128_113, %c0_114] : memref<144x128xf32, #tpu.memory_space<vmem>>, vector<16x128xf32>
    %c0_115 = arith.constant 0 : index
    %c0_116 = arith.constant 0 : index
    %139 = vector.load %arg14[%c0_115, %c0_116] : memref<128x16xf32, #tpu.memory_space<vmem>>, vector<128x16xf32>
    %cst_117 = arith.constant dense<0.000000e+00> : vector<16x16xf32>
    %140 = tpu.matmul %138, %139, %cst_117 {dimension_numbers = #tpu.dot_dimension_numbers<[1], [0], [0], [1], [0, 0, 1, 1], [], []>} : vector<16x128xf32>, vector<128x16xf32>, vector<16x16xf32> -> vector<16x16xf32>
    %cst_118 = arith.constant 0.000000e+00 : f32
    %141 = vector.broadcast %cst_118 : f32 to vector<16x16xf32>
    %142 = arith.maximumf %140, %141 : vector<16x16xf32>
    %c128_119 = arith.constant 128 : index
    %c0_120 = arith.constant 0 : index
    %143 = vector.load %arg15[%c128_119, %c0_120] : memref<144x32xf32, #tpu.memory_space<vmem>>, vector<16x32xf32>
    %cst_121 = arith.constant dense<0.000000e+00> : vector<16x32xf32>
    %144 = tpu.matmul %142, %143, %cst_121 {dimension_numbers = #tpu.dot_dimension_numbers<[1], [0], [0], [1], [0, 0, 1, 1], [], []>} : vector<16x16xf32>, vector<16x32xf32>, vector<16x32xf32> -> vector<16x32xf32>
    %145 = arith.addf %137, %144 : vector<16x32xf32>
    %c0_122 = arith.constant 0 : index
    %c0_123 = arith.constant 0 : index
    %146 = vector.load %arg18[%c0_122, %c0_123] : memref<8x512xf32, #tpu.memory_space<vmem>>, vector<1x32xf32>
    %147 = vector.broadcast %146 : vector<1x32xf32> to vector<16x32xf32>
    %148 = arith.addf %145, %147 : vector<16x32xf32>
    %cst_124 = arith.constant 0.000000e+00 : f32
    %149 = vector.broadcast %cst_124 : f32 to vector<16x32xf32>
    %150 = arith.maximumf %148, %149 : vector<16x32xf32>
    %cst_125 = arith.constant dense<0.000000e+00> : vector<32xf32>
    %151 = vector.multi_reduction <add>, %150, %cst_125 [0] : vector<16x32xf32> to vector<32xf32>
    %152 = vector.shape_cast %151 : vector<32xf32> to vector<1x32xf32>
    %cst_126 = arith.constant 1.600000e+01 : f32
    %153 = vector.broadcast %cst_126 : f32 to vector<1x32xf32>
    %154 = arith.divf %152, %153 : vector<1x32xf32>
    %c0_127 = arith.constant 0 : index
    %c0_128 = arith.constant 0 : index
    %155 = vector.load %arg16[%c0_127, %c0_128] : memref<32x512xf32, #tpu.memory_space<vmem>>, vector<32x512xf32>
    %cst_129 = arith.constant dense<0.000000e+00> : vector<1x512xf32>
    %156 = tpu.matmul %154, %155, %cst_129 {dimension_numbers = #tpu.dot_dimension_numbers<[1], [0], [0], [1], [0, 0, 1, 1], [], []>} : vector<1x32xf32>, vector<32x512xf32>, vector<1x512xf32> -> vector<1x512xf32>
    %c1_130 = arith.constant 1 : index
    %c0_131 = arith.constant 0 : index
    %157 = vector.load %arg18[%c1_130, %c0_131] : memref<8x512xf32, #tpu.memory_space<vmem>>, vector<1x512xf32>
    %158 = arith.addf %156, %157 : vector<1x512xf32>
    %c0_132 = arith.constant 0 : index
    %c0_133 = arith.constant 0 : index
    %159 = vector.load %arg17[%c0_132, %c0_133] : memref<512x128xf32, #tpu.memory_space<vmem>>, vector<512x128xf32>
    %cst_134 = arith.constant dense<0.000000e+00> : vector<1x128xf32>
    %160 = tpu.matmul %158, %159, %cst_134 {dimension_numbers = #tpu.dot_dimension_numbers<[1], [0], [0], [1], [0, 0, 1, 1], [], []>} : vector<1x512xf32>, vector<512x128xf32>, vector<1x128xf32> -> vector<1x128xf32>
    %c0_135 = arith.constant 0 : index
    %c0_136 = arith.constant 0 : index
    %c0_137 = arith.constant 0 : index
    %161 = vector.load %arg3[%c0_135, %c0_136, %c0_137] : memref<1x1x2xf32, #tpu.memory_space<vmem>>, vector<1x1x2xf32>
    %162 = vector.shape_cast %161 : vector<1x1x2xf32> to vector<1x2xf32>
    %c0_138 = arith.constant 0 : index
    %c0_139 = arith.constant 0 : index
    %c0_140 = arith.constant 0 : index
    %163 = vector.load %arg4[%c0_138, %c0_139, %c0_140] : memref<1x1x40xf32, #tpu.memory_space<vmem>>, vector<1x1x40xf32>
    %164 = vector.shape_cast %163 : vector<1x1x40xf32> to vector<1x40xf32>
    %c0_141 = arith.constant 0 : index
    %c0_142 = arith.constant 0 : index
    %165 = vector.load %arg19[%c0_141, %c0_142] : memref<2x256xf32, #tpu.memory_space<vmem>>, vector<2x256xf32>
    %cst_143 = arith.constant dense<0.000000e+00> : vector<1x256xf32>
    %166 = tpu.matmul %162, %165, %cst_143 {dimension_numbers = #tpu.dot_dimension_numbers<[1], [0], [0], [1], [0, 0, 1, 1], [], []>} : vector<1x2xf32>, vector<2x256xf32>, vector<1x256xf32> -> vector<1x256xf32>
    %c0_144 = arith.constant 0 : index
    %c0_145 = arith.constant 0 : index
    %167 = vector.load %arg28[%c0_144, %c0_145] : memref<8x256xf32, #tpu.memory_space<vmem>>, vector<1x256xf32>
    %168 = arith.addf %166, %167 : vector<1x256xf32>
    %cst_146 = arith.constant 0.000000e+00 : f32
    %169 = vector.broadcast %cst_146 : f32 to vector<1x256xf32>
    %170 = arith.maximumf %168, %169 : vector<1x256xf32>
    %c0_147 = arith.constant 0 : index
    %c0_148 = arith.constant 0 : index
    %171 = vector.load %arg20[%c0_147, %c0_148] : memref<256x128xf32, #tpu.memory_space<vmem>>, vector<256x128xf32>
    %cst_149 = arith.constant dense<0.000000e+00> : vector<1x128xf32>
    %172 = tpu.matmul %170, %171, %cst_149 {dimension_numbers = #tpu.dot_dimension_numbers<[1], [0], [0], [1], [0, 0, 1, 1], [], []>} : vector<1x256xf32>, vector<256x128xf32>, vector<1x128xf32> -> vector<1x128xf32>
    %c1_150 = arith.constant 1 : index
    %c0_151 = arith.constant 0 : index
    %173 = vector.load %arg28[%c1_150, %c0_151] : memref<8x256xf32, #tpu.memory_space<vmem>>, vector<1x128xf32>
    %174 = arith.addf %172, %173 : vector<1x128xf32>
    %c0_152 = arith.constant 0 : index
    %c0_153 = arith.constant 0 : index
    %175 = vector.load %arg21[%c0_152, %c0_153] : memref<40x64xf32, #tpu.memory_space<vmem>>, vector<40x64xf32>
    %cst_154 = arith.constant dense<0.000000e+00> : vector<1x64xf32>
    %176 = tpu.matmul %164, %175, %cst_154 {dimension_numbers = #tpu.dot_dimension_numbers<[1], [0], [0], [1], [0, 0, 1, 1], [], []>} : vector<1x40xf32>, vector<40x64xf32>, vector<1x64xf32> -> vector<1x64xf32>
    %c2_155 = arith.constant 2 : index
    %c0_156 = arith.constant 0 : index
    %177 = vector.load %arg28[%c2_155, %c0_156] : memref<8x256xf32, #tpu.memory_space<vmem>>, vector<1x64xf32>
    %178 = arith.addf %176, %177 : vector<1x64xf32>
    %cst_157 = arith.constant 0.000000e+00 : f32
    %179 = vector.broadcast %cst_157 : f32 to vector<1x64xf32>
    %180 = arith.maximumf %178, %179 : vector<1x64xf32>
    %c0_158 = arith.constant 0 : index
    %c0_159 = arith.constant 0 : index
    %181 = vector.load %arg22[%c0_158, %c0_159] : memref<64x128xf32, #tpu.memory_space<vmem>>, vector<64x128xf32>
    %cst_160 = arith.constant dense<0.000000e+00> : vector<1x128xf32>
    %182 = tpu.matmul %180, %181, %cst_160 {dimension_numbers = #tpu.dot_dimension_numbers<[1], [0], [0], [1], [0, 0, 1, 1], [], []>} : vector<1x64xf32>, vector<64x128xf32>, vector<1x128xf32> -> vector<1x128xf32>
    %c3_161 = arith.constant 3 : index
    %c0_162 = arith.constant 0 : index
    %183 = vector.load %arg28[%c3_161, %c0_162] : memref<8x256xf32, #tpu.memory_space<vmem>>, vector<1x128xf32>
    %184 = arith.addf %182, %183 : vector<1x128xf32>
    %185 = arith.addf %72, %160 : vector<1x128xf32>
    %c0_163 = arith.constant 0 : index
    %c0_164 = arith.constant 0 : index
    %186 = vector.load %arg23[%c0_163, %c0_164] : memref<128x128xf32, #tpu.memory_space<vmem>>, vector<128x128xf32>
    %cst_165 = arith.constant dense<0.000000e+00> : vector<1x128xf32>
    %187 = tpu.matmul %174, %186, %cst_165 {dimension_numbers = #tpu.dot_dimension_numbers<[1], [0], [0], [1], [0, 0, 1, 1], [], []>} : vector<1x128xf32>, vector<128x128xf32>, vector<1x128xf32> -> vector<1x128xf32>
    %188 = arith.addf %185, %187 : vector<1x128xf32>
    %c0_166 = arith.constant 0 : index
    %c0_167 = arith.constant 0 : index
    %189 = vector.load %arg24[%c0_166, %c0_167] : memref<128x128xf32, #tpu.memory_space<vmem>>, vector<128x128xf32>
    %cst_168 = arith.constant dense<0.000000e+00> : vector<1x128xf32>
    %190 = tpu.matmul %184, %189, %cst_168 {dimension_numbers = #tpu.dot_dimension_numbers<[1], [0], [0], [1], [0, 0, 1, 1], [], []>} : vector<1x128xf32>, vector<128x128xf32>, vector<1x128xf32> -> vector<1x128xf32>
    %191 = arith.addf %188, %190 : vector<1x128xf32>
    %c4_169 = arith.constant 4 : index
    %c0_170 = arith.constant 0 : index
    %192 = vector.load %arg28[%c4_169, %c0_170] : memref<8x256xf32, #tpu.memory_space<vmem>>, vector<1x128xf32>
    %193 = arith.addf %191, %192 : vector<1x128xf32>
    %cst_171 = arith.constant 0.000000e+00 : f32
    %194 = vector.broadcast %cst_171 : f32 to vector<1x128xf32>
    %195 = arith.maximumf %193, %194 : vector<1x128xf32>
    %c0_172 = arith.constant 0 : index
    %c0_173 = arith.constant 0 : index
    %196 = vector.load %arg25[%c0_172, %c0_173] : memref<128x64xf32, #tpu.memory_space<vmem>>, vector<128x64xf32>
    %cst_174 = arith.constant dense<0.000000e+00> : vector<1x64xf32>
    %197 = tpu.matmul %195, %196, %cst_174 {dimension_numbers = #tpu.dot_dimension_numbers<[1], [0], [0], [1], [0, 0, 1, 1], [], []>} : vector<1x128xf32>, vector<128x64xf32>, vector<1x64xf32> -> vector<1x64xf32>
    %c5_175 = arith.constant 5 : index
    %c0_176 = arith.constant 0 : index
    %198 = vector.load %arg28[%c5_175, %c0_176] : memref<8x256xf32, #tpu.memory_space<vmem>>, vector<1x64xf32>
    %199 = arith.addf %197, %198 : vector<1x64xf32>
    %cst_177 = arith.constant 0.000000e+00 : f32
    %200 = vector.broadcast %cst_177 : f32 to vector<1x64xf32>
    %201 = arith.maximumf %199, %200 : vector<1x64xf32>
    %c0_178 = arith.constant 0 : index
    %c0_179 = arith.constant 0 : index
    %202 = vector.load %arg26[%c0_178, %c0_179] : memref<64x32xf32, #tpu.memory_space<vmem>>, vector<64x32xf32>
    %cst_180 = arith.constant dense<0.000000e+00> : vector<1x32xf32>
    %203 = tpu.matmul %201, %202, %cst_180 {dimension_numbers = #tpu.dot_dimension_numbers<[1], [0], [0], [1], [0, 0, 1, 1], [], []>} : vector<1x64xf32>, vector<64x32xf32>, vector<1x32xf32> -> vector<1x32xf32>
    %c6 = arith.constant 6 : index
    %c0_181 = arith.constant 0 : index
    %204 = vector.load %arg28[%c6, %c0_181] : memref<8x256xf32, #tpu.memory_space<vmem>>, vector<1x32xf32>
    %205 = arith.addf %203, %204 : vector<1x32xf32>
    %cst_182 = arith.constant 0.000000e+00 : f32
    %206 = vector.broadcast %cst_182 : f32 to vector<1x32xf32>
    %207 = arith.maximumf %205, %206 : vector<1x32xf32>
    %c0_183 = arith.constant 0 : index
    %c0_184 = arith.constant 0 : index
    %208 = vector.load %arg27[%c0_183, %c0_184] : memref<32x128xf32, #tpu.memory_space<vmem>>, vector<32x128xf32>
    %cst_185 = arith.constant dense<0.000000e+00> : vector<1x128xf32>
    %209 = tpu.matmul %207, %208, %cst_185 {dimension_numbers = #tpu.dot_dimension_numbers<[1], [0], [0], [1], [0, 0, 1, 1], [], []>} : vector<1x32xf32>, vector<32x128xf32>, vector<1x128xf32> -> vector<1x128xf32>
    %c7 = arith.constant 7 : index
    %c0_186 = arith.constant 0 : index
    %210 = vector.load %arg28[%c7, %c0_186] : memref<8x256xf32, #tpu.memory_space<vmem>>, vector<1x128xf32>
    %211 = arith.addf %209, %210 : vector<1x128xf32>
    %212 = vector.shape_cast %211 : vector<1x128xf32> to vector<1x1x128xf32>
    %c0_187 = arith.constant 0 : index
    %c0_188 = arith.constant 0 : index
    %c0_189 = arith.constant 0 : index
    %213 = vector.load %arg29[%c0_187, %c0_188, %c0_189] : memref<1x1x128xf32, #tpu.memory_space<vmem>>, vector<1x1x128xf32>
    tpu.vector_store %arg29[%c0_187, %c0_188, %c0_189], %212 {strides = array<i32>} : memref<1x1x128xf32, #tpu.memory_space<vmem>>, vector<1x1x128xf32>,
    return
  }
  func.func @transform_0(%arg0: i32) -> (i32, i32, i32) {
    %c0_i32 = arith.constant 0 : i32
    %c0_i32_0 = arith.constant 0 : i32
    %c0_i32_1 = arith.constant 0 : i32
    return %arg0, %c0_i32, %c0_i32_0 : i32, i32, i32
  }
  func.func @transform_1(%arg0: i32) -> (i32, i32) {
    %c0_i32 = arith.constant 0 : i32
    %c0_i32_0 = arith.constant 0 : i32
    return %arg0, %c0_i32 : i32, i32
  }
  func.func @transform_2(%arg0: i32) -> (i32, i32, i32) {
    %c0_i32 = arith.constant 0 : i32
    %c0_i32_0 = arith.constant 0 : i32
    %c0_i32_1 = arith.constant 0 : i32
    return %arg0, %c0_i32, %c0_i32_0 : i32, i32, i32
  }
  func.func @transform_3(%arg0: i32) -> (i32, i32, i32) {
    %c0_i32 = arith.constant 0 : i32
    %c0_i32_0 = arith.constant 0 : i32
    %c0_i32_1 = arith.constant 0 : i32
    return %arg0, %c0_i32, %c0_i32_0 : i32, i32, i32
  }
  func.func @transform_4(%arg0: i32) -> (i32, i32) {
    %c0_i32 = arith.constant 0 : i32
    %c0_i32_0 = arith.constant 0 : i32
    %c0_i32_1 = arith.constant 0 : i32
    return %c0_i32, %c0_i32_0 : i32, i32
  }
  func.func @transform_5(%arg0: i32) -> (i32, i32) {
    %c0_i32 = arith.constant 0 : i32
    %c0_i32_0 = arith.constant 0 : i32
    %c0_i32_1 = arith.constant 0 : i32
    return %c0_i32, %c0_i32_0 : i32, i32
  }
  func.func @transform_6(%arg0: i32) -> (i32, i32) {
    %c0_i32 = arith.constant 0 : i32
    %c0_i32_0 = arith.constant 0 : i32
    %c0_i32_1 = arith.constant 0 : i32
    return %c0_i32, %c0_i32_0 : i32, i32
  }
  func.func @transform_7(%arg0: i32) -> (i32, i32) {
    %c0_i32 = arith.constant 0 : i32
    %c0_i32_0 = arith.constant 0 : i32
    %c0_i32_1 = arith.constant 0 : i32
    return %c0_i32, %c0_i32_0 : i32, i32
  }
  func.func @transform_8(%arg0: i32) -> (i32, i32) {
    %c0_i32 = arith.constant 0 : i32
    %c0_i32_0 = arith.constant 0 : i32
    %c0_i32_1 = arith.constant 0 : i32
    return %c0_i32, %c0_i32_0 : i32, i32
  }
  func.func @transform_9(%arg0: i32) -> (i32, i32) {
    %c0_i32 = arith.constant 0 : i32
    %c0_i32_0 = arith.constant 0 : i32
    %c0_i32_1 = arith.constant 0 : i32
    return %c0_i32, %c0_i32_0 : i32, i32
  }
  func.func @transform_10(%arg0: i32) -> (i32, i32) {
    %c0_i32 = arith.constant 0 : i32
    %c0_i32_0 = arith.constant 0 : i32
    %c0_i32_1 = arith.constant 0 : i32
    return %c0_i32, %c0_i32_0 : i32, i32
  }
  func.func @transform_11(%arg0: i32) -> (i32, i32) {
    %c0_i32 = arith.constant 0 : i32
    %c0_i32_0 = arith.constant 0 : i32
    %c0_i32_1 = arith.constant 0 : i32
    return %c0_i32, %c0_i32_0 : i32, i32
  }
  func.func @transform_12(%arg0: i32) -> (i32, i32) {
    %c0_i32 = arith.constant 0 : i32
    %c0_i32_0 = arith.constant 0 : i32
    %c0_i32_1 = arith.constant 0 : i32
    return %c0_i32, %c0_i32_0 : i32, i32
  }
  func.func @transform_13(%arg0: i32) -> (i32, i32) {
    %c0_i32 = arith.constant 0 : i32
    %c0_i32_0 = arith.constant 0 : i32
    %c0_i32_1 = arith.constant 0 : i32
    return %c0_i32, %c0_i32_0 : i32, i32
  }
  func.func @transform_14(%arg0: i32) -> (i32, i32) {
    %c0_i32 = arith.constant 0 : i32
    %c0_i32_0 = arith.constant 0 : i32
    %c0_i32_1 = arith.constant 0 : i32
    return %c0_i32, %c0_i32_0 : i32, i32
  }
  func.func @transform_15(%arg0: i32) -> (i32, i32) {
    %c0_i32 = arith.constant 0 : i32
    %c0_i32_0 = arith.constant 0 : i32
    %c0_i32_1 = arith.constant 0 : i32
    return %c0_i32, %c0_i32_0 : i32, i32
  }
  func.func @transform_16(%arg0: i32) -> (i32, i32) {
    %c0_i32 = arith.constant 0 : i32
    %c0_i32_0 = arith.constant 0 : i32
    %c0_i32_1 = arith.constant 0 : i32
    return %c0_i32, %c0_i32_0 : i32, i32
  }
  func.func @transform_17(%arg0: i32) -> (i32, i32) {
    %c0_i32 = arith.constant 0 : i32
    %c0_i32_0 = arith.constant 0 : i32
    %c0_i32_1 = arith.constant 0 : i32
    return %c0_i32, %c0_i32_0 : i32, i32
  }
  func.func @transform_18(%arg0: i32) -> (i32, i32) {
    %c0_i32 = arith.constant 0 : i32
    %c0_i32_0 = arith.constant 0 : i32
    %c0_i32_1 = arith.constant 0 : i32
    return %c0_i32, %c0_i32_0 : i32, i32
  }
  func.func @transform_19(%arg0: i32) -> (i32, i32) {
    %c0_i32 = arith.constant 0 : i32
    %c0_i32_0 = arith.constant 0 : i32
    %c0_i32_1 = arith.constant 0 : i32
    return %c0_i32, %c0_i32_0 : i32, i32
  }
  func.func @transform_20(%arg0: i32) -> (i32, i32) {
    %c0_i32 = arith.constant 0 : i32
    %c0_i32_0 = arith.constant 0 : i32
    %c0_i32_1 = arith.constant 0 : i32
    return %c0_i32, %c0_i32_0 : i32, i32
  }
  func.func @transform_21(%arg0: i32) -> (i32, i32) {
    %c0_i32 = arith.constant 0 : i32
    %c0_i32_0 = arith.constant 0 : i32
    %c0_i32_1 = arith.constant 0 : i32
    return %c0_i32, %c0_i32_0 : i32, i32
  }
  func.func @transform_22(%arg0: i32) -> (i32, i32) {
    %c0_i32 = arith.constant 0 : i32
    %c0_i32_0 = arith.constant 0 : i32
    %c0_i32_1 = arith.constant 0 : i32
    return %c0_i32, %c0_i32_0 : i32, i32
  }
  func.func @transform_23(%arg0: i32) -> (i32, i32) {
    %c0_i32 = arith.constant 0 : i32
    %c0_i32_0 = arith.constant 0 : i32
    %c0_i32_1 = arith.constant 0 : i32
    return %c0_i32, %c0_i32_0 : i32, i32
  }
  func.func @transform_24(%arg0: i32) -> (i32, i32) {
    %c0_i32 = arith.constant 0 : i32
    %c0_i32_0 = arith.constant 0 : i32
    %c0_i32_1 = arith.constant 0 : i32
    return %c0_i32, %c0_i32_0 : i32, i32
  }
  func.func @transform_25(%arg0: i32) -> (i32, i32) {
    %c0_i32 = arith.constant 0 : i32
    %c0_i32_0 = arith.constant 0 : i32
    %c0_i32_1 = arith.constant 0 : i32
    return %c0_i32, %c0_i32_0 : i32, i32
  }
  func.func @transform_26(%arg0: i32) -> (i32, i32) {
    %c0_i32 = arith.constant 0 : i32
    %c0_i32_0 = arith.constant 0 : i32
    %c0_i32_1 = arith.constant 0 : i32
    return %c0_i32, %c0_i32_0 : i32, i32
  }
  func.func @transform_27(%arg0: i32) -> (i32, i32) {
    %c0_i32 = arith.constant 0 : i32
    %c0_i32_0 = arith.constant 0 : i32
    %c0_i32_1 = arith.constant 0 : i32
    return %c0_i32, %c0_i32_0 : i32, i32
  }
  func.func @transform_28(%arg0: i32) -> (i32, i32, i32) {
    %c0_i32 = arith.constant 0 : i32
    %c0_i32_0 = arith.constant 0 : i32
    %c0_i32_1 = arith.constant 0 : i32
    return %arg0, %c0_i32, %c0_i32_0 : i32, i32, i32
  }
}

</mosaic_0001>

<llo_original>
// kernel: bc_model_pcl_forward.1
$region0: #{bc_model_pcl_forward.1}
  #allocation0 [shape = 'u32[]', space=smem, size = 0x4, offset = 0x4, fixed_abs, tag = 'smem constant byte address 0x4 - core index']
  #allocation1 [shape = 'u32[144,128]{1,0:T(1,128)}', space=vmem, size = 0x12000, scoped, tag = 'internal scratch']
  %s0 = inlined_call_operand.vmem [shape: f32[2,3,64], index: 0, kind: input, shape index: {}]
  %s1 = inlined_call_operand.vmem [shape: f32[288,128], index: 1, kind: input, shape index: {}]
  %s2 = inlined_call_operand.vmem [shape: f32[2,1,2], index: 2, kind: input, shape index: {}]
  %s3 = inlined_call_operand.vmem [shape: f32[2,1,40], index: 3, kind: input, shape index: {}]
  %s4 = inlined_call_operand.vmem [shape: f32[32,3], index: 4, kind: input, shape index: {}]
  %s5 = inlined_call_operand.vmem [shape: f32[64,32], index: 5, kind: input, shape index: {}]
  %s6 = inlined_call_operand.vmem [shape: f32[128,64], index: 6, kind: input, shape index: {}]
  %s7 = inlined_call_operand.vmem [shape: f32[64,32], index: 7, kind: input, shape index: {}]
  %s8 = inlined_call_operand.vmem [shape: f32[64,128], index: 8, kind: input, shape index: {}]
  %s9 = inlined_call_operand.vmem [shape: f32[32,64], index: 9, kind: input, shape index: {}]
  %s10 = inlined_call_operand.vmem [shape: f32[4,32], index: 10, kind: input, shape index: {}]
  %s11 = inlined_call_operand.vmem [shape: f32[256,128], index: 11, kind: input, shape index: {}]
  %s12 = inlined_call_operand.vmem [shape: f32[128,8], index: 12, kind: input, shape index: {}]
  %s13 = inlined_call_operand.vmem [shape: f32[128,16], index: 13, kind: input, shape index: {}]
  %s14 = inlined_call_operand.vmem [shape: f32[144,32], index: 14, kind: input, shape index: {}]
  %s15 = inlined_call_operand.vmem [shape: f32[32,512], index: 15, kind: input, shape index: {}]
  %s16 = inlined_call_operand.vmem [shape: f32[512,128], index: 16, kind: input, shape index: {}]
  %s17 = inlined_call_operand.vmem [shape: f32[8,512], index: 17, kind: input, shape index: {}]
  %s18 = inlined_call_operand.vmem [shape: f32[2,256], index: 18, kind: input, shape index: {}]
  %s19 = inlined_call_operand.vmem [shape: f32[256,128], index: 19, kind: input, shape index: {}]
  %s20 = inlined_call_operand.vmem [shape: f32[40,64], index: 20, kind: input, shape index: {}]
  %s21 = inlined_call_operand.vmem [shape: f32[64,128], index: 21, kind: input, shape index: {}]
  %s22 = inlined_call_operand.vmem [shape: f32[128,128], index: 22, kind: input, shape index: {}]
  %s23 = inlined_call_operand.vmem [shape: f32[128,128], index: 23, kind: input, shape index: {}]
  %s24 = inlined_call_operand.vmem [shape: f32[128,64], index: 24, kind: input, shape index: {}]
  %s25 = inlined_call_operand.vmem [shape: f32[64,32], index: 25, kind: input, shape index: {}]
  %s26 = inlined_call_operand.vmem [shape: f32[32,128], index: 26, kind: input, shape index: {}]
  %s27 = inlined_call_operand.vmem [shape: f32[8,256], index: 27, kind: input, shape index: {}]
  %s28 = inlined_call_operand.hbm [shape: f32[2,1,128], index: 28, kind: output, shape index: {}]
  %s29 = sld [smem:[#allocation0]]
  $region145: #{bc_model_pcl_forward.1} parent=0
    _
  %s31 = ssub.s32 1, %s29
  %s32 = scalar_select 0, %s31, %s29
  $region1: #{bc_model_pcl_forward.1} parent=0
    #allocation2 [shape = 'u8[1024]{0}', space=vmem, size = 0x400, scoped, tag = 'output window, operand 0']
    #allocation3 [shape = 's32[2]{0}', space=sflag, size = 0x8, scoped, tag = 'scoped memory for bc_model_pcl_forward.1']
    %33 = vsyncpa [#allocation3], 0
    %s34 = scalar_lea.sflag [#allocation3], 1
    %35 = vsyncpa %s34, 0
    loop: start=0, step=1, limit=4
    $region2: #{bc_model_pcl_forward.1} parent=1 // loop_pre_header
      _
    $region3: #{bc_model_pcl_forward.1} parent=1 // loop_header
      %s37 = sphi 0, %s41
      %p38 = scmp.ge.s32.totalorder %s37, 4
      %s47 = sphi 0, %s49
      %s50 = sphi 0, %s47
      %s51 = sphi 0, %s50
      %s67 = sphi 0, %s51
      %s73 = sphi 0, %s75
      %s76 = sphi 0, %s73
      %s77 = sphi 0, %s76
      %s93 = sphi 0, %s77
      %s99 = sphi 0, %s101
      %s102 = sphi 0, %s99
      %s103 = sphi 0, %s102
      %s119 = sphi 0, %s103
      %s125 = sphi 0, %s127
      %s128 = sphi 0, %s125
      %s129 = sphi 0, %s128
      %s145 = sphi 0, %s129
      %s149 = sphi 0, %s149
      %s151 = sphi 0, %s149
      %s152 = sphi 0, %s151
      %s166 = sphi 0, %s152
      %s170 = sphi 0, %s170
      %s172 = sphi 0, %s170
      %s173 = sphi 0, %s172
      %s187 = sphi 0, %s173
      %s191 = sphi 0, %s191
      %s193 = sphi 0, %s191
      %s194 = sphi 0, %s193
      %s208 = sphi 0, %s194
      %s212 = sphi 0, %s212
      %s214 = sphi 0, %s212
      %s215 = sphi 0, %s214
      %s229 = sphi 0, %s215
      %s233 = sphi 0, %s233
      %s235 = sphi 0, %s233
      %s236 = sphi 0, %s235
      %s250 = sphi 0, %s236
      %s254 = sphi 0, %s254
      %s256 = sphi 0, %s254
      %s257 = sphi 0, %s256
      %s271 = sphi 0, %s257
      %s275 = sphi 0, %s275
      %s277 = sphi 0, %s275
      %s278 = sphi 0, %s277
      %s292 = sphi 0, %s278
      %s296 = sphi 0, %s296
      %s298 = sphi 0, %s296
      %s299 = sphi 0, %s298
      %s313 = sphi 0, %s299
      %s317 = sphi 0, %s317
      %s319 = sphi 0, %s317
      %s320 = sphi 0, %s319
      %s334 = sphi 0, %s320
      %s338 = sphi 0, %s338
      %s340 = sphi 0, %s338
      %s341 = sphi 0, %s340
      %s355 = sphi 0, %s341
      %s359 = sphi 0, %s359
      %s361 = sphi 0, %s359
      %s362 = sphi 0, %s361
      %s376 = sphi 0, %s362
      %s380 = sphi 0, %s380
      %s382 = sphi 0, %s380
      %s383 = sphi 0, %s382
      %s397 = sphi 0, %s383
      %s401 = sphi 0, %s401
      %s403 = sphi 0, %s401
      %s404 = sphi 0, %s403
      %s418 = sphi 0, %s404
      %s422 = sphi 0, %s422
      %s424 = sphi 0, %s422
      %s425 = sphi 0, %s424
      %s439 = sphi 0, %s425
      %s443 = sphi 0, %s443
      %s445 = sphi 0, %s443
      %s446 = sphi 0, %s445
      %s460 = sphi 0, %s446
      %s464 = sphi 0, %s464
      %s466 = sphi 0, %s464
      %s467 = sphi 0, %s466
      %s481 = sphi 0, %s467
      %s485 = sphi 0, %s485
      %s487 = sphi 0, %s485
      %s488 = sphi 0, %s487
      %s502 = sphi 0, %s488
      %s506 = sphi 0, %s506
      %s508 = sphi 0, %s506
      %s509 = sphi 0, %s508
      %s523 = sphi 0, %s509
      %s527 = sphi 0, %s527
      %s529 = sphi 0, %s527
      %s530 = sphi 0, %s529
      %s544 = sphi 0, %s530
      %s548 = sphi 0, %s548
      %s550 = sphi 0, %s548
      %s551 = sphi 0, %s550
      %s565 = sphi 0, %s551
      %s569 = sphi 0, %s569
      %s571 = sphi 0, %s569
      %s572 = sphi 0, %s571
      %s586 = sphi 0, %s572
      %s590 = sphi 0, %s590
      %s592 = sphi 0, %s590
      %s593 = sphi 0, %s592
      %s607 = sphi 0, %s593
      %s611 = sphi 0, %s611
      %s613 = sphi 0, %s611
      %s614 = sphi 0, %s613
      %s628 = sphi 0, %s614
      %s632 = sphi 0, %s632
      %s634 = sphi 0, %s632
      %s635 = sphi 0, %s634
      %s649 = sphi 0, %s635
      %s655 = sphi 0, %s657
      %s658 = sphi 0, %s655
      %s659 = sphi 0, %s658
      %s675 = sphi 0, %s659
    $region4: #{bc_model_pcl_forward.1} parent=1 // loop_header_branch
      %40 = sbr.rel (%p38) target = $region8
    $region5: #{bc_model_pcl_forward.1} parent=1 // loop_body
      %s42 = ssub.s32 %s37, 1
      %s43 = ssub.s32 %s37, 2
      %s44 = sadd.s32 %s37, 1
      %s45 = ssub.s32 %s37, %s44
      %p46 = scmp.eq.s32.totalorder %s45, 0
      %s48 = sadd.s32 %s47, 1
      %s49 = scalar_select %p46, %s47, %s48
      %p52 = pneg %p46
      %p53 = scmp.eq.s32.totalorder %s37, 1
      %p54 = por %p52, %p53
      %p55 = scmp.ne.s32.totalorder %s47, %s50
      %p56 = scmp.eq.s32.totalorder %s37, 0
      %p57 = por %p55, %p56
      %p58 = scmp.ne.s32.totalorder %s47, %s50
      %p59 = scmp.eq.s32.totalorder %s42, 1
      %p60 = por %p58, %p59
      %p61 = scmp.ne.s32.totalorder %s50, %s51
      %p62 = scmp.eq.s32.totalorder %s42, 0
      %p63 = por %p61, %p62
      %p64 = scmp.ne.s32.totalorder %s50, %s51
      %p65 = scmp.eq.s32.totalorder %s43, 1
      %p66 = por %p64, %p65
      %p68 = scmp.ne.s32.totalorder %s51, %s67
      %p69 = scmp.eq.s32.totalorder %s43, 0
      %p70 = por %p68, %p69
      %s71 = ssub.s32 %s37, %s44
      %p72 = scmp.eq.s32.totalorder %s71, 0
      %s74 = sadd.s32 %s73, 1
      %s75 = scalar_select %p72, %s73, %s74
      %p78 = pneg %p72
      %p79 = scmp.eq.s32.totalorder %s37, 1
      %p80 = por %p78, %p79
      %p81 = scmp.ne.s32.totalorder %s73, %s76
      %p82 = scmp.eq.s32.totalorder %s37, 0
      %p83 = por %p81, %p82
      %p84 = scmp.ne.s32.totalorder %s73, %s76
      %p85 = scmp.eq.s32.totalorder %s42, 1
      %p86 = por %p84, %p85
      %p87 = scmp.ne.s32.totalorder %s76, %s77
      %p88 = scmp.eq.s32.totalorder %s42, 0
      %p89 = por %p87, %p88
      %p90 = scmp.ne.s32.totalorder %s76, %s77
      %p91 = scmp.eq.s32.totalorder %s43, 1
      %p92 = por %p90, %p91
      %p94 = scmp.ne.s32.totalorder %s77, %s93
      %p95 = scmp.eq.s32.totalorder %s43, 0
      %p96 = por %p94, %p95
      %s97 = ssub.s32 %s37, %s44
      %p98 = scmp.eq.s32.totalorder %s97, 0
      %s100 = sadd.s32 %s99, 1
      %s101 = scalar_select %p98, %s99, %s100
      %p104 = pneg %p98
      %p105 = scmp.eq.s32.totalorder %s37, 1
      %p106 = por %p104, %p105
      %p107 = scmp.ne.s32.totalorder %s99, %s102
      %p108 = scmp.eq.s32.totalorder %s37, 0
      %p109 = por %p107, %p108
      %p110 = scmp.ne.s32.totalorder %s99, %s102
      %p111 = scmp.eq.s32.totalorder %s42, 1
      %p112 = por %p110, %p111
      %p113 = scmp.ne.s32.totalorder %s102, %s103
      %p114 = scmp.eq.s32.totalorder %s42, 0
      %p115 = por %p113, %p114
      %p116 = scmp.ne.s32.totalorder %s102, %s103
      %p117 = scmp.eq.s32.totalorder %s43, 1
      %p118 = por %p116, %p117
      %p120 = scmp.ne.s32.totalorder %s103, %s119
      %p121 = scmp.eq.s32.totalorder %s43, 0
      %p122 = por %p120, %p121
      %s123 = ssub.s32 %s37, %s44
      %p124 = scmp.eq.s32.totalorder %s123, 0
      %s126 = sadd.s32 %s125, 1
      %s127 = scalar_select %p124, %s125, %s126
      %p130 = pneg %p124
      %p131 = scmp.eq.s32.totalorder %s37, 1
      %p132 = por %p130, %p131
      %p133 = scmp.ne.s32.totalorder %s125, %s128
      %p134 = scmp.eq.s32.totalorder %s37, 0
      %p135 = por %p133, %p134
      %p136 = scmp.ne.s32.totalorder %s125, %s128
      %p137 = scmp.eq.s32.totalorder %s42, 1
      %p138 = por %p136, %p137
      %p139 = scmp.ne.s32.totalorder %s128, %s129
      %p140 = scmp.eq.s32.totalorder %s42, 0
      %p141 = por %p139, %p140
      %p142 = scmp.ne.s32.totalorder %s128, %s129
      %p143 = scmp.eq.s32.totalorder %s43, 1
      %p144 = por %p142, %p143
      %p146 = scmp.ne.s32.totalorder %s129, %s145
      %p147 = scmp.eq.s32.totalorder %s43, 0
      %p148 = por %p146, %p147
      %s150 = sadd.s32 %s149, 1
      %p153 = scmp.eq.s32.totalorder %s37, 1
      %p154 = scmp.ne.s32.totalorder %s149, %s151
      %p155 = scmp.eq.s32.totalorder %s37, 0
      %p156 = por %p154, %p155
      %p157 = scmp.ne.s32.totalorder %s149, %s151
      %p158 = scmp.eq.s32.totalorder %s42, 1
      %p159 = por %p157, %p158
      %p160 = scmp.ne.s32.totalorder %s151, %s152
      %p161 = scmp.eq.s32.totalorder %s42, 0
      %p162 = por %p160, %p161
      %p163 = scmp.ne.s32.totalorder %s151, %s152
      %p164 = scmp.eq.s32.totalorder %s43, 1
      %p165 = por %p163, %p164
      %p167 = scmp.ne.s32.totalorder %s152, %s166
      %p168 = scmp.eq.s32.totalorder %s43, 0
      %p169 = por %p167, %p168
      %s171 = sadd.s32 %s170, 1
      %p174 = scmp.eq.s32.totalorder %s37, 1
      %p175 = scmp.ne.s32.totalorder %s170, %s172
      %p176 = scmp.eq.s32.totalorder %s37, 0
      %p177 = por %p175, %p176
      %p178 = scmp.ne.s32.totalorder %s170, %s172
      %p179 = scmp.eq.s32.totalorder %s42, 1
      %p180 = por %p178, %p179
      %p181 = scmp.ne.s32.totalorder %s172, %s173
      %p182 = scmp.eq.s32.totalorder %s42, 0
      %p183 = por %p181, %p182
      %p184 = scmp.ne.s32.totalorder %s172, %s173
      %p185 = scmp.eq.s32.totalorder %s43, 1
      %p186 = por %p184, %p185
      %p188 = scmp.ne.s32.totalorder %s173, %s187
      %p189 = scmp.eq.s32.totalorder %s43, 0
      %p190 = por %p188, %p189
      %s192 = sadd.s32 %s191, 1
      %p195 = scmp.eq.s32.totalorder %s37, 1
      %p196 = scmp.ne.s32.totalorder %s191, %s193
      %p197 = scmp.eq.s32.totalorder %s37, 0
      %p198 = por %p196, %p197
      %p199 = scmp.ne.s32.totalorder %s191, %s193
      %p200 = scmp.eq.s32.totalorder %s42, 1
      %p201 = por %p199, %p200
      %p202 = scmp.ne.s32.totalorder %s193, %s194
      %p203 = scmp.eq.s32.totalorder %s42, 0
      %p204 = por %p202, %p203
      %p205 = scmp.ne.s32.totalorder %s193, %s194
      %p206 = scmp.eq.s32.totalorder %s43, 1
      %p207 = por %p205, %p206
      %p209 = scmp.ne.s32.totalorder %s194, %s208
      %p210 = scmp.eq.s32.totalorder %s43, 0
      %p211 = por %p209, %p210
      %s213 = sadd.s32 %s212, 1
      %p216 = scmp.eq.s32.totalorder %s37, 1
      %p217 = scmp.ne.s32.totalorder %s212, %s214
      %p218 = scmp.eq.s32.totalorder %s37, 0
      %p219 = por %p217, %p218
      %p220 = scmp.ne.s32.totalorder %s212, %s214
      %p221 = scmp.eq.s32.totalorder %s42, 1
      %p222 = por %p220, %p221
      %p223 = scmp.ne.s32.totalorder %s214, %s215
      %p224 = scmp.eq.s32.totalorder %s42, 0
      %p225 = por %p223, %p224
      %p226 = scmp.ne.s32.totalorder %s214, %s215
      %p227 = scmp.eq.s32.totalorder %s43, 1
      %p228 = por %p226, %p227
      %p230 = scmp.ne.s32.totalorder %s215, %s229
      %p231 = scmp.eq.s32.totalorder %s43, 0
      %p232 = por %p230, %p231
      %s234 = sadd.s32 %s233, 1
      %p237 = scmp.eq.s32.totalorder %s37, 1
      %p238 = scmp.ne.s32.totalorder %s233, %s235
      %p239 = scmp.eq.s32.totalorder %s37, 0
      %p240 = por %p238, %p239
      %p241 = scmp.ne.s32.totalorder %s233, %s235
      %p242 = scmp.eq.s32.totalorder %s42, 1
      %p243 = por %p241, %p242
      %p244 = scmp.ne.s32.totalorder %s235, %s236
      %p245 = scmp.eq.s32.totalorder %s42, 0
      %p246 = por %p244, %p245
      %p247 = scmp.ne.s32.totalorder %s235, %s236
      %p248 = scmp.eq.s32.totalorder %s43, 1
      %p249 = por %p247, %p248
      %p251 = scmp.ne.s32.totalorder %s236, %s250
      %p252 = scmp.eq.s32.totalorder %s43, 0
      %p253 = por %p251, %p252
      %s255 = sadd.s32 %s254, 1
      %p258 = scmp.eq.s32.totalorder %s37, 1
      %p259 = scmp.ne.s32.totalorder %s254, %s256
      %p260 = scmp.eq.s32.totalorder %s37, 0
      %p261 = por %p259, %p260
      %p262 = scmp.ne.s32.totalorder %s254, %s256
      %p263 = scmp.eq.s32.totalorder %s42, 1
      %p264 = por %p262, %p263
      %p265 = scmp.ne.s32.totalorder %s256, %s257
      %p266 = scmp.eq.s32.totalorder %s42, 0
      %p267 = por %p265, %p266
      %p268 = scmp.ne.s32.totalorder %s256, %s257
      %p269 = scmp.eq.s32.totalorder %s43, 1
      %p270 = por %p268, %p269
      %p272 = scmp.ne.s32.totalorder %s257, %s271
      %p273 = scmp.eq.s32.totalorder %s43, 0
      %p274 = por %p272, %p273
      %s276 = sadd.s32 %s275, 1
      %p279 = scmp.eq.s32.totalorder %s37, 1
      %p280 = scmp.ne.s32.totalorder %s275, %s277
      %p281 = scmp.eq.s32.totalorder %s37, 0
      %p282 = por %p280, %p281
      %p283 = scmp.ne.s32.totalorder %s275, %s277
      %p284 = scmp.eq.s32.totalorder %s42, 1
      %p285 = por %p283, %p284
      %p286 = scmp.ne.s32.totalorder %s277, %s278
      %p287 = scmp.eq.s32.totalorder %s42, 0
      %p288 = por %p286, %p287
      %p289 = scmp.ne.s32.totalorder %s277, %s278
      %p290 = scmp.eq.s32.totalorder %s43, 1
      %p291 = por %p289, %p290
      %p293 = scmp.ne.s32.totalorder %s278, %s292
      %p294 = scmp.eq.s32.totalorder %s43, 0
      %p295 = por %p293, %p294
      %s297 = sadd.s32 %s296, 1
      %p300 = scmp.eq.s32.totalorder %s37, 1
      %p301 = scmp.ne.s32.totalorder %s296, %s298
      %p302 = scmp.eq.s32.totalorder %s37, 0
      %p303 = por %p301, %p302
      %p304 = scmp.ne.s32.totalorder %s296, %s298
      %p305 = scmp.eq.s32.totalorder %s42, 1
      %p306 = por %p304, %p305
      %p307 = scmp.ne.s32.totalorder %s298, %s299
      %p308 = scmp.eq.s32.totalorder %s42, 0
      %p309 = por %p307, %p308
      %p310 = scmp.ne.s32.totalorder %s298, %s299
      %p311 = scmp.eq.s32.totalorder %s43, 1
      %p312 = por %p310, %p311
      %p314 = scmp.ne.s32.totalorder %s299, %s313
      %p315 = scmp.eq.s32.totalorder %s43, 0
      %p316 = por %p314, %p315
      %s318 = sadd.s32 %s317, 1
      %p321 = scmp.eq.s32.totalorder %s37, 1
      %p322 = scmp.ne.s32.totalorder %s317, %s319
      %p323 = scmp.eq.s32.totalorder %s37, 0
      %p324 = por %p322, %p323
      %p325 = scmp.ne.s32.totalorder %s317, %s319
      %p326 = scmp.eq.s32.totalorder %s42, 1
      %p327 = por %p325, %p326
      %p328 = scmp.ne.s32.totalorder %s319, %s320
      %p329 = scmp.eq.s32.totalorder %s42, 0
      %p330 = por %p328, %p329
      %p331 = scmp.ne.s32.totalorder %s319, %s320
      %p332 = scmp.eq.s32.totalorder %s43, 1
      %p333 = por %p331, %p332
      %p335 = scmp.ne.s32.totalorder %s320, %s334
      %p336 = scmp.eq.s32.totalorder %s43, 0
      %p337 = por %p335, %p336
      %s339 = sadd.s32 %s338, 1
      %p342 = scmp.eq.s32.totalorder %s37, 1
      %p343 = scmp.ne.s32.totalorder %s338, %s340
      %p344 = scmp.eq.s32.totalorder %s37, 0
      %p345 = por %p343, %p344
      %p346 = scmp.ne.s32.totalorder %s338, %s340
      %p347 = scmp.eq.s32.totalorder %s42, 1
      %p348 = por %p346, %p347
      %p349 = scmp.ne.s32.totalorder %s340, %s341
      %p350 = scmp.eq.s32.totalorder %s42, 0
      %p351 = por %p349, %p350
      %p352 = scmp.ne.s32.totalorder %s340, %s341
      %p353 = scmp.eq.s32.totalorder %s43, 1
      %p354 = por %p352, %p353
      %p356 = scmp.ne.s32.totalorder %s341, %s355
      %p357 = scmp.eq.s32.totalorder %s43, 0
      %p358 = por %p356, %p357
      %s360 = sadd.s32 %s359, 1
      %p363 = scmp.eq.s32.totalorder %s37, 1
      %p364 = scmp.ne.s32.totalorder %s359, %s361
      %p365 = scmp.eq.s32.totalorder %s37, 0
      %p366 = por %p364, %p365
      %p367 = scmp.ne.s32.totalorder %s359, %s361
      %p368 = scmp.eq.s32.totalorder %s42, 1
      %p369 = por %p367, %p368
      %p370 = scmp.ne.s32.totalorder %s361, %s362
      %p371 = scmp.eq.s32.totalorder %s42, 0
      %p372 = por %p370, %p371
      %p373 = scmp.ne.s32.totalorder %s361, %s362
      %p374 = scmp.eq.s32.totalorder %s43, 1
      %p375 = por %p373, %p374
      %p377 = scmp.ne.s32.totalorder %s362, %s376
      %p378 = scmp.eq.s32.totalorder %s43, 0
      %p379 = por %p377, %p378
      %s381 = sadd.s32 %s380, 1
      %p384 = scmp.eq.s32.totalorder %s37, 1
      %p385 = scmp.ne.s32.totalorder %s380, %s382
      %p386 = scmp.eq.s32.totalorder %s37, 0
      %p387 = por %p385, %p386
      %p388 = scmp.ne.s32.totalorder %s380, %s382
      %p389 = scmp.eq.s32.totalorder %s42, 1
      %p390 = por %p388, %p389
      %p391 = scmp.ne.s32.totalorder %s382, %s383
      %p392 = scmp.eq.s32.totalorder %s42, 0
      %p393 = por %p391, %p392
      %p394 = scmp.ne.s32.totalorder %s382, %s383
      %p395 = scmp.eq.s32.totalorder %s43, 1
      %p396 = por %p394, %p395
      %p398 = scmp.ne.s32.totalorder %s383, %s397
      %p399 = scmp.eq.s32.totalorder %s43, 0
      %p400 = por %p398, %p399
      %s402 = sadd.s32 %s401, 1
      %p405 = scmp.eq.s32.totalorder %s37, 1
      %p406 = scmp.ne.s32.totalorder %s401, %s403
      %p407 = scmp.eq.s32.totalorder %s37, 0
      %p408 = por %p406, %p407
      %p409 = scmp.ne.s32.totalorder %s401, %s403
      %p410 = scmp.eq.s32.totalorder %s42, 1
      %p411 = por %p409, %p410
      %p412 = scmp.ne.s32.totalorder %s403, %s404
      %p413 = scmp.eq.s32.totalorder %s42, 0
      %p414 = por %p412, %p413
      %p415 = scmp.ne.s32.totalorder %s403, %s404
      %p416 = scmp.eq.s32.totalorder %s43, 1
      %p417 = por %p415, %p416
      %p419 = scmp.ne.s32.totalorder %s404, %s418
      %p420 = scmp.eq.s32.totalorder %s43, 0
      %p421 = por %p419, %p420
      %s423 = sadd.s32 %s422, 1
      %p426 = scmp.eq.s32.totalorder %s37, 1
      %p427 = scmp.ne.s32.totalorder %s422, %s424
      %p428 = scmp.eq.s32.totalorder %s37, 0
      %p429 = por %p427, %p428
      %p430 = scmp.ne.s32.totalorder %s422, %s424
      %p431 = scmp.eq.s32.totalorder %s42, 1
      %p432 = por %p430, %p431
      %p433 = scmp.ne.s32.totalorder %s424, %s425
      %p434 = scmp.eq.s32.totalorder %s42, 0
      %p435 = por %p433, %p434
      %p436 = scmp.ne.s32.totalorder %s424, %s425
      %p437 = scmp.eq.s32.totalorder %s43, 1
      %p438 = por %p436, %p437
      %p440 = scmp.ne.s32.totalorder %s425, %s439
      %p441 = scmp.eq.s32.totalorder %s43, 0
      %p442 = por %p440, %p441
      %s444 = sadd.s32 %s443, 1
      %p447 = scmp.eq.s32.totalorder %s37, 1
      %p448 = scmp.ne.s32.totalorder %s443, %s445
      %p449 = scmp.eq.s32.totalorder %s37, 0
      %p450 = por %p448, %p449
      %p451 = scmp.ne.s32.totalorder %s443, %s445
      %p452 = scmp.eq.s32.totalorder %s42, 1
      %p453 = por %p451, %p452
      %p454 = scmp.ne.s32.totalorder %s445, %s446
      %p455 = scmp.eq.s32.totalorder %s42, 0
      %p456 = por %p454, %p455
      %p457 = scmp.ne.s32.totalorder %s445, %s446
      %p458 = scmp.eq.s32.totalorder %s43, 1
      %p459 = por %p457, %p458
      %p461 = scmp.ne.s32.totalorder %s446, %s460
      %p462 = scmp.eq.s32.totalorder %s43, 0
      %p463 = por %p461, %p462
      %s465 = sadd.s32 %s464, 1
      %p468 = scmp.eq.s32.totalorder %s37, 1
      %p469 = scmp.ne.s32.totalorder %s464, %s466
      %p470 = scmp.eq.s32.totalorder %s37, 0
      %p471 = por %p469, %p470
      %p472 = scmp.ne.s32.totalorder %s464, %s466
      %p473 = scmp.eq.s32.totalorder %s42, 1
      %p474 = por %p472, %p473
      %p475 = scmp.ne.s32.totalorder %s466, %s467
      %p476 = scmp.eq.s32.totalorder %s42, 0
      %p477 = por %p475, %p476
      %p478 = scmp.ne.s32.totalorder %s466, %s467
      %p479 = scmp.eq.s32.totalorder %s43, 1
      %p480 = por %p478, %p479
      %p482 = scmp.ne.s32.totalorder %s467, %s481
      %p483 = scmp.eq.s32.totalorder %s43, 0
      %p484 = por %p482, %p483
      %s486 = sadd.s32 %s485, 1
      %p489 = scmp.eq.s32.totalorder %s37, 1
      %p490 = scmp.ne.s32.totalorder %s485, %s487
      %p491 = scmp.eq.s32.totalorder %s37, 0
      %p492 = por %p490, %p491
      %p493 = scmp.ne.s32.totalorder %s485, %s487
      %p494 = scmp.eq.s32.totalorder %s42, 1
      %p495 = por %p493, %p494
      %p496 = scmp.ne.s32.totalorder %s487, %s488
      %p497 = scmp.eq.s32.totalorder %s42, 0
      %p498 = por %p496, %p497
      %p499 = scmp.ne.s32.totalorder %s487, %s488
      %p500 = scmp.eq.s32.totalorder %s43, 1
      %p501 = por %p499, %p500
      %p503 = scmp.ne.s32.totalorder %s488, %s502
      %p504 = scmp.eq.s32.totalorder %s43, 0
      %p505 = por %p503, %p504
      %s507 = sadd.s32 %s506, 1
      %p510 = scmp.eq.s32.totalorder %s37, 1
      %p511 = scmp.ne.s32.totalorder %s506, %s508
      %p512 = scmp.eq.s32.totalorder %s37, 0
      %p513 = por %p511, %p512
      %p514 = scmp.ne.s32.totalorder %s506, %s508
      %p515 = scmp.eq.s32.totalorder %s42, 1
      %p516 = por %p514, %p515
      %p517 = scmp.ne.s32.totalorder %s508, %s509
      %p518 = scmp.eq.s32.totalorder %s42, 0
      %p519 = por %p517, %p518
      %p520 = scmp.ne.s32.totalorder %s508, %s509
      %p521 = scmp.eq.s32.totalorder %s43, 1
      %p522 = por %p520, %p521
      %p524 = scmp.ne.s32.totalorder %s509, %s523
      %p525 = scmp.eq.s32.totalorder %s43, 0
      %p526 = por %p524, %p525
      %s528 = sadd.s32 %s527, 1
      %p531 = scmp.eq.s32.totalorder %s37, 1
      %p532 = scmp.ne.s32.totalorder %s527, %s529
      %p533 = scmp.eq.s32.totalorder %s37, 0
      %p534 = por %p532, %p533
      %p535 = scmp.ne.s32.totalorder %s527, %s529
      %p536 = scmp.eq.s32.totalorder %s42, 1
      %p537 = por %p535, %p536
      %p538 = scmp.ne.s32.totalorder %s529, %s530
      %p539 = scmp.eq.s32.totalorder %s42, 0
      %p540 = por %p538, %p539
      %p541 = scmp.ne.s32.totalorder %s529, %s530
      %p542 = scmp.eq.s32.totalorder %s43, 1
      %p543 = por %p541, %p542
      %p545 = scmp.ne.s32.totalorder %s530, %s544
      %p546 = scmp.eq.s32.totalorder %s43, 0
      %p547 = por %p545, %p546
      %s549 = sadd.s32 %s548, 1
      %p552 = scmp.eq.s32.totalorder %s37, 1
      %p553 = scmp.ne.s32.totalorder %s548, %s550
      %p554 = scmp.eq.s32.totalorder %s37, 0
      %p555 = por %p553, %p554
      %p556 = scmp.ne.s32.totalorder %s548, %s550
      %p557 = scmp.eq.s32.totalorder %s42, 1
      %p558 = por %p556, %p557
      %p559 = scmp.ne.s32.totalorder %s550, %s551
      %p560 = scmp.eq.s32.totalorder %s42, 0
      %p561 = por %p559, %p560
      %p562 = scmp.ne.s32.totalorder %s550, %s551
      %p563 = scmp.eq.s32.totalorder %s43, 1
      %p564 = por %p562, %p563
      %p566 = scmp.ne.s32.totalorder %s551, %s565
      %p567 = scmp.eq.s32.totalorder %s43, 0
      %p568 = por %p566, %p567
      %s570 = sadd.s32 %s569, 1
      %p573 = scmp.eq.s32.totalorder %s37, 1
      %p574 = scmp.ne.s32.totalorder %s569, %s571
      %p575 = scmp.eq.s32.totalorder %s37, 0
      %p576 = por %p574, %p575
      %p577 = scmp.ne.s32.totalorder %s569, %s571
      %p578 = scmp.eq.s32.totalorder %s42, 1
      %p579 = por %p577, %p578
      %p580 = scmp.ne.s32.totalorder %s571, %s572
      %p581 = scmp.eq.s32.totalorder %s42, 0
      %p582 = por %p580, %p581
      %p583 = scmp.ne.s32.totalorder %s571, %s572
      %p584 = scmp.eq.s32.totalorder %s43, 1
      %p585 = por %p583, %p584
      %p587 = scmp.ne.s32.totalorder %s572, %s586
      %p588 = scmp.eq.s32.totalorder %s43, 0
      %p589 = por %p587, %p588
      %s591 = sadd.s32 %s590, 1
      %p594 = scmp.eq.s32.totalorder %s37, 1
      %p595 = scmp.ne.s32.totalorder %s590, %s592
      %p596 = scmp.eq.s32.totalorder %s37, 0
      %p597 = por %p595, %p596
      %p598 = scmp.ne.s32.totalorder %s590, %s592
      %p599 = scmp.eq.s32.totalorder %s42, 1
      %p600 = por %p598, %p599
      %p601 = scmp.ne.s32.totalorder %s592, %s593
      %p602 = scmp.eq.s32.totalorder %s42, 0
      %p603 = por %p601, %p602
      %p604 = scmp.ne.s32.totalorder %s592, %s593
      %p605 = scmp.eq.s32.totalorder %s43, 1
      %p606 = por %p604, %p605
      %p608 = scmp.ne.s32.totalorder %s593, %s607
      %p609 = scmp.eq.s32.totalorder %s43, 0
      %p610 = por %p608, %p609
      %s612 = sadd.s32 %s611, 1
      %p615 = scmp.eq.s32.totalorder %s37, 1
      %p616 = scmp.ne.s32.totalorder %s611, %s613
      %p617 = scmp.eq.s32.totalorder %s37, 0
      %p618 = por %p616, %p617
      %p619 = scmp.ne.s32.totalorder %s611, %s613
      %p620 = scmp.eq.s32.totalorder %s42, 1
      %p621 = por %p619, %p620
      %p622 = scmp.ne.s32.totalorder %s613, %s614
      %p623 = scmp.eq.s32.totalorder %s42, 0
      %p624 = por %p622, %p623
      %p625 = scmp.ne.s32.totalorder %s613, %s614
      %p626 = scmp.eq.s32.totalorder %s43, 1
      %p627 = por %p625, %p626
      %p629 = scmp.ne.s32.totalorder %s614, %s628
      %p630 = scmp.eq.s32.totalorder %s43, 0
      %p631 = por %p629, %p630
      %s633 = sadd.s32 %s632, 1
      %p636 = scmp.eq.s32.totalorder %s37, 1
      %p637 = scmp.ne.s32.totalorder %s632, %s634
      %p638 = scmp.eq.s32.totalorder %s37, 0
      %p639 = por %p637, %p638
      %p640 = scmp.ne.s32.totalorder %s632, %s634
      %p641 = scmp.eq.s32.totalorder %s42, 1
      %p642 = por %p640, %p641
      %p643 = scmp.ne.s32.totalorder %s634, %s635
      %p644 = scmp.eq.s32.totalorder %s42, 0
      %p645 = por %p643, %p644
      %p646 = scmp.ne.s32.totalorder %s634, %s635
      %p647 = scmp.eq.s32.totalorder %s43, 1
      %p648 = por %p646, %p647
      %p650 = scmp.ne.s32.totalorder %s635, %s649
      %p651 = scmp.eq.s32.totalorder %s43, 0
      %p652 = por %p650, %p651
      %s653 = ssub.s32 %s37, %s44
      %p654 = scmp.eq.s32.totalorder %s653, 0
      %s656 = sadd.s32 %s655, 1
      %s657 = scalar_select %p654, %s655, %s656
      %p660 = pneg %p654
      %p661 = scmp.eq.s32.totalorder %s37, 1
      %p662 = por %p660, %p661
      %p663 = scmp.ne.s32.totalorder %s655, %s658
      %p664 = scmp.eq.s32.totalorder %s37, 0
      %p665 = por %p663, %p664
      %p666 = scmp.ne.s32.totalorder %s655, %s658
      %p667 = scmp.eq.s32.totalorder %s42, 1
      %p668 = por %p666, %p667
      %p669 = scmp.ne.s32.totalorder %s658, %s659
      %p670 = scmp.eq.s32.totalorder %s42, 0
      %p671 = por %p669, %p670
      %p672 = scmp.ne.s32.totalorder %s658, %s659
      %p673 = scmp.eq.s32.totalorder %s43, 1
      %p674 = por %p672, %p673
      %p676 = scmp.ne.s32.totalorder %s659, %s675
      %p677 = scmp.eq.s32.totalorder %s43, 0
      %p678 = por %p676, %p677
      %p679 = scmp.le.s32.totalorder 1, %s37
      %p680 = scmp.lt.s32.totalorder %s37, 3
      %p681 = pnand %p679, %p680
      %p682 = pneg %p681
      // Predicated region
      $region9: #{bc_model_pcl_forward.1} parent=5 // pred_check
        _
      $region10: #{bc_model_pcl_forward.1} parent=5 // pred_check_branch
        %684 = sbr.rel (%p681) target = $region12
      $region11: #{bc_model_pcl_forward.1} parent=5 // pred_region
        %s685 = ssub.s32 %s37, 1
        // Predicated region
        $region13: #{bc_model_pcl_forward.1} parent=11 // pred_check
          %p686 = pneg %p162
        $region14: #{bc_model_pcl_forward.1} parent=11 // pred_check_branch
          %688 = sbr.rel (%p686) target = $region16
        $region15: #{bc_model_pcl_forward.1} parent=11 // pred_region
          _
        $region16: #{bc_model_pcl_forward.1} parent=11 // pred_fallthru
          _
        // Predicated region
        $region17: #{bc_model_pcl_forward.1} parent=11 // pred_check
          %p689 = pneg %p183
        $region18: #{bc_model_pcl_forward.1} parent=11 // pred_check_branch
          %691 = sbr.rel (%p689) target = $region20
        $region19: #{bc_model_pcl_forward.1} parent=11 // pred_region
          _
        $region20: #{bc_model_pcl_forward.1} parent=11 // pred_fallthru
          _
        // Predicated region
        $region21: #{bc_model_pcl_forward.1} parent=11 // pred_check
          %p692 = pneg %p204
        $region22: #{bc_model_pcl_forward.1} parent=11 // pred_check_branch
          %694 = sbr.rel (%p692) target = $region24
        $region23: #{bc_model_pcl_forward.1} parent=11 // pred_region
          _
        $region24: #{bc_model_pcl_forward.1} parent=11 // pred_fallthru
          _
        // Predicated region
        $region25: #{bc_model_pcl_forward.1} parent=11 // pred_check
          %p695 = pneg %p225
        $region26: #{bc_model_pcl_forward.1} parent=11 // pred_check_branch
          %697 = sbr.rel (%p695) target = $region28
        $region27: #{bc_model_pcl_forward.1} parent=11 // pred_region
          _
        $region28: #{bc_model_pcl_forward.1} parent=11 // pred_fallthru
          _
        // Predicated region
        $region29: #{bc_model_pcl_forward.1} parent=11 // pred_check
          %p698 = pneg %p246
        $region30: #{bc_model_pcl_forward.1} parent=11 // pred_check_branch
          %700 = sbr.rel (%p698) target = $region32
        $region31: #{bc_model_pcl_forward.1} parent=11 // pred_region
          _
        $region32: #{bc_model_pcl_forward.1} parent=11 // pred_fallthru
          _
        // Predicated region
        $region33: #{bc_model_pcl_forward.1} parent=11 // pred_check
          %p701 = pneg %p267
        $region34: #{bc_model_pcl_forward.1} parent=11 // pred_check_branch
          %703 = sbr.rel (%p701) target = $region36
        $region35: #{bc_model_pcl_forward.1} parent=11 // pred_region
          _
        $region36: #{bc_model_pcl_forward.1} parent=11 // pred_fallthru
          _
        // Predicated region
        $region37: #{bc_model_pcl_forward.1} parent=11 // pred_check
          %p704 = pneg %p288
        $region38: #{bc_model_pcl_forward.1} parent=11 // pred_check_branch
          %706 = sbr.rel (%p704) target = $region40
        $region39: #{bc_model_pcl_forward.1} parent=11 // pred_region
          _
        $region40: #{bc_model_pcl_forward.1} parent=11 // pred_fallthru
          _
        // Predicated region
        $region41: #{bc_model_pcl_forward.1} parent=11 // pred_check
          %p707 = pneg %p309
        $region42: #{bc_model_pcl_forward.1} parent=11 // pred_check_branch
          %709 = sbr.rel (%p707) target = $region44
        $region43: #{bc_model_pcl_forward.1} parent=11 // pred_region
          _
        $region44: #{bc_model_pcl_forward.1} parent=11 // pred_fallthru
          _
        // Predicated region
        $region45: #{bc_model_pcl_forward.1} parent=11 // pred_check
          %p710 = pneg %p330
        $region46: #{bc_model_pcl_forward.1} parent=11 // pred_check_branch
          %712 = sbr.rel (%p710) target = $region48
        $region47: #{bc_model_pcl_forward.1} parent=11 // pred_region
          _
        $region48: #{bc_model_pcl_forward.1} parent=11 // pred_fallthru
          _
        // Predicated region
        $region49: #{bc_model_pcl_forward.1} parent=11 // pred_check
          %p713 = pneg %p351
        $region50: #{bc_model_pcl_forward.1} parent=11 // pred_check_branch
          %715 = sbr.rel (%p713) target = $region52
        $region51: #{bc_model_pcl_forward.1} parent=11 // pred_region
          _
        $region52: #{bc_model_pcl_forward.1} parent=11 // pred_fallthru
          _
        // Predicated region
        $region53: #{bc_model_pcl_forward.1} parent=11 // pred_check
          %p716 = pneg %p372
        $region54: #{bc_model_pcl_forward.1} parent=11 // pred_check_branch
          %718 = sbr.rel (%p716) target = $region56
        $region55: #{bc_model_pcl_forward.1} parent=11 // pred_region
          _
        $region56: #{bc_model_pcl_forward.1} parent=11 // pred_fallthru
          _
        // Predicated region
        $region57: #{bc_model_pcl_forward.1} parent=11 // pred_check
          %p719 = pneg %p393
        $region58: #{bc_model_pcl_forward.1} parent=11 // pred_check_branch
          %721 = sbr.rel (%p719) target = $region60
        $region59: #{bc_model_pcl_forward.1} parent=11 // pred_region
          _
        $region60: #{bc_model_pcl_forward.1} parent=11 // pred_fallthru
          _
        // Predicated region
        $region61: #{bc_model_pcl_forward.1} parent=11 // pred_check
          %p722 = pneg %p414
        $region62: #{bc_model_pcl_forward.1} parent=11 // pred_check_branch
          %724 = sbr.rel (%p722) target = $region64
        $region63: #{bc_model_pcl_forward.1} parent=11 // pred_region
          _
        $region64: #{bc_model_pcl_forward.1} parent=11 // pred_fallthru
          _
        // Predicated region
        $region65: #{bc_model_pcl_forward.1} parent=11 // pred_check
          %p725 = pneg %p435
        $region66: #{bc_model_pcl_forward.1} parent=11 // pred_check_branch
          %727 = sbr.rel (%p725) target = $region68
        $region67: #{bc_model_pcl_forward.1} parent=11 // pred_region
          _
        $region68: #{bc_model_pcl_forward.1} parent=11 // pred_fallthru
          _
        // Predicated region
        $region69: #{bc_model_pcl_forward.1} parent=11 // pred_check
          %p728 = pneg %p456
        $region70: #{bc_model_pcl_forward.1} parent=11 // pred_check_branch
          %730 = sbr.rel (%p728) target = $region72
        $region71: #{bc_model_pcl_forward.1} parent=11 // pred_region
          _
        $region72: #{bc_model_pcl_forward.1} parent=11 // pred_fallthru
          _
        // Predicated region
        $region73: #{bc_model_pcl_forward.1} parent=11 // pred_check
          %p731 = pneg %p477
        $region74: #{bc_model_pcl_forward.1} parent=11 // pred_check_branch
          %733 = sbr.rel (%p731) target = $region76
        $region75: #{bc_model_pcl_forward.1} parent=11 // pred_region
          _
        $region76: #{bc_model_pcl_forward.1} parent=11 // pred_fallthru
          _
        // Predicated region
        $region77: #{bc_model_pcl_forward.1} parent=11 // pred_check
          %p734 = pneg %p498
        $region78: #{bc_model_pcl_forward.1} parent=11 // pred_check_branch
          %736 = sbr.rel (%p734) target = $region80
        $region79: #{bc_model_pcl_forward.1} parent=11 // pred_region
          _
        $region80: #{bc_model_pcl_forward.1} parent=11 // pred_fallthru
          _
        // Predicated region
        $region81: #{bc_model_pcl_forward.1} parent=11 // pred_check
          %p737 = pneg %p519
        $region82: #{bc_model_pcl_forward.1} parent=11 // pred_check_branch
          %739 = sbr.rel (%p737) target = $region84
        $region83: #{bc_model_pcl_forward.1} parent=11 // pred_region
          _
        $region84: #{bc_model_pcl_forward.1} parent=11 // pred_fallthru
          _
        // Predicated region
        $region85: #{bc_model_pcl_forward.1} parent=11 // pred_check
          %p740 = pneg %p540
        $region86: #{bc_model_pcl_forward.1} parent=11 // pred_check_branch
          %742 = sbr.rel (%p740) target = $region88
        $region87: #{bc_model_pcl_forward.1} parent=11 // pred_region
          _
        $region88: #{bc_model_pcl_forward.1} parent=11 // pred_fallthru
          _
        // Predicated region
        $region89: #{bc_model_pcl_forward.1} parent=11 // pred_check
          %p743 = pneg %p561
        $region90: #{bc_model_pcl_forward.1} parent=11 // pred_check_branch
          %745 = sbr.rel (%p743) target = $region92
        $region91: #{bc_model_pcl_forward.1} parent=11 // pred_region
          _
        $region92: #{bc_model_pcl_forward.1} parent=11 // pred_fallthru
          _
        // Predicated region
        $region93: #{bc_model_pcl_forward.1} parent=11 // pred_check
          %p746 = pneg %p582
        $region94: #{bc_model_pcl_forward.1} parent=11 // pred_check_branch
          %748 = sbr.rel (%p746) target = $region96
        $region95: #{bc_model_pcl_forward.1} parent=11 // pred_region
          _
        $region96: #{bc_model_pcl_forward.1} parent=11 // pred_fallthru
          _
        // Predicated region
        $region97: #{bc_model_pcl_forward.1} parent=11 // pred_check
          %p749 = pneg %p603
        $region98: #{bc_model_pcl_forward.1} parent=11 // pred_check_branch
          %751 = sbr.rel (%p749) target = $region100
        $region99: #{bc_model_pcl_forward.1} parent=11 // pred_region
          _
        $region100: #{bc_model_pcl_forward.1} parent=11 // pred_fallthru
          _
        // Predicated region
        $region101: #{bc_model_pcl_forward.1} parent=11 // pred_check
          %p752 = pneg %p624
        $region102: #{bc_model_pcl_forward.1} parent=11 // pred_check_branch
          %754 = sbr.rel (%p752) target = $region104
        $region103: #{bc_model_pcl_forward.1} parent=11 // pred_region
          _
        $region104: #{bc_model_pcl_forward.1} parent=11 // pred_fallthru
          _
        // Predicated region
        $region105: #{bc_model_pcl_forward.1} parent=11 // pred_check
          %p755 = pneg %p645
        $region106: #{bc_model_pcl_forward.1} parent=11 // pred_check_branch
          %757 = sbr.rel (%p755) target = $region108
        $region107: #{bc_model_pcl_forward.1} parent=11 // pred_region
          _
        $region108: #{bc_model_pcl_forward.1} parent=11 // pred_fallthru
          _
      $region12: #{bc_model_pcl_forward.1} parent=5 // pred_fallthru
        _
      %p758 = scmp.lt.s32.totalorder %s37, 2
      // Predicated region
      $region109: #{bc_model_pcl_forward.1} parent=5 // pred_check
        %p759 = pneg %p758
      $region110: #{bc_model_pcl_forward.1} parent=5 // pred_check_branch
        %761 = sbr.rel (%p759) target = $region112
      $region111: #{bc_model_pcl_forward.1} parent=5 // pred_region
        // Predicated region
        $region113: #{bc_model_pcl_forward.1} parent=111 // pred_check
          %p762 = pneg %p57
        $region114: #{bc_model_pcl_forward.1} parent=111 // pred_check_branch
          %764 = sbr.rel (%p762) target = $region116
        $region115: #{bc_model_pcl_forward.1} parent=111 // pred_region
          %p765 = scmp.lt.s32.totalorder %s37, 1
          %s766 = scalar_select %p765, %s37, 1
          %s767 = smul.addr %s766, 4
          %s768 = scalar_lea.vmem %s0, %s767
        $region116: #{bc_model_pcl_forward.1} parent=111 // pred_fallthru
          _
        // Predicated region
        $region117: #{bc_model_pcl_forward.1} parent=111 // pred_check
          %p769 = pneg %p83
        $region118: #{bc_model_pcl_forward.1} parent=111 // pred_check_branch
          %771 = sbr.rel (%p769) target = $region120
        $region119: #{bc_model_pcl_forward.1} parent=111 // pred_region
          %s772 = smul.u32 18, %s37
          %p773 = scmp.lt.s32.totalorder %s772, 35
          %s774 = scalar_select %p773, %s772, 35
          %s775 = smul.addr %s774, 8
          %s776 = scalar_lea.vmem %s1, %s775
          %s777 = smul.u32 18, %s37
        $region120: #{bc_model_pcl_forward.1} parent=111 // pred_fallthru
          _
        // Predicated region
        $region121: #{bc_model_pcl_forward.1} parent=111 // pred_check
          %p778 = pneg %p109
        $region122: #{bc_model_pcl_forward.1} parent=111 // pred_check_branch
          %780 = sbr.rel (%p778) target = $region124
        $region123: #{bc_model_pcl_forward.1} parent=111 // pred_region
          %p781 = scmp.lt.s32.totalorder %s37, 1
          %s782 = scalar_select %p781, %s37, 1
          %s783 = scalar_lea.vmem %s2, %s782
        $region124: #{bc_model_pcl_forward.1} parent=111 // pred_fallthru
          _
        // Predicated region
        $region125: #{bc_model_pcl_forward.1} parent=111 // pred_check
          %p784 = pneg %p135
        $region126: #{bc_model_pcl_forward.1} parent=111 // pred_check_branch
          %786 = sbr.rel (%p784) target = $region128
        $region127: #{bc_model_pcl_forward.1} parent=111 // pred_region
          %p787 = scmp.lt.s32.totalorder %s37, 1
          %s788 = scalar_select %p787, %s37, 1
          %s789 = scalar_lea.vmem %s3, %s788
        $region128: #{bc_model_pcl_forward.1} parent=111 // pred_fallthru
          _
      $region112: #{bc_model_pcl_forward.1} parent=5 // pred_fallthru
        _
      %p790 = scmp.le.s32.totalorder 1, %s37
      %p791 = scmp.lt.s32.totalorder %s37, 3
      %p792 = pnand %p790, %p791
      %p793 = pneg %p792
      // Predicated region
      $region129: #{bc_model_pcl_forward.1} parent=5 // pred_check
        _
      $region130: #{bc_model_pcl_forward.1} parent=5 // pred_check_branch
        %795 = sbr.rel (%p792) target = $region132
      $region131: #{bc_model_pcl_forward.1} parent=5 // pred_region
        %s796 = ssub.s32 %s37, 1
        %p797 = scmp.lt.s32.totalorder %s42, 1
        %s798 = scalar_select %p797, %s42, 1
        %s799 = smul.addr %s798, 4
        %s800 = scalar_lea.vmem %s0, %s799
        %p801 = pneg %p63
        %p802 = pneg %p60
        %s803 = smul.u32 18, %s42
        %p804 = scmp.lt.s32.totalorder %s803, 35
        %s805 = scalar_select %p804, %s803, 35
        %s806 = smul.addr %s805, 8
        %s807 = scalar_lea.vmem %s1, %s806
        %p808 = pneg %p89
        %p809 = pneg %p86
        %p810 = scmp.lt.s32.totalorder %s42, 1
        %s811 = scalar_select %p810, %s42, 1
        %s812 = scalar_lea.vmem %s2, %s811
        %p813 = pneg %p115
        %p814 = pneg %p112
        %p815 = scmp.lt.s32.totalorder %s42, 1
        %s816 = scalar_select %p815, %s42, 1
        %s817 = scalar_lea.vmem %s3, %s816
        %p818 = pneg %p141
        %p819 = pneg %p138
        %p820 = pneg %p162
        %p821 = pneg %p159
        %p822 = pneg %p183
        %p823 = pneg %p180
        %p824 = pneg %p204
        %p825 = pneg %p201
        %p826 = pneg %p225
        %p827 = pneg %p222
        %p828 = pneg %p246
        %p829 = pneg %p243
        %p830 = pneg %p267
        %p831 = pneg %p264
        %p832 = pneg %p288
        %p833 = pneg %p285
        %p834 = pneg %p309
        %p835 = pneg %p306
        %p836 = pneg %p330
        %p837 = pneg %p327
        %p838 = pneg %p351
        %p839 = pneg %p348
        %p840 = pneg %p372
        %p841 = pneg %p369
        %p842 = pneg %p393
        %p843 = pneg %p390
        %p844 = pneg %p414
        %p845 = pneg %p411
        %p846 = pneg %p435
        %p847 = pneg %p432
        %p848 = pneg %p456
        %p849 = pneg %p453
        %p850 = pneg %p477
        %p851 = pneg %p474
        %p852 = pneg %p498
        %p853 = pneg %p495
        %p854 = pneg %p519
        %p855 = pneg %p516
        %p856 = pneg %p540
        %p857 = pneg %p537
        %p858 = pneg %p561
        %p859 = pneg %p558
        %p860 = pneg %p582
        %p861 = pneg %p579
        %p862 = pneg %p603
        %p863 = pneg %p600
        %p864 = pneg %p624
        %p865 = pneg %p621
        %p866 = pneg %p645
        %p867 = pneg %p642
        %p868 = pneg %p671
        %p869 = pneg %p668
        %s870 = sand.u32 %s658, 1
        %s871 = scalar_lea.sflag [#allocation3], %s870
        %s872 = sand.u32 %s658, 1
        %s873 = scalar_lea.vmem [#allocation2], %s872
        %p874 = scmp.lt.s32.totalorder %s42, 1
        %s875 = scalar_select %p874, %s42, 1
        %s876 = smul.addr %s875, 4
        %s877 = scalar_lea.vmem %s0, %s876
        %s878 = smul.u32 18, %s42
        %p879 = scmp.lt.s32.totalorder %s878, 35
        %s880 = scalar_select %p879, %s878, 35
        %s881 = smul.addr %s880, 8
        %s882 = scalar_lea.vmem %s1, %s881
        %s883 = smul.u32 18, %s42
        %p884 = scmp.lt.s32.totalorder %s42, 1
        %s885 = scalar_select %p884, %s42, 1
        %s886 = scalar_lea.vmem %s2, %s885
        %p887 = scmp.lt.s32.totalorder %s42, 1
        %s888 = scalar_select %p887, %s42, 1
        %s889 = scalar_lea.vmem %s3, %s888
        %v890 = vld [vmem:[%s877] sm:$0x7]
        %v891 = vld [vmem:[%s4] sm:$0xff]
        %v892 = vld [vmem:[%s4 + $0x8] sm:$0xff]
        %v893 = vld [vmem:[%s4 + $0x10] sm:$0xff]
        %v894 = vld [vmem:[%s4 + $0x18] sm:$0xff]
        %v895 = vld [vmem:[%s12] sm:$0xff]
        %v896 = vld [vmem:[%s12 + $0x8] sm:$0xff]
        %v897 = vld [vmem:[%s12 + $0x10] sm:$0xff]
        %v898 = vld [vmem:[%s12 + $0x18] sm:$0xff]
        %900 = vset.pattern.permute.xlu0 0
        %901 = vperm.xlu0 %900, %v895
        %v902 = vpop.permute.xlu0 %901
        %905 = vset.pattern.permute.xlu0 0
        %906 = vperm.xlu0 %905, %v896
        %v907 = vpop.permute.xlu0 %906
        %910 = vset.pattern.permute.xlu0 0
        %911 = vperm.xlu0 %910, %v897
        %v912 = vpop.permute.xlu0 %911
        %915 = vset.pattern.permute.xlu0 0
        %916 = vperm.xlu0 %915, %v898
        %v917 = vpop.permute.xlu0 %916
        %vm919 = vcmask 23552
        %v921 = vsel %vm919, %v891, 0
        %v924 = vsel %vm919, %v892, 0
        %v927 = vsel %vm919, %v893, 0
        %v930 = vsel %vm919, %v894, 0
        %vm932 = vcmask 1042432
        %v934 = vsel %vm932, %v890, 0
        %936 = vmatprep.subr.mxu0 0.0
        %937 = vmatpush1.msra.mxu0 %v934
        %938 = vmatprep.subr.mxu0 0.0
        %939 = vmatpush1.msra.mxu0 0.0
        %940 = vmatprep.subr.mxu0 0.0
        %941 = vmatpush1.msra.mxu0 0.0
        %942 = vmatprep.subr.mxu0 0.0
        %943 = vmatpush1.msra.mxu0 0.0
        %944 = vmatprep.subr.mxu0 0.0
        %945 = vmatpush1.msra.mxu0 0.0
        %946 = vmatprep.subr.mxu0 0.0
        %947 = vmatpush1.msra.mxu0 0.0
        %948 = vmatprep.subr.mxu0 0.0
        %949 = vmatpush1.msra.mxu0 0.0
        %950 = vmatprep.subr.mxu0 0.0
        %951 = vmatpush1.msra.mxu0 0.0
        %952 = vmatprep.subr.mxu0 0.0
        %953 = vmatpush1.msra.mxu0 0.0
        %954 = vmatprep.subr.mxu0 0.0
        %955 = vmatpush1.msra.mxu0 0.0
        %956 = vmatprep.subr.mxu0 0.0
        %957 = vmatpush1.msra.mxu0 0.0
        %958 = vmatprep.subr.mxu0 0.0
        %959 = vmatpush1.msra.mxu0 0.0
        %960 = vmatprep.subr.mxu0 0.0
        %961 = vmatpush1.msra.mxu0 0.0
        %962 = vmatprep.subr.mxu0 0.0
        %963 = vmatpush1.msra.mxu0 0.0
        %964 = vmatprep.subr.mxu0 0.0
        %965 = vmatpush1.msra.mxu0 0.0
        %966 = vmatprep.subr.mxu0 0.0
        %967 = vmatpush1.msra.mxu0 0.0
        %968 = vmatprep.subr.mxu0 0.0
        %969 = vmatpush1.msra.mxu0 0.0
        %970 = vmatprep.subr.mxu0 0.0
        %971 = vmatpush1.msra.mxu0 0.0
        %972 = vmatprep.subr.mxu0 0.0
        %973 = vmatpush1.msra.mxu0 0.0
        %974 = vmatprep.subr.mxu0 0.0
        %975 = vmatpush1.msra.mxu0 0.0
        %976 = vmatprep.subr.mxu0 0.0
        %977 = vmatpush1.msra.mxu0 0.0
        %978 = vmatprep.subr.mxu0 0.0
        %979 = vmatpush1.msra.mxu0 0.0
        %980 = vmatprep.subr.mxu0 0.0
        %981 = vmatpush1.msra.mxu0 0.0
        %982 = vmatprep.subr.mxu0 0.0
        %983 = vmatpush1.msra.mxu0 0.0
        %984 = vmatprep.subr.mxu0 0.0
        %985 = vmatpush1.msra.mxu0 0.0
        %986 = vmatprep.subr.mxu0 0.0
        %987 = vmatpush1.msra.mxu0 0.0
        %988 = vmatprep.subr.mxu0 0.0
        %989 = vmatpush1.msra.mxu0 0.0
        %990 = vmatprep.subr.mxu0 0.0
        %991 = vmatpush1.msra.mxu0 0.0
        %992 = vmatprep.subr.mxu0 0.0
        %993 = vmatpush1.msra.mxu0 0.0
        %994 = vmatprep.subr.mxu0 0.0
        %995 = vmatpush1.msra.mxu0 0.0
        %996 = vmatprep.subr.mxu0 0.0
        %997 = vmatpush1.msra.mxu0 0.0
        %998 = vmatprep.subr.mxu0 0.0
        %999 = vmatpush1.msra.mxu0 0.0
        %1000 = vmatprep.mubr.f32.mxu0 0.0
        %1001 = vmatmul.mubr.f32.gmra.mrb[0].mxu0 %v921
        %v1002 = vpop.f32.mrb[0].mxu0
        %v1003 = vadd.f32 %v902, %v1002
        %v1004 = vpop.f32.mrb[0].mxu0
        %1005 = vmatprep.mubr.f32.mxu0 0.0
        %1006 = vmatmul.mubr.f32.gmra.mrb[0].mxu0 %v924
        %v1007 = vpop.f32.mrb[0].mxu0
        %v1008 = vadd.f32 %v907, %v1007
        %v1009 = vpop.f32.mrb[0].mxu0
        %1010 = vmatprep.mubr.f32.mxu0 0.0
        %1011 = vmatmul.mubr.f32.gmra.mrb[0].mxu0 %v927
        %v1012 = vpop.f32.mrb[0].mxu0
        %v1013 = vadd.f32 %v912, %v1012
        %v1014 = vpop.f32.mrb[0].mxu0
        %1015 = vmatprep.mubr.f32.mxu0 0.0
        %1016 = vmatmul.mubr.f32.gmra.mrb[0].mxu0 %v930
        %v1017 = vpop.f32.mrb[0].mxu0
        %v1018 = vadd.f32 %v917, %v1017
        %v1019 = vpop.f32.mrb[0].mxu0
        %1020 = vdwg.mxu0
        %v1021 = vmax.f32 %v1003, 0.0
        %v1022 = vmax.f32 %v1008, 0.0
        %v1023 = vmax.f32 %v1013, 0.0
        %v1024 = vmax.f32 %v1018, 0.0
        %v1025 = vld [vmem:[%s5] sm:$0xff]
        %v1026 = vld [vmem:[%s5 + $0x8] sm:$0xff]
        %v1027 = vld [vmem:[%s5 + $0x10] sm:$0xff]
        %v1028 = vld [vmem:[%s5 + $0x18] sm:$0xff]
        %v1029 = vld [vmem:[%s5 + $0x20] sm:$0xff]
        %v1030 = vld [vmem:[%s5 + $0x28] sm:$0xff]
        %v1031 = vld [vmem:[%s5 + $0x30] sm:$0xff]
        %v1032 = vld [vmem:[%s5 + $0x38] sm:$0xff]
        %v1033 = vld [vmem:[%s12] sm:$0xff]
        %v1034 = vld [vmem:[%s12 + $0x8] sm:$0xff]
        %v1035 = vld [vmem:[%s12 + $0x10] sm:$0xff]
        %v1036 = vld [vmem:[%s12 + $0x18] sm:$0xff]
        %v1037 = vld [vmem:[%s12 + $0x20] sm:$0xff]
        %v1038 = vld [vmem:[%s12 + $0x28] sm:$0xff]
        %v1039 = vld [vmem:[%s12 + $0x30] sm:$0xff]
        %v1040 = vld [vmem:[%s12 + $0x38] sm:$0xff]
        %1042 = vset.pattern.permute.xlu0 1
        %1043 = vperm.xlu0 %1042, %v1033
        %v1044 = vpop.permute.xlu0 %1043
        %1047 = vset.pattern.permute.xlu0 1
        %1048 = vperm.xlu0 %1047, %v1034
        %v1049 = vpop.permute.xlu0 %1048
        %1052 = vset.pattern.permute.xlu0 1
        %1053 = vperm.xlu0 %1052, %v1035
        %v1054 = vpop.permute.xlu0 %1053
        %1057 = vset.pattern.permute.xlu0 1
        %1058 = vperm.xlu0 %1057, %v1036
        %v1059 = vpop.permute.xlu0 %1058
        %1062 = vset.pattern.permute.xlu0 1
        %1063 = vperm.xlu0 %1062, %v1037
        %v1064 = vpop.permute.xlu0 %1063
        %1067 = vset.pattern.permute.xlu0 1
        %1068 = vperm.xlu0 %1067, %v1038
        %v1069 = vpop.permute.xlu0 %1068
        %1072 = vset.pattern.permute.xlu0 1
        %1073 = vperm.xlu0 %1072, %v1039
        %v1074 = vpop.permute.xlu0 %1073
        %1077 = vset.pattern.permute.xlu0 1
        %1078 = vperm.xlu0 %1077, %v1040
        %v1079 = vpop.permute.xlu0 %1078
        %vm1081 = vcmask 261120
        %v1083 = vsel %vm1081, %v1025, 0
        %v1086 = vsel %vm1081, %v1026, 0
        %v1089 = vsel %vm1081, %v1027, 0
        %v1092 = vsel %vm1081, %v1028, 0
        %v1095 = vsel %vm1081, %v1029, 0
        %v1098 = vsel %vm1081, %v1030, 0
        %v1101 = vsel %vm1081, %v1031, 0
        %v1104 = vsel %vm1081, %v1032, 0
        %1106 = vmatprep.subr.mxu0 0.0
        %1107 = vmatpush1.msra.mxu0 %v1021
        %1108 = vmatprep.subr.mxu0 0.0
        %1109 = vmatpush1.msra.mxu0 %v1022
        %1110 = vmatprep.subr.mxu0 0.0
        %1111 = vmatpush1.msra.mxu0 %v1023
        %1112 = vmatprep.subr.mxu0 0.0
        %1113 = vmatpush1.msra.mxu0 %v1024
        %1114 = vmatprep.subr.mxu0 0.0
        %1115 = vmatpush1.msra.mxu0 0.0
        %1116 = vmatprep.subr.mxu0 0.0
        %1117 = vmatpush1.msra.mxu0 0.0
        %1118 = vmatprep.subr.mxu0 0.0
        %1119 = vmatpush1.msra.mxu0 0.0
        %1120 = vmatprep.subr.mxu0 0.0
        %1121 = vmatpush1.msra.mxu0 0.0
        %1122 = vmatprep.subr.mxu0 0.0
        %1123 = vmatpush1.msra.mxu0 0.0
        %1124 = vmatprep.subr.mxu0 0.0
        %1125 = vmatpush1.msra.mxu0 0.0
        %1126 = vmatprep.subr.mxu0 0.0
        %1127 = vmatpush1.msra.mxu0 0.0
        %1128 = vmatprep.subr.mxu0 0.0
        %1129 = vmatpush1.msra.mxu0 0.0
        %1130 = vmatprep.subr.mxu0 0.0
        %1131 = vmatpush1.msra.mxu0 0.0
        %1132 = vmatprep.subr.mxu0 0.0
        %1133 = vmatpush1.msra.mxu0 0.0
        %1134 = vmatprep.subr.mxu0 0.0
        %1135 = vmatpush1.msra.mxu0 0.0
        %1136 = vmatprep.subr.mxu0 0.0
        %1137 = vmatpush1.msra.mxu0 0.0
        %1138 = vmatprep.subr.mxu0 0.0
        %1139 = vmatpush1.msra.mxu0 0.0
        %1140 = vmatprep.subr.mxu0 0.0
        %1141 = vmatpush1.msra.mxu0 0.0
        %1142 = vmatprep.subr.mxu0 0.0
        %1143 = vmatpush1.msra.mxu0 0.0
        %1144 = vmatprep.subr.mxu0 0.0
        %1145 = vmatpush1.msra.mxu0 0.0
        %1146 = vmatprep.subr.mxu0 0.0
        %1147 = vmatpush1.msra.mxu0 0.0
        %1148 = vmatprep.subr.mxu0 0.0
        %1149 = vmatpush1.msra.mxu0 0.0
        %1150 = vmatprep.subr.mxu0 0.0
        %1151 = vmatpush1.msra.mxu0 0.0
        %1152 = vmatprep.subr.mxu0 0.0
        %1153 = vmatpush1.msra.mxu0 0.0
        %1154 = vmatprep.subr.mxu0 0.0
        %1155 = vmatpush1.msra.mxu0 0.0
        %1156 = vmatprep.subr.mxu0 0.0
        %1157 = vmatpush1.msra.mxu0 0.0
        %1158 = vmatprep.subr.mxu0 0.0
        %1159 = vmatpush1.msra.mxu0 0.0
        %1160 = vmatprep.subr.mxu0 0.0
        %1161 = vmatpush1.msra.mxu0 0.0
        %1162 = vmatprep.subr.mxu0 0.0
        %1163 = vmatpush1.msra.mxu0 0.0
        %1164 = vmatprep.subr.mxu0 0.0
        %1165 = vmatpush1.msra.mxu0 0.0
        %1166 = vmatprep.subr.mxu0 0.0
        %1167 = vmatpush1.msra.mxu0 0.0
        %1168 = vmatprep.subr.mxu0 0.0
        %1169 = vmatpush1.msra.mxu0 0.0
        %1170 = vmatprep.mubr.f32.mxu0 0.0
        %1171 = vmatmul.mubr.f32.gmra.mrb[0].mxu0 %v1083
        %v1172 = vpop.f32.mrb[0].mxu0
        %v1173 = vadd.f32 %v1044, %v1172
        %v1174 = vpop.f32.mrb[0].mxu0
        %1175 = vmatprep.mubr.f32.mxu0 0.0
        %1176 = vmatmul.mubr.f32.gmra.mrb[0].mxu0 %v1086
        %v1177 = vpop.f32.mrb[0].mxu0
        %v1178 = vadd.f32 %v1049, %v1177
        %v1179 = vpop.f32.mrb[0].mxu0
        %1180 = vmatprep.mubr.f32.mxu0 0.0
        %1181 = vmatmul.mubr.f32.gmra.mrb[0].mxu0 %v1089
        %v1182 = vpop.f32.mrb[0].mxu0
        %v1183 = vadd.f32 %v1054, %v1182
        %v1184 = vpop.f32.mrb[0].mxu0
        %1185 = vmatprep.mubr.f32.mxu0 0.0
        %1186 = vmatmul.mubr.f32.gmra.mrb[0].mxu0 %v1092
        %v1187 = vpop.f32.mrb[0].mxu0
        %v1188 = vadd.f32 %v1059, %v1187
        %v1189 = vpop.f32.mrb[0].mxu0
        %1190 = vmatprep.mubr.f32.mxu0 0.0
        %1191 = vmatmul.mubr.f32.gmra.mrb[0].mxu0 %v1095
        %v1192 = vpop.f32.mrb[0].mxu0
        %v1193 = vadd.f32 %v1064, %v1192
        %v1194 = vpop.f32.mrb[0].mxu0
        %1195 = vmatprep.mubr.f32.mxu0 0.0
        %1196 = vmatmul.mubr.f32.gmra.mrb[0].mxu0 %v1098
        %v1197 = vpop.f32.mrb[0].mxu0
        %v1198 = vadd.f32 %v1069, %v1197
        %v1199 = vpop.f32.mrb[0].mxu0
        %1200 = vmatprep.mubr.f32.mxu0 0.0
        %1201 = vmatmul.mubr.f32.gmra.mrb[0].mxu0 %v1101
        %v1202 = vpop.f32.mrb[0].mxu0
        %v1203 = vadd.f32 %v1074, %v1202
        %v1204 = vpop.f32.mrb[0].mxu0
        %1205 = vmatprep.mubr.f32.mxu0 0.0
        %1206 = vmatmul.mubr.f32.gmra.mrb[0].mxu0 %v1104
        %v1207 = vpop.f32.mrb[0].mxu0
        %v1208 = vadd.f32 %v1079, %v1207
        %v1209 = vpop.f32.mrb[0].mxu0
        %1210 = vdwg.mxu0
        %v1211 = vmax.f32 %v1173, 0.0
        %v1212 = vmax.f32 %v1178, 0.0
        %v1213 = vmax.f32 %v1183, 0.0
        %v1214 = vmax.f32 %v1188, 0.0
        %v1215 = vmax.f32 %v1193, 0.0
        %v1216 = vmax.f32 %v1198, 0.0
        %v1217 = vmax.f32 %v1203, 0.0
        %v1218 = vmax.f32 %v1208, 0.0
        %v1219 = vld [vmem:[%s6] sm:$0xff]
        %v1220 = vld [vmem:[%s6 + $0x8] sm:$0xff]
        %v1221 = vld [vmem:[%s6 + $0x10] sm:$0xff]
        %v1222 = vld [vmem:[%s6 + $0x18] sm:$0xff]
        %v1223 = vld [vmem:[%s6 + $0x20] sm:$0xff]
        %v1224 = vld [vmem:[%s6 + $0x28] sm:$0xff]
        %v1225 = vld [vmem:[%s6 + $0x30] sm:$0xff]
        %v1226 = vld [vmem:[%s6 + $0x38] sm:$0xff]
        %v1227 = vld [vmem:[%s6 + $0x40] sm:$0xff]
        %v1228 = vld [vmem:[%s6 + $0x48] sm:$0xff]
        %v1229 = vld [vmem:[%s6 + $0x50] sm:$0xff]
        %v1230 = vld [vmem:[%s6 + $0x58] sm:$0xff]
        %v1231 = vld [vmem:[%s6 + $0x60] sm:$0xff]
        %v1232 = vld [vmem:[%s6 + $0x68] sm:$0xff]
        %v1233 = vld [vmem:[%s6 + $0x70] sm:$0xff]
        %v1234 = vld [vmem:[%s6 + $0x78] sm:$0xff]
        %v1235 = vld [vmem:[%s12] sm:$0xff]
        %v1236 = vld [vmem:[%s12 + $0x8] sm:$0xff]
        %v1237 = vld [vmem:[%s12 + $0x10] sm:$0xff]
        %v1238 = vld [vmem:[%s12 + $0x18] sm:$0xff]
        %v1239 = vld [vmem:[%s12 + $0x20] sm:$0xff]
        %v1240 = vld [vmem:[%s12 + $0x28] sm:$0xff]
        %v1241 = vld [vmem:[%s12 + $0x30] sm:$0xff]
        %v1242 = vld [vmem:[%s12 + $0x38] sm:$0xff]
        %v1243 = vld [vmem:[%s12 + $0x40] sm:$0xff]
        %v1244 = vld [vmem:[%s12 + $0x48] sm:$0xff]
        %v1245 = vld [vmem:[%s12 + $0x50] sm:$0xff]
        %v1246 = vld [vmem:[%s12 + $0x58] sm:$0xff]
        %v1247 = vld [vmem:[%s12 + $0x60] sm:$0xff]
        %v1248 = vld [vmem:[%s12 + $0x68] sm:$0xff]
        %v1249 = vld [vmem:[%s12 + $0x70] sm:$0xff]
        %v1250 = vld [vmem:[%s12 + $0x78] sm:$0xff]
        %1252 = vset.pattern.permute.xlu0 2
        %1253 = vperm.xlu0 %1252, %v1235
        %v1254 = vpop.permute.xlu0 %1253
        %1257 = vset.pattern.permute.xlu0 2
        %1258 = vperm.xlu0 %1257, %v1236
        %v1259 = vpop.permute.xlu0 %1258
        %1262 = vset.pattern.permute.xlu0 2
        %1263 = vperm.xlu0 %1262, %v1237
        %v1264 = vpop.permute.xlu0 %1263
        %1267 = vset.pattern.permute.xlu0 2
        %1268 = vperm.xlu0 %1267, %v1238
        %v1269 = vpop.permute.xlu0 %1268
        %1272 = vset.pattern.permute.xlu0 2
        %1273 = vperm.xlu0 %1272, %v1239
        %v1274 = vpop.permute.xlu0 %1273
        %1277 = vset.pattern.permute.xlu0 2
        %1278 = vperm.xlu0 %1277, %v1240
        %v1279 = vpop.permute.xlu0 %1278
        %1282 = vset.pattern.permute.xlu0 2
        %1283 = vperm.xlu0 %1282, %v1241
        %v1284 = vpop.permute.xlu0 %1283
        %1287 = vset.pattern.permute.xlu0 2
        %1288 = vperm.xlu0 %1287, %v1242
        %v1289 = vpop.permute.xlu0 %1288
        %1292 = vset.pattern.permute.xlu0 2
        %1293 = vperm.xlu0 %1292, %v1243
        %v1294 = vpop.permute.xlu0 %1293
        %1297 = vset.pattern.permute.xlu0 2
        %1298 = vperm.xlu0 %1297, %v1244
        %v1299 = vpop.permute.xlu0 %1298
        %1302 = vset.pattern.permute.xlu0 2
        %1303 = vperm.xlu0 %1302, %v1245
        %v1304 = vpop.permute.xlu0 %1303
        %1307 = vset.pattern.permute.xlu0 2
        %1308 = vperm.xlu0 %1307, %v1246
        %v1309 = vpop.permute.xlu0 %1308
        %1312 = vset.pattern.permute.xlu0 2
        %1313 = vperm.xlu0 %1312, %v1247
        %v1314 = vpop.permute.xlu0 %1313
        %1317 = vset.pattern.permute.xlu0 2
        %1318 = vperm.xlu0 %1317, %v1248
        %v1319 = vpop.permute.xlu0 %1318
        %1322 = vset.pattern.permute.xlu0 2
        %1323 = vperm.xlu0 %1322, %v1249
        %v1324 = vpop.permute.xlu0 %1323
        %1327 = vset.pattern.permute.xlu0 2
        %1328 = vperm.xlu0 %1327, %v1250
        %v1329 = vpop.permute.xlu0 %1328
        %vm1331 = vcmask 523264
        %v1333 = vsel %vm1331, %v1219, 0
        %v1336 = vsel %vm1331, %v1220, 0
        %v1339 = vsel %vm1331, %v1221, 0
        %v1342 = vsel %vm1331, %v1222, 0
        %v1345 = vsel %vm1331, %v1223, 0
        %v1348 = vsel %vm1331, %v1224, 0
        %v1351 = vsel %vm1331, %v1225, 0
        %v1354 = vsel %vm1331, %v1226, 0
        %v1357 = vsel %vm1331, %v1227, 0
        %v1360 = vsel %vm1331, %v1228, 0
        %v1363 = vsel %vm1331, %v1229, 0
        %v1366 = vsel %vm1331, %v1230, 0
        %v1369 = vsel %vm1331, %v1231, 0
        %v1372 = vsel %vm1331, %v1232, 0
        %v1375 = vsel %vm1331, %v1233, 0
        %v1378 = vsel %vm1331, %v1234, 0
        %1380 = vmatprep.subr.mxu0 0.0
        %1381 = vmatpush1.msra.mxu0 %v1211
        %1382 = vmatprep.subr.mxu0 0.0
        %1383 = vmatpush1.msra.mxu0 %v1212
        %1384 = vmatprep.subr.mxu0 0.0
        %1385 = vmatpush1.msra.mxu0 %v1213
        %1386 = vmatprep.subr.mxu0 0.0
        %1387 = vmatpush1.msra.mxu0 %v1214
        %1388 = vmatprep.subr.mxu0 0.0
        %1389 = vmatpush1.msra.mxu0 %v1215
        %1390 = vmatprep.subr.mxu0 0.0
        %1391 = vmatpush1.msra.mxu0 %v1216
        %1392 = vmatprep.subr.mxu0 0.0
        %1393 = vmatpush1.msra.mxu0 %v1217
        %1394 = vmatprep.subr.mxu0 0.0
        %1395 = vmatpush1.msra.mxu0 %v1218
        %1396 = vmatprep.subr.mxu0 0.0
        %1397 = vmatpush1.msra.mxu0 0.0
        %1398 = vmatprep.subr.mxu0 0.0
        %1399 = vmatpush1.msra.mxu0 0.0
        %1400 = vmatprep.subr.mxu0 0.0
        %1401 = vmatpush1.msra.mxu0 0.0
        %1402 = vmatprep.subr.mxu0 0.0
        %1403 = vmatpush1.msra.mxu0 0.0
        %1404 = vmatprep.subr.mxu0 0.0
        %1405 = vmatpush1.msra.mxu0 0.0
        %1406 = vmatprep.subr.mxu0 0.0
        %1407 = vmatpush1.msra.mxu0 0.0
        %1408 = vmatprep.subr.mxu0 0.0
        %1409 = vmatpush1.msra.mxu0 0.0
        %1410 = vmatprep.subr.mxu0 0.0
        %1411 = vmatpush1.msra.mxu0 0.0
        %1412 = vmatprep.subr.mxu0 0.0
        %1413 = vmatpush1.msra.mxu0 0.0
        %1414 = vmatprep.subr.mxu0 0.0
        %1415 = vmatpush1.msra.mxu0 0.0
        %1416 = vmatprep.subr.mxu0 0.0
        %1417 = vmatpush1.msra.mxu0 0.0
        %1418 = vmatprep.subr.mxu0 0.0
        %1419 = vmatpush1.msra.mxu0 0.0
        %1420 = vmatprep.subr.mxu0 0.0
        %1421 = vmatpush1.msra.mxu0 0.0
        %1422 = vmatprep.subr.mxu0 0.0
        %1423 = vmatpush1.msra.mxu0 0.0
        %1424 = vmatprep.subr.mxu0 0.0
        %1425 = vmatpush1.msra.mxu0 0.0
        %1426 = vmatprep.subr.mxu0 0.0
        %1427 = vmatpush1.msra.mxu0 0.0
        %1428 = vmatprep.subr.mxu0 0.0
        %1429 = vmatpush1.msra.mxu0 0.0
        %1430 = vmatprep.subr.mxu0 0.0
        %1431 = vmatpush1.msra.mxu0 0.0
        %1432 = vmatprep.subr.mxu0 0.0
        %1433 = vmatpush1.msra.mxu0 0.0
        %1434 = vmatprep.subr.mxu0 0.0
        %1435 = vmatpush1.msra.mxu0 0.0
        %1436 = vmatprep.subr.mxu0 0.0
        %1437 = vmatpush1.msra.mxu0 0.0
        %1438 = vmatprep.subr.mxu0 0.0
        %1439 = vmatpush1.msra.mxu0 0.0
        %1440 = vmatprep.subr.mxu0 0.0
        %1441 = vmatpush1.msra.mxu0 0.0
        %1442 = vmatprep.subr.mxu0 0.0
        %1443 = vmatpush1.msra.mxu0 0.0
        %1444 = vmatprep.mubr.f32.mxu0 0.0
        %1445 = vmatmul.mubr.f32.gmra.mrb[0].mxu0 %v1333
        %v1446 = vpop.f32.mrb[0].mxu0
        %v1447 = vadd.f32 %v1254, %v1446
        %v1448 = vpop.f32.mrb[0].mxu0
        %1449 = vmatprep.mubr.f32.mxu0 0.0
        %1450 = vmatmul.mubr.f32.gmra.mrb[0].mxu0 %v1336
        %v1451 = vpop.f32.mrb[0].mxu0
        %v1452 = vadd.f32 %v1259, %v1451
        %v1453 = vpop.f32.mrb[0].mxu0
        %1454 = vmatprep.mubr.f32.mxu0 0.0
        %1455 = vmatmul.mubr.f32.gmra.mrb[0].mxu0 %v1339
        %v1456 = vpop.f32.mrb[0].mxu0
        %v1457 = vadd.f32 %v1264, %v1456
        %v1458 = vpop.f32.mrb[0].mxu0
        %1459 = vmatprep.mubr.f32.mxu0 0.0
        %1460 = vmatmul.mubr.f32.gmra.mrb[0].mxu0 %v1342
        %v1461 = vpop.f32.mrb[0].mxu0
        %v1462 = vadd.f32 %v1269, %v1461
        %v1463 = vpop.f32.mrb[0].mxu0
        %1464 = vmatprep.mubr.f32.mxu0 0.0
        %1465 = vmatmul.mubr.f32.gmra.mrb[0].mxu0 %v1345
        %v1466 = vpop.f32.mrb[0].mxu0
        %v1467 = vadd.f32 %v1274, %v1466
        %v1468 = vpop.f32.mrb[0].mxu0
        %1469 = vmatprep.mubr.f32.mxu0 0.0
        %1470 = vmatmul.mubr.f32.gmra.mrb[0].mxu0 %v1348
        %v1471 = vpop.f32.mrb[0].mxu0
        %v1472 = vadd.f32 %v1279, %v1471
        %v1473 = vpop.f32.mrb[0].mxu0
        %1474 = vmatprep.mubr.f32.mxu0 0.0
        %1475 = vmatmul.mubr.f32.gmra.mrb[0].mxu0 %v1351
        %v1476 = vpop.f32.mrb[0].mxu0
        %v1477 = vadd.f32 %v1284, %v1476
        %v1478 = vpop.f32.mrb[0].mxu0
        %1479 = vmatprep.mubr.f32.mxu0 0.0
        %1480 = vmatmul.mubr.f32.gmra.mrb[0].mxu0 %v1354
        %v1481 = vpop.f32.mrb[0].mxu0
        %v1482 = vadd.f32 %v1289, %v1481
        %v1483 = vpop.f32.mrb[0].mxu0
        %1484 = vmatprep.mubr.f32.mxu0 0.0
        %1485 = vmatmul.mubr.f32.gmra.mrb[0].mxu0 %v1357
        %v1486 = vpop.f32.mrb[0].mxu0
        %v1487 = vadd.f32 %v1294, %v1486
        %v1488 = vpop.f32.mrb[0].mxu0
        %1489 = vmatprep.mubr.f32.mxu0 0.0
        %1490 = vmatmul.mubr.f32.gmra.mrb[0].mxu0 %v1360
        %v1491 = vpop.f32.mrb[0].mxu0
        %v1492 = vadd.f32 %v1299, %v1491
        %v1493 = vpop.f32.mrb[0].mxu0
        %1494 = vmatprep.mubr.f32.mxu0 0.0
        %1495 = vmatmul.mubr.f32.gmra.mrb[0].mxu0 %v1363
        %v1496 = vpop.f32.mrb[0].mxu0
        %v1497 = vadd.f32 %v1304, %v1496
        %v1498 = vpop.f32.mrb[0].mxu0
        %1499 = vmatprep.mubr.f32.mxu0 0.0
        %1500 = vmatmul.mubr.f32.gmra.mrb[0].mxu0 %v1366
        %v1501 = vpop.f32.mrb[0].mxu0
        %v1502 = vadd.f32 %v1309, %v1501
        %v1503 = vpop.f32.mrb[0].mxu0
        %1504 = vmatprep.mubr.f32.mxu0 0.0
        %1505 = vmatmul.mubr.f32.gmra.mrb[0].mxu0 %v1369
        %v1506 = vpop.f32.mrb[0].mxu0
        %v1507 = vadd.f32 %v1314, %v1506
        %v1508 = vpop.f32.mrb[0].mxu0
        %1509 = vmatprep.mubr.f32.mxu0 0.0
        %1510 = vmatmul.mubr.f32.gmra.mrb[0].mxu0 %v1372
        %v1511 = vpop.f32.mrb[0].mxu0
        %v1512 = vadd.f32 %v1319, %v1511
        %v1513 = vpop.f32.mrb[0].mxu0
        %1514 = vmatprep.mubr.f32.mxu0 0.0
        %1515 = vmatmul.mubr.f32.gmra.mrb[0].mxu0 %v1375
        %v1516 = vpop.f32.mrb[0].mxu0
        %v1517 = vadd.f32 %v1324, %v1516
        %v1518 = vpop.f32.mrb[0].mxu0
        %1519 = vmatprep.mubr.f32.mxu0 0.0
        %1520 = vmatmul.mubr.f32.gmra.mrb[0].mxu0 %v1378
        %v1521 = vpop.f32.mrb[0].mxu0
        %v1522 = vadd.f32 %v1329, %v1521
        %v1523 = vpop.f32.mrb[0].mxu0
        %1524 = vdwg.mxu0
        %v1525 = vsel %vm1331, %v1447, -inf
        %1526 = vmax.xlane.f32.xlu0 %v1525
        %v1527 = vpop.xlane.xlu0 %1526
        %v1528 = vsel %vm1331, %v1452, -inf
        %1529 = vmax.xlane.f32.xlu0 %v1528
        %v1530 = vpop.xlane.xlu0 %1529
        %v1531 = vsel %vm1331, %v1457, -inf
        %1532 = vmax.xlane.f32.xlu0 %v1531
        %v1533 = vpop.xlane.xlu0 %1532
        %v1534 = vsel %vm1331, %v1462, -inf
        %1535 = vmax.xlane.f32.xlu0 %v1534
        %v1536 = vpop.xlane.xlu0 %1535
        %v1537 = vsel %vm1331, %v1467, -inf
        %1538 = vmax.xlane.f32.xlu0 %v1537
        %v1539 = vpop.xlane.xlu0 %1538
        %v1540 = vsel %vm1331, %v1472, -inf
        %1541 = vmax.xlane.f32.xlu0 %v1540
        %v1542 = vpop.xlane.xlu0 %1541
        %v1543 = vsel %vm1331, %v1477, -inf
        %1544 = vmax.xlane.f32.xlu0 %v1543
        %v1545 = vpop.xlane.xlu0 %1544
        %v1546 = vsel %vm1331, %v1482, -inf
        %1547 = vmax.xlane.f32.xlu0 %v1546
        %v1548 = vpop.xlane.xlu0 %1547
        %v1549 = vsel %vm1331, %v1487, -inf
        %1550 = vmax.xlane.f32.xlu0 %v1549
        %v1551 = vpop.xlane.xlu0 %1550
        %v1552 = vsel %vm1331, %v1492, -inf
        %1553 = vmax.xlane.f32.xlu0 %v1552
        %v1554 = vpop.xlane.xlu0 %1553
        %v1555 = vsel %vm1331, %v1497, -inf
        %1556 = vmax.xlane.f32.xlu0 %v1555
        %v1557 = vpop.xlane.xlu0 %1556
        %v1558 = vsel %vm1331, %v1502, -inf
        %1559 = vmax.xlane.f32.xlu0 %v1558
        %v1560 = vpop.xlane.xlu0 %1559
        %v1561 = vsel %vm1331, %v1507, -inf
        %1562 = vmax.xlane.f32.xlu0 %v1561
        %v1563 = vpop.xlane.xlu0 %1562
        %v1564 = vsel %vm1331, %v1512, -inf
        %1565 = vmax.xlane.f32.xlu0 %v1564
        %v1566 = vpop.xlane.xlu0 %1565
        %v1567 = vsel %vm1331, %v1517, -inf
        %1568 = vmax.xlane.f32.xlu0 %v1567
        %v1569 = vpop.xlane.xlu0 %1568
        %v1570 = vsel %vm1331, %v1522, -inf
        %1571 = vmax.xlane.f32.xlu0 %v1570
        %v1572 = vpop.xlane.xlu0 %1571
        %v1573 = vld [vmem:[%s7] sm:$0xff]
        %v1574 = vld [vmem:[%s7 + $0x8] sm:$0xff]
        %v1575 = vld [vmem:[%s7 + $0x10] sm:$0xff]
        %v1576 = vld [vmem:[%s7 + $0x18] sm:$0xff]
        %v1577 = vld [vmem:[%s7 + $0x20] sm:$0xff]
        %v1578 = vld [vmem:[%s7 + $0x28] sm:$0xff]
        %v1579 = vld [vmem:[%s7 + $0x30] sm:$0xff]
        %v1580 = vld [vmem:[%s7 + $0x38] sm:$0xff]
        %v1581 = vld [vmem:[%s8] sm:$0xff]
        %v1582 = vld [vmem:[%s8 + $0x8] sm:$0xff]
        %v1583 = vld [vmem:[%s8 + $0x10] sm:$0xff]
        %v1584 = vld [vmem:[%s8 + $0x18] sm:$0xff]
        %v1585 = vld [vmem:[%s8 + $0x20] sm:$0xff]
        %v1586 = vld [vmem:[%s8 + $0x28] sm:$0xff]
        %v1587 = vld [vmem:[%s8 + $0x30] sm:$0xff]
        %v1588 = vld [vmem:[%s8 + $0x38] sm:$0xff]
        %1589 = vmatprep.subr.mxu0 0.0
        %1590 = vmatpush1.msra.mxu0 %v1527
        %1591 = vmatprep.subr.mxu0 0.0
        %1592 = vmatpush1.msra.mxu0 %v1530
        %1593 = vmatprep.subr.mxu0 0.0
        %1594 = vmatpush1.msra.mxu0 %v1533
        %1595 = vmatprep.subr.mxu0 0.0
        %1596 = vmatpush1.msra.mxu0 %v1536
        %1597 = vmatprep.subr.mxu0 0.0
        %1598 = vmatpush1.msra.mxu0 %v1539
        %1599 = vmatprep.subr.mxu0 0.0
        %1600 = vmatpush1.msra.mxu0 %v1542
        %1601 = vmatprep.subr.mxu0 0.0
        %1602 = vmatpush1.msra.mxu0 %v1545
        %1603 = vmatprep.subr.mxu0 0.0
        %1604 = vmatpush1.msra.mxu0 %v1548
        %1605 = vmatprep.subr.mxu0 0.0
        %1606 = vmatpush1.msra.mxu0 %v1551
        %1607 = vmatprep.subr.mxu0 0.0
        %1608 = vmatpush1.msra.mxu0 %v1554
        %1609 = vmatprep.subr.mxu0 0.0
        %1610 = vmatpush1.msra.mxu0 %v1557
        %1611 = vmatprep.subr.mxu0 0.0
        %1612 = vmatpush1.msra.mxu0 %v1560
        %1613 = vmatprep.subr.mxu0 0.0
        %1614 = vmatpush1.msra.mxu0 %v1563
        %1615 = vmatprep.subr.mxu0 0.0
        %1616 = vmatpush1.msra.mxu0 %v1566
        %1617 = vmatprep.subr.mxu0 0.0
        %1618 = vmatpush1.msra.mxu0 %v1569
        %1619 = vmatprep.subr.mxu0 0.0
        %1620 = vmatpush1.msra.mxu0 %v1572
        %1621 = vmatprep.subr.mxu0 0.0
        %1622 = vmatpush1.msra.mxu0 0.0
        %1623 = vmatprep.subr.mxu0 0.0
        %1624 = vmatpush1.msra.mxu0 0.0
        %1625 = vmatprep.subr.mxu0 0.0
        %1626 = vmatpush1.msra.mxu0 0.0
        %1627 = vmatprep.subr.mxu0 0.0
        %1628 = vmatpush1.msra.mxu0 0.0
        %1629 = vmatprep.subr.mxu0 0.0
        %1630 = vmatpush1.msra.mxu0 0.0
        %1631 = vmatprep.subr.mxu0 0.0
        %1632 = vmatpush1.msra.mxu0 0.0
        %1633 = vmatprep.subr.mxu0 0.0
        %1634 = vmatpush1.msra.mxu0 0.0
        %1635 = vmatprep.subr.mxu0 0.0
        %1636 = vmatpush1.msra.mxu0 0.0
        %1637 = vmatprep.subr.mxu0 0.0
        %1638 = vmatpush1.msra.mxu0 0.0
        %1639 = vmatprep.subr.mxu0 0.0
        %1640 = vmatpush1.msra.mxu0 0.0
        %1641 = vmatprep.subr.mxu0 0.0
        %1642 = vmatpush1.msra.mxu0 0.0
        %1643 = vmatprep.subr.mxu0 0.0
        %1644 = vmatpush1.msra.mxu0 0.0
        %1645 = vmatprep.subr.mxu0 0.0
        %1646 = vmatpush1.msra.mxu0 0.0
        %1647 = vmatprep.subr.mxu0 0.0
        %1648 = vmatpush1.msra.mxu0 0.0
        %1649 = vmatprep.subr.mxu0 0.0
        %1650 = vmatpush1.msra.mxu0 0.0
        %1651 = vmatprep.subr.mxu0 0.0
        %1652 = vmatpush1.msra.mxu0 0.0
        %1653 = vmatprep.mubr.f32.mxu0 0.0
        %1654 = vmatmul.mubr.f32.gmra.mrb[0].mxu0 %v1581
        %v1655 = vpop.f32.mrb[0].mxu0
        %v1656 = vadd.f32 0.0, %v1655
        %v1657 = vpop.f32.mrb[0].mxu0
        %1658 = vmatprep.mubr.f32.mxu0 0.0
        %1659 = vmatmul.mubr.f32.gmra.mrb[0].mxu0 %v1582
        %v1660 = vpop.f32.mrb[0].mxu0
        %v1661 = vadd.f32 0.0, %v1660
        %v1662 = vpop.f32.mrb[0].mxu0
        %1663 = vmatprep.mubr.f32.mxu0 0.0
        %1664 = vmatmul.mubr.f32.gmra.mrb[0].mxu0 %v1583
        %v1665 = vpop.f32.mrb[0].mxu0
        %v1666 = vadd.f32 0.0, %v1665
        %v1667 = vpop.f32.mrb[0].mxu0
        %1668 = vmatprep.mubr.f32.mxu0 0.0
        %1669 = vmatmul.mubr.f32.gmra.mrb[0].mxu0 %v1584
        %v1670 = vpop.f32.mrb[0].mxu0
        %v1671 = vadd.f32 0.0, %v1670
        %v1672 = vpop.f32.mrb[0].mxu0
        %1673 = vmatprep.mubr.f32.mxu0 0.0
        %1674 = vmatmul.mubr.f32.gmra.mrb[0].mxu0 %v1585
        %v1675 = vpop.f32.mrb[0].mxu0
        %v1676 = vadd.f32 0.0, %v1675
        %v1677 = vpop.f32.mrb[0].mxu0
        %1678 = vmatprep.mubr.f32.mxu0 0.0
        %1679 = vmatmul.mubr.f32.gmra.mrb[0].mxu0 %v1586
        %v1680 = vpop.f32.mrb[0].mxu0
        %v1681 = vadd.f32 0.0, %v1680
        %v1682 = vpop.f32.mrb[0].mxu0
        %1683 = vmatprep.mubr.f32.mxu0 0.0
        %1684 = vmatmul.mubr.f32.gmra.mrb[0].mxu0 %v1587
        %v1685 = vpop.f32.mrb[0].mxu0
        %v1686 = vadd.f32 0.0, %v1685
        %v1687 = vpop.f32.mrb[0].mxu0
        %1688 = vmatprep.mubr.f32.mxu0 0.0
        %1689 = vmatmul.mubr.f32.gmra.mrb[0].mxu0 %v1588
        %v1690 = vpop.f32.mrb[0].mxu0
        %v1691 = vadd.f32 0.0, %v1690
        %v1692 = vpop.f32.mrb[0].mxu0
        %1693 = vdwg.mxu0
        %1695 = vset.pattern.permute.xlu0 0
        %1696 = vperm.xlu0 %1695, %v1656
        %v1697 = vpop.permute.xlu0 %1696
        %1700 = vset.pattern.permute.xlu0 0
        %1701 = vperm.xlu0 %1700, %v1661
        %v1702 = vpop.permute.xlu0 %1701
        %1705 = vset.pattern.permute.xlu0 0
        %1706 = vperm.xlu0 %1705, %v1666
        %v1707 = vpop.permute.xlu0 %1706
        %1710 = vset.pattern.permute.xlu0 0
        %1711 = vperm.xlu0 %1710, %v1671
        %v1712 = vpop.permute.xlu0 %1711
        %1715 = vset.pattern.permute.xlu0 0
        %1716 = vperm.xlu0 %1715, %v1676
        %v1717 = vpop.permute.xlu0 %1716
        %1720 = vset.pattern.permute.xlu0 0
        %1721 = vperm.xlu0 %1720, %v1681
        %v1722 = vpop.permute.xlu0 %1721
        %1725 = vset.pattern.permute.xlu0 0
        %1726 = vperm.xlu0 %1725, %v1686
        %v1727 = vpop.permute.xlu0 %1726
        %1730 = vset.pattern.permute.xlu0 0
        %1731 = vperm.xlu0 %1730, %v1691
        %v1732 = vpop.permute.xlu0 %1731
        %v1735 = vsel %vm1081, %v1573, 0
        %v1738 = vsel %vm1081, %v1574, 0
        %v1741 = vsel %vm1081, %v1575, 0
        %v1744 = vsel %vm1081, %v1576, 0
        %v1747 = vsel %vm1081, %v1577, 0
        %v1750 = vsel %vm1081, %v1578, 0
        %v1753 = vsel %vm1081, %v1579, 0
        %v1756 = vsel %vm1081, %v1580, 0
        %1758 = vmatprep.subr.mxu0 0.0
        %1759 = vmatpush1.msra.mxu0 %v1021
        %1760 = vmatprep.subr.mxu0 0.0
        %1761 = vmatpush1.msra.mxu0 %v1022
        %1762 = vmatprep.subr.mxu0 0.0
        %1763 = vmatpush1.msra.mxu0 %v1023
        %1764 = vmatprep.subr.mxu0 0.0
        %1765 = vmatpush1.msra.mxu0 %v1024
        %1766 = vmatprep.subr.mxu0 0.0
        %1767 = vmatpush1.msra.mxu0 0.0
        %1768 = vmatprep.subr.mxu0 0.0
        %1769 = vmatpush1.msra.mxu0 0.0
        %1770 = vmatprep.subr.mxu0 0.0
        %1771 = vmatpush1.msra.mxu0 0.0
        %1772 = vmatprep.subr.mxu0 0.0
        %1773 = vmatpush1.msra.mxu0 0.0
        %1774 = vmatprep.subr.mxu0 0.0
        %1775 = vmatpush1.msra.mxu0 0.0
        %1776 = vmatprep.subr.mxu0 0.0
        %1777 = vmatpush1.msra.mxu0 0.0
        %1778 = vmatprep.subr.mxu0 0.0
        %1779 = vmatpush1.msra.mxu0 0.0
        %1780 = vmatprep.subr.mxu0 0.0
        %1781 = vmatpush1.msra.mxu0 0.0
        %1782 = vmatprep.subr.mxu0 0.0
        %1783 = vmatpush1.msra.mxu0 0.0
        %1784 = vmatprep.subr.mxu0 0.0
        %1785 = vmatpush1.msra.mxu0 0.0
        %1786 = vmatprep.subr.mxu0 0.0
        %1787 = vmatpush1.msra.mxu0 0.0
        %1788 = vmatprep.subr.mxu0 0.0
        %1789 = vmatpush1.msra.mxu0 0.0
        %1790 = vmatprep.subr.mxu0 0.0
        %1791 = vmatpush1.msra.mxu0 0.0
        %1792 = vmatprep.subr.mxu0 0.0
        %1793 = vmatpush1.msra.mxu0 0.0
        %1794 = vmatprep.subr.mxu0 0.0
        %1795 = vmatpush1.msra.mxu0 0.0
        %1796 = vmatprep.subr.mxu0 0.0
        %1797 = vmatpush1.msra.mxu0 0.0
        %1798 = vmatprep.subr.mxu0 0.0
        %1799 = vmatpush1.msra.mxu0 0.0
        %1800 = vmatprep.subr.mxu0 0.0
        %1801 = vmatpush1.msra.mxu0 0.0
        %1802 = vmatprep.subr.mxu0 0.0
        %1803 = vmatpush1.msra.mxu0 0.0
        %1804 = vmatprep.subr.mxu0 0.0
        %1805 = vmatpush1.msra.mxu0 0.0
        %1806 = vmatprep.subr.mxu0 0.0
        %1807 = vmatpush1.msra.mxu0 0.0
        %1808 = vmatprep.subr.mxu0 0.0
        %1809 = vmatpush1.msra.mxu0 0.0
        %1810 = vmatprep.subr.mxu0 0.0
        %1811 = vmatpush1.msra.mxu0 0.0
        %1812 = vmatprep.subr.mxu0 0.0
        %1813 = vmatpush1.msra.mxu0 0.0
        %1814 = vmatprep.subr.mxu0 0.0
        %1815 = vmatpush1.msra.mxu0 0.0
        %1816 = vmatprep.subr.mxu0 0.0
        %1817 = vmatpush1.msra.mxu0 0.0
        %1818 = vmatprep.subr.mxu0 0.0
        %1819 = vmatpush1.msra.mxu0 0.0
        %1820 = vmatprep.subr.mxu0 0.0
        %1821 = vmatpush1.msra.mxu0 0.0
        %1822 = vmatprep.mubr.f32.mxu0 0.0
        %1823 = vmatmul.mubr.f32.gmra.mrb[0].mxu0 %v1735
        %v1824 = vpop.f32.mrb[0].mxu0
        %v1825 = vadd.f32 %v1697, %v1824
        %v1826 = vpop.f32.mrb[0].mxu0
        %1827 = vmatprep.mubr.f32.mxu0 0.0
        %1828 = vmatmul.mubr.f32.gmra.mrb[0].mxu0 %v1738
        %v1829 = vpop.f32.mrb[0].mxu0
        %v1830 = vadd.f32 %v1702, %v1829
        %v1831 = vpop.f32.mrb[0].mxu0
        %1832 = vmatprep.mubr.f32.mxu0 0.0
        %1833 = vmatmul.mubr.f32.gmra.mrb[0].mxu0 %v1741
        %v1834 = vpop.f32.mrb[0].mxu0
        %v1835 = vadd.f32 %v1707, %v1834
        %v1836 = vpop.f32.mrb[0].mxu0
        %1837 = vmatprep.mubr.f32.mxu0 0.0
        %1838 = vmatmul.mubr.f32.gmra.mrb[0].mxu0 %v1744
        %v1839 = vpop.f32.mrb[0].mxu0
        %v1840 = vadd.f32 %v1712, %v1839
        %v1841 = vpop.f32.mrb[0].mxu0
        %1842 = vmatprep.mubr.f32.mxu0 0.0
        %1843 = vmatmul.mubr.f32.gmra.mrb[0].mxu0 %v1747
        %v1844 = vpop.f32.mrb[0].mxu0
        %v1845 = vadd.f32 %v1717, %v1844
        %v1846 = vpop.f32.mrb[0].mxu0
        %1847 = vmatprep.mubr.f32.mxu0 0.0
        %1848 = vmatmul.mubr.f32.gmra.mrb[0].mxu0 %v1750
        %v1849 = vpop.f32.mrb[0].mxu0
        %v1850 = vadd.f32 %v1722, %v1849
        %v1851 = vpop.f32.mrb[0].mxu0
        %1852 = vmatprep.mubr.f32.mxu0 0.0
        %1853 = vmatmul.mubr.f32.gmra.mrb[0].mxu0 %v1753
        %v1854 = vpop.f32.mrb[0].mxu0
        %v1855 = vadd.f32 %v1727, %v1854
        %v1856 = vpop.f32.mrb[0].mxu0
        %1857 = vmatprep.mubr.f32.mxu0 0.0
        %1858 = vmatmul.mubr.f32.gmra.mrb[0].mxu0 %v1756
        %v1859 = vpop.f32.mrb[0].mxu0
        %v1860 = vadd.f32 %v1732, %v1859
        %v1861 = vpop.f32.mrb[0].mxu0
        %1862 = vdwg.mxu0
        %1863 = vset.pattern.permute.xlu0 3
        %1864 = vperm.xlu0 %1863, %v1033
        %v1865 = vpop.permute.xlu0 %1864
        %1867 = vset.pattern.permute.xlu0 3
        %1868 = vperm.xlu0 %1867, %v1034
        %v1869 = vpop.permute.xlu0 %1868
        %1871 = vset.pattern.permute.xlu0 3
        %1872 = vperm.xlu0 %1871, %v1035
        %v1873 = vpop.permute.xlu0 %1872
        %1875 = vset.pattern.permute.xlu0 3
        %1876 = vperm.xlu0 %1875, %v1036
        %v1877 = vpop.permute.xlu0 %1876
        %1879 = vset.pattern.permute.xlu0 3
        %1880 = vperm.xlu0 %1879, %v1037
        %v1881 = vpop.permute.xlu0 %1880
        %1883 = vset.pattern.permute.xlu0 3
        %1884 = vperm.xlu0 %1883, %v1038
        %v1885 = vpop.permute.xlu0 %1884
        %1887 = vset.pattern.permute.xlu0 3
        %1888 = vperm.xlu0 %1887, %v1039
        %v1889 = vpop.permute.xlu0 %1888
        %1891 = vset.pattern.permute.xlu0 3
        %1892 = vperm.xlu0 %1891, %v1040
        %v1893 = vpop.permute.xlu0 %1892
        %v1895 = vadd.f32 %v1825, %v1865
        %v1896 = vadd.f32 %v1830, %v1869
        %v1897 = vadd.f32 %v1835, %v1873
        %v1898 = vadd.f32 %v1840, %v1877
        %v1899 = vadd.f32 %v1845, %v1881
        %v1900 = vadd.f32 %v1850, %v1885
        %v1901 = vadd.f32 %v1855, %v1889
        %v1902 = vadd.f32 %v1860, %v1893
        %v1903 = vmax.f32 %v1895, 0.0
        %v1904 = vmax.f32 %v1896, 0.0
        %v1905 = vmax.f32 %v1897, 0.0
        %v1906 = vmax.f32 %v1898, 0.0
        %v1907 = vmax.f32 %v1899, 0.0
        %v1908 = vmax.f32 %v1900, 0.0
        %v1909 = vmax.f32 %v1901, 0.0
        %v1910 = vmax.f32 %v1902, 0.0
        %v1911 = vld [vmem:[%s9] sm:$0xff]
        %v1912 = vld [vmem:[%s9 + $0x8] sm:$0xff]
        %v1913 = vld [vmem:[%s9 + $0x10] sm:$0xff]
        %v1914 = vld [vmem:[%s9 + $0x18] sm:$0xff]
        %1915 = vset.pattern.permute.xlu0 4
        %1916 = vperm.xlu0 %1915, %v895
        %v1917 = vpop.permute.xlu0 %1916
        %1919 = vset.pattern.permute.xlu0 4
        %1920 = vperm.xlu0 %1919, %v896
        %v1921 = vpop.permute.xlu0 %1920
        %1923 = vset.pattern.permute.xlu0 4
        %1924 = vperm.xlu0 %1923, %v897
        %v1925 = vpop.permute.xlu0 %1924
        %1927 = vset.pattern.permute.xlu0 4
        %1928 = vperm.xlu0 %1927, %v898
        %v1929 = vpop.permute.xlu0 %1928
        %v1932 = vsel %vm1331, %v1911, 0
        %v1935 = vsel %vm1331, %v1912, 0
        %v1938 = vsel %vm1331, %v1913, 0
        %v1941 = vsel %vm1331, %v1914, 0
        %1943 = vmatprep.subr.mxu0 0.0
        %1944 = vmatpush1.msra.mxu0 %v1903
        %1945 = vmatprep.subr.mxu0 0.0
        %1946 = vmatpush1.msra.mxu0 %v1904
        %1947 = vmatprep.subr.mxu0 0.0
        %1948 = vmatpush1.msra.mxu0 %v1905
        %1949 = vmatprep.subr.mxu0 0.0
        %1950 = vmatpush1.msra.mxu0 %v1906
        %1951 = vmatprep.subr.mxu0 0.0
        %1952 = vmatpush1.msra.mxu0 %v1907
        %1953 = vmatprep.subr.mxu0 0.0
        %1954 = vmatpush1.msra.mxu0 %v1908
        %1955 = vmatprep.subr.mxu0 0.0
        %1956 = vmatpush1.msra.mxu0 %v1909
        %1957 = vmatprep.subr.mxu0 0.0
        %1958 = vmatpush1.msra.mxu0 %v1910
        %1959 = vmatprep.subr.mxu0 0.0
        %1960 = vmatpush1.msra.mxu0 0.0
        %1961 = vmatprep.subr.mxu0 0.0
        %1962 = vmatpush1.msra.mxu0 0.0
        %1963 = vmatprep.subr.mxu0 0.0
        %1964 = vmatpush1.msra.mxu0 0.0
        %1965 = vmatprep.subr.mxu0 0.0
        %1966 = vmatpush1.msra.mxu0 0.0
        %1967 = vmatprep.subr.mxu0 0.0
        %1968 = vmatpush1.msra.mxu0 0.0
        %1969 = vmatprep.subr.mxu0 0.0
        %1970 = vmatpush1.msra.mxu0 0.0
        %1971 = vmatprep.subr.mxu0 0.0
        %1972 = vmatpush1.msra.mxu0 0.0
        %1973 = vmatprep.subr.mxu0 0.0
        %1974 = vmatpush1.msra.mxu0 0.0
        %1975 = vmatprep.subr.mxu0 0.0
        %1976 = vmatpush1.msra.mxu0 0.0
        %1977 = vmatprep.subr.mxu0 0.0
        %1978 = vmatpush1.msra.mxu0 0.0
        %1979 = vmatprep.subr.mxu0 0.0
        %1980 = vmatpush1.msra.mxu0 0.0
        %1981 = vmatprep.subr.mxu0 0.0
        %1982 = vmatpush1.msra.mxu0 0.0
        %1983 = vmatprep.subr.mxu0 0.0
        %1984 = vmatpush1.msra.mxu0 0.0
        %1985 = vmatprep.subr.mxu0 0.0
        %1986 = vmatpush1.msra.mxu0 0.0
        %1987 = vmatprep.subr.mxu0 0.0
        %1988 = vmatpush1.msra.mxu0 0.0
        %1989 = vmatprep.subr.mxu0 0.0
        %1990 = vmatpush1.msra.mxu0 0.0
        %1991 = vmatprep.subr.mxu0 0.0
        %1992 = vmatpush1.msra.mxu0 0.0
        %1993 = vmatprep.subr.mxu0 0.0
        %1994 = vmatpush1.msra.mxu0 0.0
        %1995 = vmatprep.subr.mxu0 0.0
        %1996 = vmatpush1.msra.mxu0 0.0
        %1997 = vmatprep.subr.mxu0 0.0
        %1998 = vmatpush1.msra.mxu0 0.0
        %1999 = vmatprep.subr.mxu0 0.0
        %2000 = vmatpush1.msra.mxu0 0.0
        %2001 = vmatprep.subr.mxu0 0.0
        %2002 = vmatpush1.msra.mxu0 0.0
        %2003 = vmatprep.subr.mxu0 0.0
        %2004 = vmatpush1.msra.mxu0 0.0
        %2005 = vmatprep.subr.mxu0 0.0
        %2006 = vmatpush1.msra.mxu0 0.0
        %2007 = vmatprep.mubr.f32.mxu0 0.0
        %2008 = vmatmul.mubr.f32.gmra.mrb[0].mxu0 %v1932
        %v2009 = vpop.f32.mrb[0].mxu0
        %v2010 = vadd.f32 %v1917, %v2009
        %v2011 = vpop.f32.mrb[0].mxu0
        %2012 = vmatprep.mubr.f32.mxu0 0.0
        %2013 = vmatmul.mubr.f32.gmra.mrb[0].mxu0 %v1935
        %v2014 = vpop.f32.mrb[0].mxu0
        %v2015 = vadd.f32 %v1921, %v2014
        %v2016 = vpop.f32.mrb[0].mxu0
        %2017 = vmatprep.mubr.f32.mxu0 0.0
        %2018 = vmatmul.mubr.f32.gmra.mrb[0].mxu0 %v1938
        %v2019 = vpop.f32.mrb[0].mxu0
        %v2020 = vadd.f32 %v1925, %v2019
        %v2021 = vpop.f32.mrb[0].mxu0
        %2022 = vmatprep.mubr.f32.mxu0 0.0
        %2023 = vmatmul.mubr.f32.gmra.mrb[0].mxu0 %v1941
        %v2024 = vpop.f32.mrb[0].mxu0
        %v2025 = vadd.f32 %v1929, %v2024
        %v2026 = vpop.f32.mrb[0].mxu0
        %2027 = vdwg.mxu0
        %v2028 = vmax.f32 %v2010, 0.0
        %v2029 = vmax.f32 %v2015, 0.0
        %v2030 = vmax.f32 %v2020, 0.0
        %v2031 = vmax.f32 %v2025, 0.0
        %v2032 = vld [vmem:[%s10] sm:$0xf]
        %v2033 = vld [vmem:[%s12] sm:$0xf]
        %2035 = vset.pattern.permute.xlu0 5
        %2036 = vperm.xlu0 %2035, %v2033
        %v2037 = vpop.permute.xlu0 %2036
        %v2040 = vsel %vm1081, %v2032, 0
        %2042 = vmatprep.subr.mxu0 0.0
        %2043 = vmatpush1.msra.mxu0 %v2028
        %2044 = vmatprep.subr.mxu0 0.0
        %2045 = vmatpush1.msra.mxu0 %v2029
        %2046 = vmatprep.subr.mxu0 0.0
        %2047 = vmatpush1.msra.mxu0 %v2030
        %2048 = vmatprep.subr.mxu0 0.0
        %2049 = vmatpush1.msra.mxu0 %v2031
        %2050 = vmatprep.subr.mxu0 0.0
        %2051 = vmatpush1.msra.mxu0 0.0
        %2052 = vmatprep.subr.mxu0 0.0
        %2053 = vmatpush1.msra.mxu0 0.0
        %2054 = vmatprep.subr.mxu0 0.0
        %2055 = vmatpush1.msra.mxu0 0.0
        %2056 = vmatprep.subr.mxu0 0.0
        %2057 = vmatpush1.msra.mxu0 0.0
        %2058 = vmatprep.subr.mxu0 0.0
        %2059 = vmatpush1.msra.mxu0 0.0
        %2060 = vmatprep.subr.mxu0 0.0
        %2061 = vmatpush1.msra.mxu0 0.0
        %2062 = vmatprep.subr.mxu0 0.0
        %2063 = vmatpush1.msra.mxu0 0.0
        %2064 = vmatprep.subr.mxu0 0.0
        %2065 = vmatpush1.msra.mxu0 0.0
        %2066 = vmatprep.subr.mxu0 0.0
        %2067 = vmatpush1.msra.mxu0 0.0
        %2068 = vmatprep.subr.mxu0 0.0
        %2069 = vmatpush1.msra.mxu0 0.0
        %2070 = vmatprep.subr.mxu0 0.0
        %2071 = vmatpush1.msra.mxu0 0.0
        %2072 = vmatprep.subr.mxu0 0.0
        %2073 = vmatpush1.msra.mxu0 0.0
        %2074 = vmatprep.subr.mxu0 0.0
        %2075 = vmatpush1.msra.mxu0 0.0
        %2076 = vmatprep.subr.mxu0 0.0
        %2077 = vmatpush1.msra.mxu0 0.0
        %2078 = vmatprep.subr.mxu0 0.0
        %2079 = vmatpush1.msra.mxu0 0.0
        %2080 = vmatprep.subr.mxu0 0.0
        %2081 = vmatpush1.msra.mxu0 0.0
        %2082 = vmatprep.subr.mxu0 0.0
        %2083 = vmatpush1.msra.mxu0 0.0
        %2084 = vmatprep.subr.mxu0 0.0
        %2085 = vmatpush1.msra.mxu0 0.0
        %2086 = vmatprep.subr.mxu0 0.0
        %2087 = vmatpush1.msra.mxu0 0.0
        %2088 = vmatprep.subr.mxu0 0.0
        %2089 = vmatpush1.msra.mxu0 0.0
        %2090 = vmatprep.subr.mxu0 0.0
        %2091 = vmatpush1.msra.mxu0 0.0
        %2092 = vmatprep.subr.mxu0 0.0
        %2093 = vmatpush1.msra.mxu0 0.0
        %2094 = vmatprep.subr.mxu0 0.0
        %2095 = vmatpush1.msra.mxu0 0.0
        %2096 = vmatprep.subr.mxu0 0.0
        %2097 = vmatpush1.msra.mxu0 0.0
        %2098 = vmatprep.subr.mxu0 0.0
        %2099 = vmatpush1.msra.mxu0 0.0
        %2100 = vmatprep.subr.mxu0 0.0
        %2101 = vmatpush1.msra.mxu0 0.0
        %2102 = vmatprep.subr.mxu0 0.0
        %2103 = vmatpush1.msra.mxu0 0.0
        %2104 = vmatprep.subr.mxu0 0.0
        %2105 = vmatpush1.msra.mxu0 0.0
        %2106 = vmatprep.mubr.f32.mxu0 0.0
        %2107 = vmatmul.mubr.f32.gmra.mrb[0].mxu0 %v2040
        %v2108 = vpop.f32.mrb[0].mxu0
        %v2109 = vadd.f32 %v2037, %v2108
        %v2110 = vpop.f32.mrb[0].mxu0
        %2111 = vdwg.mxu0
        %vm2112 = vcmask 519168
        %v2113 = vsel %vm2112, %v2109, -inf
        %v2114 = vrot.slane %v2113, 4
        %v2115 = vmax.f32 %v2113, %v2114
        %v2116 = vrot.slane %v2115, 2
        %v2117 = vmax.f32 %v2115, %v2116
        %v2118 = vrot.slane %v2117, 1
        %v2119 = vmax.f32 %v2117, %v2118
        %v2120 = vsub.f32 %v2109, %v2119
        %v2121 = vmul.f32 %v2120, 1.442695
        %v2122 = vpow.pop %v2121
        %v2123 = vsel %vm2112, %v2122, 0.0
        %v2124 = vrot.slane %v2123, 4
        %v2125 = vadd.f32 %v2123, %v2124
        %v2126 = vrot.slane %v2125, 2
        %v2127 = vadd.f32 %v2125, %v2126
        %v2128 = vrot.slane %v2127, 1
        %v2129 = vadd.f32 %v2127, %v2128
        %v2130 = vlog2.pop %v2129
        %v2131 = vmul.f32 %v2130, 0.6931472
        %v2132 = vsub.f32 %v2120, %v2131
        %v2133 = vld [vmem:[%s11] sm:$0xff]
        %v2134 = vld [vmem:[%s11 + $0x8] sm:$0xff]
        %v2135 = vld [vmem:[%s11 + $0x10] sm:$0xff]
        %v2136 = vld [vmem:[%s11 + $0x18] sm:$0xff]
        %v2137 = vld [vmem:[%s11 + $0x20] sm:$0xff]
        %v2138 = vld [vmem:[%s11 + $0x28] sm:$0xff]
        %v2139 = vld [vmem:[%s11 + $0x30] sm:$0xff]
        %v2140 = vld [vmem:[%s11 + $0x38] sm:$0xff]
        %v2141 = vld [vmem:[%s11 + $0x40] sm:$0xff]
        %v2142 = vld [vmem:[%s11 + $0x48] sm:$0xff]
        %v2143 = vld [vmem:[%s11 + $0x50] sm:$0xff]
        %v2144 = vld [vmem:[%s11 + $0x58] sm:$0xff]
        %v2145 = vld [vmem:[%s11 + $0x60] sm:$0xff]
        %v2146 = vld [vmem:[%s11 + $0x68] sm:$0xff]
        %v2147 = vld [vmem:[%s11 + $0x70] sm:$0xff]
        %v2148 = vld [vmem:[%s11 + $0x78] sm:$0xff]
        %v2150 = vrot.slane %v2132, 1
        %v2151 = vsel %vm1331, %v2150, 0
        %2153 = vmatprep.subr.mxu0 0.0
        %2154 = vmatpush1.msra.mxu0 %v2141
        %2155 = vmatprep.subr.mxu0 0.0
        %2156 = vmatpush1.msra.mxu0 %v2142
        %2157 = vmatprep.subr.mxu0 0.0
        %2158 = vmatpush1.msra.mxu0 %v2143
        %2159 = vmatprep.subr.mxu0 0.0
        %2160 = vmatpush1.msra.mxu0 %v2144
        %2161 = vmatprep.subr.mxu0 0.0
        %2162 = vmatpush1.msra.mxu0 %v2145
        %2163 = vmatprep.subr.mxu0 0.0
        %2164 = vmatpush1.msra.mxu0 %v2146
        %2165 = vmatprep.subr.mxu0 0.0
        %2166 = vmatpush1.msra.mxu0 %v2147
        %2167 = vmatprep.subr.mxu0 0.0
        %2168 = vmatpush1.msra.mxu0 %v2148
        %2169 = vmatprep.subr.mxu0 0.0
        %2170 = vmatpush1.msra.mxu0 0.0
        %2171 = vmatprep.subr.mxu0 0.0
        %2172 = vmatpush1.msra.mxu0 0.0
        %2173 = vmatprep.subr.mxu0 0.0
        %2174 = vmatpush1.msra.mxu0 0.0
        %2175 = vmatprep.subr.mxu0 0.0
        %2176 = vmatpush1.msra.mxu0 0.0
        %2177 = vmatprep.subr.mxu0 0.0
        %2178 = vmatpush1.msra.mxu0 0.0
        %2179 = vmatprep.subr.mxu0 0.0
        %2180 = vmatpush1.msra.mxu0 0.0
        %2181 = vmatprep.subr.mxu0 0.0
        %2182 = vmatpush1.msra.mxu0 0.0
        %2183 = vmatprep.subr.mxu0 0.0
        %2184 = vmatpush1.msra.mxu0 0.0
        %2185 = vmatprep.subr.mxu0 0.0
        %2186 = vmatpush1.msra.mxu0 0.0
        %2187 = vmatprep.subr.mxu0 0.0
        %2188 = vmatpush1.msra.mxu0 0.0
        %2189 = vmatprep.subr.mxu0 0.0
        %2190 = vmatpush1.msra.mxu0 0.0
        %2191 = vmatprep.subr.mxu0 0.0
        %2192 = vmatpush1.msra.mxu0 0.0
        %2193 = vmatprep.subr.mxu0 0.0
        %2194 = vmatpush1.msra.mxu0 0.0
        %2195 = vmatprep.subr.mxu0 0.0
        %2196 = vmatpush1.msra.mxu0 0.0
        %2197 = vmatprep.subr.mxu0 0.0
        %2198 = vmatpush1.msra.mxu0 0.0
        %2199 = vmatprep.subr.mxu0 0.0
        %2200 = vmatpush1.msra.mxu0 0.0
        %2201 = vmatprep.subr.mxu0 0.0
        %2202 = vmatpush1.msra.mxu0 0.0
        %2203 = vmatprep.subr.mxu0 0.0
        %2204 = vmatpush1.msra.mxu0 0.0
        %2205 = vmatprep.subr.mxu0 0.0
        %2206 = vmatpush1.msra.mxu0 0.0
        %2207 = vmatprep.subr.mxu0 0.0
        %2208 = vmatpush1.msra.mxu0 0.0
        %2209 = vmatprep.subr.mxu0 0.0
        %2210 = vmatpush1.msra.mxu0 0.0
        %2211 = vmatprep.subr.mxu0 0.0
        %2212 = vmatpush1.msra.mxu0 0.0
        %2213 = vmatprep.subr.mxu0 0.0
        %2214 = vmatpush1.msra.mxu0 0.0
        %2215 = vmatprep.subr.mxu0 0.0
        %2216 = vmatpush1.msra.mxu0 0.0
        %2217 = vmatprep.mubr.f32.mxu0 0.0
        %2218 = vmatmul.mubr.f32.gmra.mrb[0].mxu0 %v2151
        %v2219 = vpop.f32.mrb[0].mxu0
        %v2220 = vadd.f32 0.0, %v2219
        %v2221 = vpop.f32.mrb[0].mxu0
        %2222 = vdwg.mxu0
        %v2223 = vsel %vm1331, %v2132, 0
        %2225 = vmatprep.subr.mxu0 0.0
        %2226 = vmatpush1.msra.mxu0 %v2133
        %2227 = vmatprep.subr.mxu0 0.0
        %2228 = vmatpush1.msra.mxu0 %v2134
        %2229 = vmatprep.subr.mxu0 0.0
        %2230 = vmatpush1.msra.mxu0 %v2135
        %2231 = vmatprep.subr.mxu0 0.0
        %2232 = vmatpush1.msra.mxu0 %v2136
        %2233 = vmatprep.subr.mxu0 0.0
        %2234 = vmatpush1.msra.mxu0 %v2137
        %2235 = vmatprep.subr.mxu0 0.0
        %2236 = vmatpush1.msra.mxu0 %v2138
        %2237 = vmatprep.subr.mxu0 0.0
        %2238 = vmatpush1.msra.mxu0 %v2139
        %2239 = vmatprep.subr.mxu0 0.0
        %2240 = vmatpush1.msra.mxu0 %v2140
        %2241 = vmatprep.subr.mxu0 0.0
        %2242 = vmatpush1.msra.mxu0 0.0
        %2243 = vmatprep.subr.mxu0 0.0
        %2244 = vmatpush1.msra.mxu0 0.0
        %2245 = vmatprep.subr.mxu0 0.0
        %2246 = vmatpush1.msra.mxu0 0.0
        %2247 = vmatprep.subr.mxu0 0.0
        %2248 = vmatpush1.msra.mxu0 0.0
        %2249 = vmatprep.subr.mxu0 0.0
        %2250 = vmatpush1.msra.mxu0 0.0
        %2251 = vmatprep.subr.mxu0 0.0
        %2252 = vmatpush1.msra.mxu0 0.0
        %2253 = vmatprep.subr.mxu0 0.0
        %2254 = vmatpush1.msra.mxu0 0.0
        %2255 = vmatprep.subr.mxu0 0.0
        %2256 = vmatpush1.msra.mxu0 0.0
        %2257 = vmatprep.subr.mxu0 0.0
        %2258 = vmatpush1.msra.mxu0 0.0
        %2259 = vmatprep.subr.mxu0 0.0
        %2260 = vmatpush1.msra.mxu0 0.0
        %2261 = vmatprep.subr.mxu0 0.0
        %2262 = vmatpush1.msra.mxu0 0.0
        %2263 = vmatprep.subr.mxu0 0.0
        %2264 = vmatpush1.msra.mxu0 0.0
        %2265 = vmatprep.subr.mxu0 0.0
        %2266 = vmatpush1.msra.mxu0 0.0
        %2267 = vmatprep.subr.mxu0 0.0
        %2268 = vmatpush1.msra.mxu0 0.0
        %2269 = vmatprep.subr.mxu0 0.0
        %2270 = vmatpush1.msra.mxu0 0.0
        %2271 = vmatprep.subr.mxu0 0.0
        %2272 = vmatpush1.msra.mxu0 0.0
        %2273 = vmatprep.subr.mxu0 0.0
        %2274 = vmatpush1.msra.mxu0 0.0
        %2275 = vmatprep.subr.mxu0 0.0
        %2276 = vmatpush1.msra.mxu0 0.0
        %2277 = vmatprep.subr.mxu0 0.0
        %2278 = vmatpush1.msra.mxu0 0.0
        %2279 = vmatprep.subr.mxu0 0.0
        %2280 = vmatpush1.msra.mxu0 0.0
        %2281 = vmatprep.subr.mxu0 0.0
        %2282 = vmatpush1.msra.mxu0 0.0
        %2283 = vmatprep.subr.mxu0 0.0
        %2284 = vmatpush1.msra.mxu0 0.0
        %2285 = vmatprep.subr.mxu0 0.0
        %2286 = vmatpush1.msra.mxu0 0.0
        %2287 = vmatprep.subr.mxu0 0.0
        %2288 = vmatpush1.msra.mxu0 0.0
        %2289 = vmatprep.mubr.f32.mxu0 0.0
        %2290 = vmatmul.mubr.f32.gmra.mrb[0].mxu0 %v2223
        %v2291 = vpop.f32.mrb[0].mxu0
        %v2292 = vadd.f32 %v2220, %v2291
        %v2293 = vpop.f32.mrb[0].mxu0
        %2294 = vdwg.mxu0
        %v2295 = vld [vmem:[%s11 + $0x80] sm:$0xff]
        %v2296 = vld [vmem:[%s11 + $0x88] sm:$0xff]
        %v2297 = vld [vmem:[%s11 + $0x90] sm:$0xff]
        %v2298 = vld [vmem:[%s11 + $0x98] sm:$0xff]
        %v2299 = vld [vmem:[%s11 + $0xa0] sm:$0xff]
        %v2300 = vld [vmem:[%s11 + $0xa8] sm:$0xff]
        %v2301 = vld [vmem:[%s11 + $0xb0] sm:$0xff]
        %v2302 = vld [vmem:[%s11 + $0xb8] sm:$0xff]
        %v2303 = vrot.slane %v2132, 2
        %v2304 = vsel %vm1331, %v2303, 0
        %2306 = vmatprep.subr.mxu0 0.0
        %2307 = vmatpush1.msra.mxu0 %v2295
        %2308 = vmatprep.subr.mxu0 0.0
        %2309 = vmatpush1.msra.mxu0 %v2296
        %2310 = vmatprep.subr.mxu0 0.0
        %2311 = vmatpush1.msra.mxu0 %v2297
        %2312 = vmatprep.subr.mxu0 0.0
        %2313 = vmatpush1.msra.mxu0 %v2298
        %2314 = vmatprep.subr.mxu0 0.0
        %2315 = vmatpush1.msra.mxu0 %v2299
        %2316 = vmatprep.subr.mxu0 0.0
        %2317 = vmatpush1.msra.mxu0 %v2300
        %2318 = vmatprep.subr.mxu0 0.0
        %2319 = vmatpush1.msra.mxu0 %v2301
        %2320 = vmatprep.subr.mxu0 0.0
        %2321 = vmatpush1.msra.mxu0 %v2302
        %2322 = vmatprep.subr.mxu0 0.0
        %2323 = vmatpush1.msra.mxu0 0.0
        %2324 = vmatprep.subr.mxu0 0.0
        %2325 = vmatpush1.msra.mxu0 0.0
        %2326 = vmatprep.subr.mxu0 0.0
        %2327 = vmatpush1.msra.mxu0 0.0
        %2328 = vmatprep.subr.mxu0 0.0
        %2329 = vmatpush1.msra.mxu0 0.0
        %2330 = vmatprep.subr.mxu0 0.0
        %2331 = vmatpush1.msra.mxu0 0.0
        %2332 = vmatprep.subr.mxu0 0.0
        %2333 = vmatpush1.msra.mxu0 0.0
        %2334 = vmatprep.subr.mxu0 0.0
        %2335 = vmatpush1.msra.mxu0 0.0
        %2336 = vmatprep.subr.mxu0 0.0
        %2337 = vmatpush1.msra.mxu0 0.0
        %2338 = vmatprep.subr.mxu0 0.0
        %2339 = vmatpush1.msra.mxu0 0.0
        %2340 = vmatprep.subr.mxu0 0.0
        %2341 = vmatpush1.msra.mxu0 0.0
        %2342 = vmatprep.subr.mxu0 0.0
        %2343 = vmatpush1.msra.mxu0 0.0
        %2344 = vmatprep.subr.mxu0 0.0
        %2345 = vmatpush1.msra.mxu0 0.0
        %2346 = vmatprep.subr.mxu0 0.0
        %2347 = vmatpush1.msra.mxu0 0.0
        %2348 = vmatprep.subr.mxu0 0.0
        %2349 = vmatpush1.msra.mxu0 0.0
        %2350 = vmatprep.subr.mxu0 0.0
        %2351 = vmatpush1.msra.mxu0 0.0
        %2352 = vmatprep.subr.mxu0 0.0
        %2353 = vmatpush1.msra.mxu0 0.0
        %2354 = vmatprep.subr.mxu0 0.0
        %2355 = vmatpush1.msra.mxu0 0.0
        %2356 = vmatprep.subr.mxu0 0.0
        %2357 = vmatpush1.msra.mxu0 0.0
        %2358 = vmatprep.subr.mxu0 0.0
        %2359 = vmatpush1.msra.mxu0 0.0
        %2360 = vmatprep.subr.mxu0 0.0
        %2361 = vmatpush1.msra.mxu0 0.0
        %2362 = vmatprep.subr.mxu0 0.0
        %2363 = vmatpush1.msra.mxu0 0.0
        %2364 = vmatprep.subr.mxu0 0.0
        %2365 = vmatpush1.msra.mxu0 0.0
        %2366 = vmatprep.subr.mxu0 0.0
        %2367 = vmatpush1.msra.mxu0 0.0
        %2368 = vmatprep.subr.mxu0 0.0
        %2369 = vmatpush1.msra.mxu0 0.0
        %2370 = vmatprep.mubr.f32.mxu0 0.0
        %2371 = vmatmul.mubr.f32.gmra.mrb[0].mxu0 %v2304
        %v2372 = vpop.f32.mrb[0].mxu0
        %v2373 = vadd.f32 0.0, %v2372
        %v2374 = vpop.f32.mrb[0].mxu0
        %2375 = vdwg.mxu0
        %v2376 = vadd.f32 %v2292, %v2373
        %v2377 = vld [vmem:[%s11 + $0xc0] sm:$0xff]
        %v2378 = vld [vmem:[%s11 + $0xc8] sm:$0xff]
        %v2379 = vld [vmem:[%s11 + $0xd0] sm:$0xff]
        %v2380 = vld [vmem:[%s11 + $0xd8] sm:$0xff]
        %v2381 = vld [vmem:[%s11 + $0xe0] sm:$0xff]
        %v2382 = vld [vmem:[%s11 + $0xe8] sm:$0xff]
        %v2383 = vld [vmem:[%s11 + $0xf0] sm:$0xff]
        %v2384 = vld [vmem:[%s11 + $0xf8] sm:$0xff]
        %v2385 = vrot.slane %v2132, 3
        %v2386 = vsel %vm1331, %v2385, 0
        %2388 = vmatprep.subr.mxu0 0.0
        %2389 = vmatpush1.msra.mxu0 %v2377
        %2390 = vmatprep.subr.mxu0 0.0
        %2391 = vmatpush1.msra.mxu0 %v2378
        %2392 = vmatprep.subr.mxu0 0.0
        %2393 = vmatpush1.msra.mxu0 %v2379
        %2394 = vmatprep.subr.mxu0 0.0
        %2395 = vmatpush1.msra.mxu0 %v2380
        %2396 = vmatprep.subr.mxu0 0.0
        %2397 = vmatpush1.msra.mxu0 %v2381
        %2398 = vmatprep.subr.mxu0 0.0
        %2399 = vmatpush1.msra.mxu0 %v2382
        %2400 = vmatprep.subr.mxu0 0.0
        %2401 = vmatpush1.msra.mxu0 %v2383
        %2402 = vmatprep.subr.mxu0 0.0
        %2403 = vmatpush1.msra.mxu0 %v2384
        %2404 = vmatprep.subr.mxu0 0.0
        %2405 = vmatpush1.msra.mxu0 0.0
        %2406 = vmatprep.subr.mxu0 0.0
        %2407 = vmatpush1.msra.mxu0 0.0
        %2408 = vmatprep.subr.mxu0 0.0
        %2409 = vmatpush1.msra.mxu0 0.0
        %2410 = vmatprep.subr.mxu0 0.0
        %2411 = vmatpush1.msra.mxu0 0.0
        %2412 = vmatprep.subr.mxu0 0.0
        %2413 = vmatpush1.msra.mxu0 0.0
        %2414 = vmatprep.subr.mxu0 0.0
        %2415 = vmatpush1.msra.mxu0 0.0
        %2416 = vmatprep.subr.mxu0 0.0
        %2417 = vmatpush1.msra.mxu0 0.0
        %2418 = vmatprep.subr.mxu0 0.0
        %2419 = vmatpush1.msra.mxu0 0.0
        %2420 = vmatprep.subr.mxu0 0.0
        %2421 = vmatpush1.msra.mxu0 0.0
        %2422 = vmatprep.subr.mxu0 0.0
        %2423 = vmatpush1.msra.mxu0 0.0
        %2424 = vmatprep.subr.mxu0 0.0
        %2425 = vmatpush1.msra.mxu0 0.0
        %2426 = vmatprep.subr.mxu0 0.0
        %2427 = vmatpush1.msra.mxu0 0.0
        %2428 = vmatprep.subr.mxu0 0.0
        %2429 = vmatpush1.msra.mxu0 0.0
        %2430 = vmatprep.subr.mxu0 0.0
        %2431 = vmatpush1.msra.mxu0 0.0
        %2432 = vmatprep.subr.mxu0 0.0
        %2433 = vmatpush1.msra.mxu0 0.0
        %2434 = vmatprep.subr.mxu0 0.0
        %2435 = vmatpush1.msra.mxu0 0.0
        %2436 = vmatprep.subr.mxu0 0.0
        %2437 = vmatpush1.msra.mxu0 0.0
        %2438 = vmatprep.subr.mxu0 0.0
        %2439 = vmatpush1.msra.mxu0 0.0
        %2440 = vmatprep.subr.mxu0 0.0
        %2441 = vmatpush1.msra.mxu0 0.0
        %2442 = vmatprep.subr.mxu0 0.0
        %2443 = vmatpush1.msra.mxu0 0.0
        %2444 = vmatprep.subr.mxu0 0.0
        %2445 = vmatpush1.msra.mxu0 0.0
        %2446 = vmatprep.subr.mxu0 0.0
        %2447 = vmatpush1.msra.mxu0 0.0
        %2448 = vmatprep.subr.mxu0 0.0
        %2449 = vmatpush1.msra.mxu0 0.0
        %2450 = vmatprep.subr.mxu0 0.0
        %2451 = vmatpush1.msra.mxu0 0.0
        %2452 = vmatprep.mubr.f32.mxu0 0.0
        %2453 = vmatmul.mubr.f32.gmra.mrb[0].mxu0 %v2386
        %v2454 = vpop.f32.mrb[0].mxu0
        %v2455 = vadd.f32 0.0, %v2454
        %v2456 = vpop.f32.mrb[0].mxu0
        %2457 = vdwg.mxu0
        %v2458 = vadd.f32 %v2376, %v2455
        %v2459 = vld [vmem:[%s882] sm:$0xff]
        %v2460 = vld [vmem:[%s882 + $0x8] sm:$0xff]
        %v2461 = vld [vmem:[%s13] sm:$0xff]
        %v2462 = vld [vmem:[%s13 + $0x8] sm:$0xff]
        %v2463 = vld [vmem:[%s13 + $0x10] sm:$0xff]
        %v2464 = vld [vmem:[%s13 + $0x18] sm:$0xff]
        %v2465 = vld [vmem:[%s13 + $0x20] sm:$0xff]
        %v2466 = vld [vmem:[%s13 + $0x28] sm:$0xff]
        %v2467 = vld [vmem:[%s13 + $0x30] sm:$0xff]
        %v2468 = vld [vmem:[%s13 + $0x38] sm:$0xff]
        %v2469 = vld [vmem:[%s13 + $0x40] sm:$0xff]
        %v2470 = vld [vmem:[%s13 + $0x48] sm:$0xff]
        %v2471 = vld [vmem:[%s13 + $0x50] sm:$0xff]
        %v2472 = vld [vmem:[%s13 + $0x58] sm:$0xff]
        %v2473 = vld [vmem:[%s13 + $0x60] sm:$0xff]
        %v2474 = vld [vmem:[%s13 + $0x68] sm:$0xff]
        %v2475 = vld [vmem:[%s13 + $0x70] sm:$0xff]
        %v2476 = vld [vmem:[%s13 + $0x78] sm:$0xff]
        %2477 = vmatprep.subr.mxu0 0.0
        %2478 = vmatpush1.msra.mxu0 %v2461
        %2479 = vmatprep.subr.mxu0 0.0
        %2480 = vmatpush1.msra.mxu0 %v2462
        %2481 = vmatprep.subr.mxu0 0.0
        %2482 = vmatpush1.msra.mxu0 %v2463
        %2483 = vmatprep.subr.mxu0 0.0
        %2484 = vmatpush1.msra.mxu0 %v2464
        %2485 = vmatprep.subr.mxu0 0.0
        %2486 = vmatpush1.msra.mxu0 %v2465
        %2487 = vmatprep.subr.mxu0 0.0
        %2488 = vmatpush1.msra.mxu0 %v2466
        %2489 = vmatprep.subr.mxu0 0.0
        %2490 = vmatpush1.msra.mxu0 %v2467
        %2491 = vmatprep.subr.mxu0 0.0
        %2492 = vmatpush1.msra.mxu0 %v2468
        %2493 = vmatprep.subr.mxu0 0.0
        %2494 = vmatpush1.msra.mxu0 %v2469
        %2495 = vmatprep.subr.mxu0 0.0
        %2496 = vmatpush1.msra.mxu0 %v2470
        %2497 = vmatprep.subr.mxu0 0.0
        %2498 = vmatpush1.msra.mxu0 %v2471
        %2499 = vmatprep.subr.mxu0 0.0
        %2500 = vmatpush1.msra.mxu0 %v2472
        %2501 = vmatprep.subr.mxu0 0.0
        %2502 = vmatpush1.msra.mxu0 %v2473
        %2503 = vmatprep.subr.mxu0 0.0
        %2504 = vmatpush1.msra.mxu0 %v2474
        %2505 = vmatprep.subr.mxu0 0.0
        %2506 = vmatpush1.msra.mxu0 %v2475
        %2507 = vmatprep.subr.mxu0 0.0
        %2508 = vmatpush1.msra.mxu0 %v2476
        %2509 = vmatprep.subr.mxu0 0.0
        %2510 = vmatpush1.msra.mxu0 0.0
        %2511 = vmatprep.subr.mxu0 0.0
        %2512 = vmatpush1.msra.mxu0 0.0
        %2513 = vmatprep.subr.mxu0 0.0
        %2514 = vmatpush1.msra.mxu0 0.0
        %2515 = vmatprep.subr.mxu0 0.0
        %2516 = vmatpush1.msra.mxu0 0.0
        %2517 = vmatprep.subr.mxu0 0.0
        %2518 = vmatpush1.msra.mxu0 0.0
        %2519 = vmatprep.subr.mxu0 0.0
        %2520 = vmatpush1.msra.mxu0 0.0
        %2521 = vmatprep.subr.mxu0 0.0
        %2522 = vmatpush1.msra.mxu0 0.0
        %2523 = vmatprep.subr.mxu0 0.0
        %2524 = vmatpush1.msra.mxu0 0.0
        %2525 = vmatprep.subr.mxu0 0.0
        %2526 = vmatpush1.msra.mxu0 0.0
        %2527 = vmatprep.subr.mxu0 0.0
        %2528 = vmatpush1.msra.mxu0 0.0
        %2529 = vmatprep.subr.mxu0 0.0
        %2530 = vmatpush1.msra.mxu0 0.0
        %2531 = vmatprep.subr.mxu0 0.0
        %2532 = vmatpush1.msra.mxu0 0.0
        %2533 = vmatprep.subr.mxu0 0.0
        %2534 = vmatpush1.msra.mxu0 0.0
        %2535 = vmatprep.subr.mxu0 0.0
        %2536 = vmatpush1.msra.mxu0 0.0
        %2537 = vmatprep.subr.mxu0 0.0
        %2538 = vmatpush1.msra.mxu0 0.0
        %2539 = vmatprep.subr.mxu0 0.0
        %2540 = vmatpush1.msra.mxu0 0.0
        %2541 = vmatprep.mubr.f32.mxu0 0.0
        %2542 = vmatmul.mubr.f32.gmra.mrb[0].mxu0 %v2459
        %v2543 = vpop.f32.mrb[0].mxu0
        %v2544 = vadd.f32 0.0, %v2543
        %v2545 = vpop.f32.mrb[0].mxu0
        %2546 = vmatprep.mubr.f32.mxu0 0.0
        %2547 = vmatmul.mubr.f32.gmra.mrb[0].mxu0 %v2460
        %v2548 = vpop.f32.mrb[0].mxu0
        %v2549 = vadd.f32 0.0, %v2548
        %v2550 = vpop.f32.mrb[0].mxu0
        %2551 = vdwg.mxu0
        %v2552 = vmax.f32 %v2544, 0.0
        %v2553 = vmax.f32 %v2549, 0.0
        %v2554 = vld [vmem:[%s14] sm:$0xff]
        %v2555 = vld [vmem:[%s14 + $0x8] sm:$0xff]
        %v2556 = vld [vmem:[%s882 + $0x10] sm:$0xff]
        %v2557 = vld [vmem:[%s882 + $0x18] sm:$0xff]
        %2558 = vmatprep.subr.mxu0 0.0
        %2559 = vmatpush1.msra.mxu0 %v2461
        %2560 = vmatprep.subr.mxu0 0.0
        %2561 = vmatpush1.msra.mxu0 %v2462
        %2562 = vmatprep.subr.mxu0 0.0
        %2563 = vmatpush1.msra.mxu0 %v2463
        %2564 = vmatprep.subr.mxu0 0.0
        %2565 = vmatpush1.msra.mxu0 %v2464
        %2566 = vmatprep.subr.mxu0 0.0
        %2567 = vmatpush1.msra.mxu0 %v2465
        %2568 = vmatprep.subr.mxu0 0.0
        %2569 = vmatpush1.msra.mxu0 %v2466
        %2570 = vmatprep.subr.mxu0 0.0
        %2571 = vmatpush1.msra.mxu0 %v2467
        %2572 = vmatprep.subr.mxu0 0.0
        %2573 = vmatpush1.msra.mxu0 %v2468
        %2574 = vmatprep.subr.mxu0 0.0
        %2575 = vmatpush1.msra.mxu0 %v2469
        %2576 = vmatprep.subr.mxu0 0.0
        %2577 = vmatpush1.msra.mxu0 %v2470
        %2578 = vmatprep.subr.mxu0 0.0
        %2579 = vmatpush1.msra.mxu0 %v2471
        %2580 = vmatprep.subr.mxu0 0.0
        %2581 = vmatpush1.msra.mxu0 %v2472
        %2582 = vmatprep.subr.mxu0 0.0
        %2583 = vmatpush1.msra.mxu0 %v2473
        %2584 = vmatprep.subr.mxu0 0.0
        %2585 = vmatpush1.msra.mxu0 %v2474
        %2586 = vmatprep.subr.mxu0 0.0
        %2587 = vmatpush1.msra.mxu0 %v2475
        %2588 = vmatprep.subr.mxu0 0.0
        %2589 = vmatpush1.msra.mxu0 %v2476
        %2590 = vmatprep.subr.mxu0 0.0
        %2591 = vmatpush1.msra.mxu0 0.0
        %2592 = vmatprep.subr.mxu0 0.0
        %2593 = vmatpush1.msra.mxu0 0.0
        %2594 = vmatprep.subr.mxu0 0.0
        %2595 = vmatpush1.msra.mxu0 0.0
        %2596 = vmatprep.subr.mxu0 0.0
        %2597 = vmatpush1.msra.mxu0 0.0
        %2598 = vmatprep.subr.mxu0 0.0
        %2599 = vmatpush1.msra.mxu0 0.0
        %2600 = vmatprep.subr.mxu0 0.0
        %2601 = vmatpush1.msra.mxu0 0.0
        %2602 = vmatprep.subr.mxu0 0.0
        %2603 = vmatpush1.msra.mxu0 0.0
        %2604 = vmatprep.subr.mxu0 0.0
        %2605 = vmatpush1.msra.mxu0 0.0
        %2606 = vmatprep.subr.mxu0 0.0
        %2607 = vmatpush1.msra.mxu0 0.0
        %2608 = vmatprep.subr.mxu0 0.0
        %2609 = vmatpush1.msra.mxu0 0.0
        %2610 = vmatprep.subr.mxu0 0.0
        %2611 = vmatpush1.msra.mxu0 0.0
        %2612 = vmatprep.subr.mxu0 0.0
        %2613 = vmatpush1.msra.mxu0 0.0
        %2614 = vmatprep.subr.mxu0 0.0
        %2615 = vmatpush1.msra.mxu0 0.0
        %2616 = vmatprep.subr.mxu0 0.0
        %2617 = vmatpush1.msra.mxu0 0.0
        %2618 = vmatprep.subr.mxu0 0.0
        %2619 = vmatpush1.msra.mxu0 0.0
        %2620 = vmatprep.subr.mxu0 0.0
        %2621 = vmatpush1.msra.mxu0 0.0
        %2622 = vmatprep.mubr.f32.mxu0 0.0
        %2623 = vmatmul.mubr.f32.gmra.mrb[0].mxu0 %v2556
        %v2624 = vpop.f32.mrb[0].mxu0
        %v2625 = vadd.f32 0.0, %v2624
        %v2626 = vpop.f32.mrb[0].mxu0
        %2627 = vmatprep.mubr.f32.mxu0 0.0
        %2628 = vmatmul.mubr.f32.gmra.mrb[0].mxu0 %v2557
        %v2629 = vpop.f32.mrb[0].mxu0
        %v2630 = vadd.f32 0.0, %v2629
        %v2631 = vpop.f32.mrb[0].mxu0
        %2632 = vdwg.mxu0
        %v2633 = vmax.f32 %v2625, 0.0
        %v2634 = vmax.f32 %v2630, 0.0
        %v2635 = vld [vmem:[%s14 + $0x10] sm:$0xff]
        %v2636 = vld [vmem:[%s14 + $0x18] sm:$0xff]
        %vm2637 = vcmask 130048
        %v2639 = vsel %vm2637, %v2633, 0
        %v2642 = vsel %vm2637, %v2634, 0
        %2644 = vmatprep.subr.mxu0 0.0
        %2645 = vmatpush1.msra.mxu0 %v2635
        %2646 = vmatprep.subr.mxu0 0.0
        %2647 = vmatpush1.msra.mxu0 %v2636
        %2648 = vmatprep.subr.mxu0 0.0
        %2649 = vmatpush1.msra.mxu0 0.0
        %2650 = vmatprep.subr.mxu0 0.0
        %2651 = vmatpush1.msra.mxu0 0.0
        %2652 = vmatprep.subr.mxu0 0.0
        %2653 = vmatpush1.msra.mxu0 0.0
        %2654 = vmatprep.subr.mxu0 0.0
        %2655 = vmatpush1.msra.mxu0 0.0
        %2656 = vmatprep.subr.mxu0 0.0
        %2657 = vmatpush1.msra.mxu0 0.0
        %2658 = vmatprep.subr.mxu0 0.0
        %2659 = vmatpush1.msra.mxu0 0.0
        %2660 = vmatprep.subr.mxu0 0.0
        %2661 = vmatpush1.msra.mxu0 0.0
        %2662 = vmatprep.subr.mxu0 0.0
        %2663 = vmatpush1.msra.mxu0 0.0
        %2664 = vmatprep.subr.mxu0 0.0
        %2665 = vmatpush1.msra.mxu0 0.0
        %2666 = vmatprep.subr.mxu0 0.0
        %2667 = vmatpush1.msra.mxu0 0.0
        %2668 = vmatprep.subr.mxu0 0.0
        %2669 = vmatpush1.msra.mxu0 0.0
        %2670 = vmatprep.subr.mxu0 0.0
        %2671 = vmatpush1.msra.mxu0 0.0
        %2672 = vmatprep.subr.mxu0 0.0
        %2673 = vmatpush1.msra.mxu0 0.0
        %2674 = vmatprep.subr.mxu0 0.0
        %2675 = vmatpush1.msra.mxu0 0.0
        %2676 = vmatprep.subr.mxu0 0.0
        %2677 = vmatpush1.msra.mxu0 0.0
        %2678 = vmatprep.subr.mxu0 0.0
        %2679 = vmatpush1.msra.mxu0 0.0
        %2680 = vmatprep.subr.mxu0 0.0
        %2681 = vmatpush1.msra.mxu0 0.0
        %2682 = vmatprep.subr.mxu0 0.0
        %2683 = vmatpush1.msra.mxu0 0.0
        %2684 = vmatprep.subr.mxu0 0.0
        %2685 = vmatpush1.msra.mxu0 0.0
        %2686 = vmatprep.subr.mxu0 0.0
        %2687 = vmatpush1.msra.mxu0 0.0
        %2688 = vmatprep.subr.mxu0 0.0
        %2689 = vmatpush1.msra.mxu0 0.0
        %2690 = vmatprep.subr.mxu0 0.0
        %2691 = vmatpush1.msra.mxu0 0.0
        %2692 = vmatprep.subr.mxu0 0.0
        %2693 = vmatpush1.msra.mxu0 0.0
        %2694 = vmatprep.subr.mxu0 0.0
        %2695 = vmatpush1.msra.mxu0 0.0
        %2696 = vmatprep.subr.mxu0 0.0
        %2697 = vmatpush1.msra.mxu0 0.0
        %2698 = vmatprep.subr.mxu0 0.0
        %2699 = vmatpush1.msra.mxu0 0.0
        %2700 = vmatprep.subr.mxu0 0.0
        %2701 = vmatpush1.msra.mxu0 0.0
        %2702 = vmatprep.subr.mxu0 0.0
        %2703 = vmatpush1.msra.mxu0 0.0
        %2704 = vmatprep.subr.mxu0 0.0
        %2705 = vmatpush1.msra.mxu0 0.0
        %2706 = vmatprep.subr.mxu0 0.0
        %2707 = vmatpush1.msra.mxu0 0.0
        %2708 = vmatprep.mubr.f32.mxu0 0.0
        %2709 = vmatmul.mubr.f32.gmra.mrb[0].mxu0 %v2639
        %v2710 = vpop.f32.mrb[0].mxu0
        %v2711 = vadd.f32 0.0, %v2710
        %v2712 = vpop.f32.mrb[0].mxu0
        %2713 = vmatprep.mubr.f32.mxu0 0.0
        %2714 = vmatmul.mubr.f32.gmra.mrb[0].mxu0 %v2642
        %v2715 = vpop.f32.mrb[0].mxu0
        %v2716 = vadd.f32 0.0, %v2715
        %v2717 = vpop.f32.mrb[0].mxu0
        %2718 = vdwg.mxu0
        %v2720 = vsel %vm2637, %v2552, 0
        %v2723 = vsel %vm2637, %v2553, 0
        %2725 = vmatprep.subr.mxu0 0.0
        %2726 = vmatpush1.msra.mxu0 %v2554
        %2727 = vmatprep.subr.mxu0 0.0
        %2728 = vmatpush1.msra.mxu0 %v2555
        %2729 = vmatprep.subr.mxu0 0.0
        %2730 = vmatpush1.msra.mxu0 0.0
        %2731 = vmatprep.subr.mxu0 0.0
        %2732 = vmatpush1.msra.mxu0 0.0
        %2733 = vmatprep.subr.mxu0 0.0
        %2734 = vmatpush1.msra.mxu0 0.0
        %2735 = vmatprep.subr.mxu0 0.0
        %2736 = vmatpush1.msra.mxu0 0.0
        %2737 = vmatprep.subr.mxu0 0.0
        %2738 = vmatpush1.msra.mxu0 0.0
        %2739 = vmatprep.subr.mxu0 0.0
        %2740 = vmatpush1.msra.mxu0 0.0
        %2741 = vmatprep.subr.mxu0 0.0
        %2742 = vmatpush1.msra.mxu0 0.0
        %2743 = vmatprep.subr.mxu0 0.0
        %2744 = vmatpush1.msra.mxu0 0.0
        %2745 = vmatprep.subr.mxu0 0.0
        %2746 = vmatpush1.msra.mxu0 0.0
        %2747 = vmatprep.subr.mxu0 0.0
        %2748 = vmatpush1.msra.mxu0 0.0
        %2749 = vmatprep.subr.mxu0 0.0
        %2750 = vmatpush1.msra.mxu0 0.0
        %2751 = vmatprep.subr.mxu0 0.0
        %2752 = vmatpush1.msra.mxu0 0.0
        %2753 = vmatprep.subr.mxu0 0.0
        %2754 = vmatpush1.msra.mxu0 0.0
        %2755 = vmatprep.subr.mxu0 0.0
        %2756 = vmatpush1.msra.mxu0 0.0
        %2757 = vmatprep.subr.mxu0 0.0
        %2758 = vmatpush1.msra.mxu0 0.0
        %2759 = vmatprep.subr.mxu0 0.0
        %2760 = vmatpush1.msra.mxu0 0.0
        %2761 = vmatprep.subr.mxu0 0.0
        %2762 = vmatpush1.msra.mxu0 0.0
        %2763 = vmatprep.subr.mxu0 0.0
        %2764 = vmatpush1.msra.mxu0 0.0
        %2765 = vmatprep.subr.mxu0 0.0
        %2766 = vmatpush1.msra.mxu0 0.0
        %2767 = vmatprep.subr.mxu0 0.0
        %2768 = vmatpush1.msra.mxu0 0.0
        %2769 = vmatprep.subr.mxu0 0.0
        %2770 = vmatpush1.msra.mxu0 0.0
        %2771 = vmatprep.subr.mxu0 0.0
        %2772 = vmatpush1.msra.mxu0 0.0
        %2773 = vmatprep.subr.mxu0 0.0
        %2774 = vmatpush1.msra.mxu0 0.0
        %2775 = vmatprep.subr.mxu0 0.0
        %2776 = vmatpush1.msra.mxu0 0.0
        %2777 = vmatprep.subr.mxu0 0.0
        %2778 = vmatpush1.msra.mxu0 0.0
        %2779 = vmatprep.subr.mxu0 0.0
        %2780 = vmatpush1.msra.mxu0 0.0
        %2781 = vmatprep.subr.mxu0 0.0
        %2782 = vmatpush1.msra.mxu0 0.0
        %2783 = vmatprep.subr.mxu0 0.0
        %2784 = vmatpush1.msra.mxu0 0.0
        %2785 = vmatprep.subr.mxu0 0.0
        %2786 = vmatpush1.msra.mxu0 0.0
        %2787 = vmatprep.subr.mxu0 0.0
        %2788 = vmatpush1.msra.mxu0 0.0
        %2789 = vmatprep.mubr.f32.mxu0 0.0
        %2790 = vmatmul.mubr.f32.gmra.mrb[0].mxu0 %v2720
        %v2791 = vpop.f32.mrb[0].mxu0
        %v2792 = vadd.f32 %v2711, %v2791
        %v2793 = vpop.f32.mrb[0].mxu0
        %2794 = vmatprep.mubr.f32.mxu0 0.0
        %2795 = vmatmul.mubr.f32.gmra.mrb[0].mxu0 %v2723
        %v2796 = vpop.f32.mrb[0].mxu0
        %v2797 = vadd.f32 %v2716, %v2796
        %v2798 = vpop.f32.mrb[0].mxu0
        %2799 = vdwg.mxu0
        %v2800 = vld [vmem:[%s882 + $0x20] sm:$0xff]
        %v2801 = vld [vmem:[%s882 + $0x28] sm:$0xff]
        %2802 = vmatprep.subr.mxu0 0.0
        %2803 = vmatpush1.msra.mxu0 %v2461
        %2804 = vmatprep.subr.mxu0 0.0
        %2805 = vmatpush1.msra.mxu0 %v2462
        %2806 = vmatprep.subr.mxu0 0.0
        %2807 = vmatpush1.msra.mxu0 %v2463
        %2808 = vmatprep.subr.mxu0 0.0
        %2809 = vmatpush1.msra.mxu0 %v2464
        %2810 = vmatprep.subr.mxu0 0.0
        %2811 = vmatpush1.msra.mxu0 %v2465
        %2812 = vmatprep.subr.mxu0 0.0
        %2813 = vmatpush1.msra.mxu0 %v2466
        %2814 = vmatprep.subr.mxu0 0.0
        %2815 = vmatpush1.msra.mxu0 %v2467
        %2816 = vmatprep.subr.mxu0 0.0
        %2817 = vmatpush1.msra.mxu0 %v2468
        %2818 = vmatprep.subr.mxu0 0.0
        %2819 = vmatpush1.msra.mxu0 %v2469
        %2820 = vmatprep.subr.mxu0 0.0
        %2821 = vmatpush1.msra.mxu0 %v2470
        %2822 = vmatprep.subr.mxu0 0.0
        %2823 = vmatpush1.msra.mxu0 %v2471
        %2824 = vmatprep.subr.mxu0 0.0
        %2825 = vmatpush1.msra.mxu0 %v2472
        %2826 = vmatprep.subr.mxu0 0.0
        %2827 = vmatpush1.msra.mxu0 %v2473
        %2828 = vmatprep.subr.mxu0 0.0
        %2829 = vmatpush1.msra.mxu0 %v2474
        %2830 = vmatprep.subr.mxu0 0.0
        %2831 = vmatpush1.msra.mxu0 %v2475
        %2832 = vmatprep.subr.mxu0 0.0
        %2833 = vmatpush1.msra.mxu0 %v2476
        %2834 = vmatprep.subr.mxu0 0.0
        %2835 = vmatpush1.msra.mxu0 0.0
        %2836 = vmatprep.subr.mxu0 0.0
        %2837 = vmatpush1.msra.mxu0 0.0
        %2838 = vmatprep.subr.mxu0 0.0
        %2839 = vmatpush1.msra.mxu0 0.0
        %2840 = vmatprep.subr.mxu0 0.0
        %2841 = vmatpush1.msra.mxu0 0.0
        %2842 = vmatprep.subr.mxu0 0.0
        %2843 = vmatpush1.msra.mxu0 0.0
        %2844 = vmatprep.subr.mxu0 0.0
        %2845 = vmatpush1.msra.mxu0 0.0
        %2846 = vmatprep.subr.mxu0 0.0
        %2847 = vmatpush1.msra.mxu0 0.0
        %2848 = vmatprep.subr.mxu0 0.0
        %2849 = vmatpush1.msra.mxu0 0.0
        %2850 = vmatprep.subr.mxu0 0.0
        %2851 = vmatpush1.msra.mxu0 0.0
        %2852 = vmatprep.subr.mxu0 0.0
        %2853 = vmatpush1.msra.mxu0 0.0
        %2854 = vmatprep.subr.mxu0 0.0
        %2855 = vmatpush1.msra.mxu0 0.0
        %2856 = vmatprep.subr.mxu0 0.0
        %2857 = vmatpush1.msra.mxu0 0.0
        %2858 = vmatprep.subr.mxu0 0.0
        %2859 = vmatpush1.msra.mxu0 0.0
        %2860 = vmatprep.subr.mxu0 0.0
        %2861 = vmatpush1.msra.mxu0 0.0
        %2862 = vmatprep.subr.mxu0 0.0
        %2863 = vmatpush1.msra.mxu0 0.0
        %2864 = vmatprep.subr.mxu0 0.0
        %2865 = vmatpush1.msra.mxu0 0.0
        %2866 = vmatprep.mubr.f32.mxu0 0.0
        %2867 = vmatmul.mubr.f32.gmra.mrb[0].mxu0 %v2800
        %v2868 = vpop.f32.mrb[0].mxu0
        %v2869 = vadd.f32 0.0, %v2868
        %v2870 = vpop.f32.mrb[0].mxu0
        %2871 = vmatprep.mubr.f32.mxu0 0.0
        %2872 = vmatmul.mubr.f32.gmra.mrb[0].mxu0 %v2801
        %v2873 = vpop.f32.mrb[0].mxu0
        %v2874 = vadd.f32 0.0, %v2873
        %v2875 = vpop.f32.mrb[0].mxu0
        %2876 = vdwg.mxu0
        %v2877 = vmax.f32 %v2869, 0.0
        %v2878 = vmax.f32 %v2874, 0.0
        %v2879 = vld [vmem:[%s14 + $0x20] sm:$0xff]
        %v2880 = vld [vmem:[%s14 + $0x28] sm:$0xff]
        %v2882 = vsel %vm2637, %v2877, 0
        %v2885 = vsel %vm2637, %v2878, 0
        %2887 = vmatprep.subr.mxu0 0.0
        %2888 = vmatpush1.msra.mxu0 %v2879
        %2889 = vmatprep.subr.mxu0 0.0
        %2890 = vmatpush1.msra.mxu0 %v2880
        %2891 = vmatprep.subr.mxu0 0.0
        %2892 = vmatpush1.msra.mxu0 0.0
        %2893 = vmatprep.subr.mxu0 0.0
        %2894 = vmatpush1.msra.mxu0 0.0
        %2895 = vmatprep.subr.mxu0 0.0
        %2896 = vmatpush1.msra.mxu0 0.0
        %2897 = vmatprep.subr.mxu0 0.0
        %2898 = vmatpush1.msra.mxu0 0.0
        %2899 = vmatprep.subr.mxu0 0.0
        %2900 = vmatpush1.msra.mxu0 0.0
        %2901 = vmatprep.subr.mxu0 0.0
        %2902 = vmatpush1.msra.mxu0 0.0
        %2903 = vmatprep.subr.mxu0 0.0
        %2904 = vmatpush1.msra.mxu0 0.0
        %2905 = vmatprep.subr.mxu0 0.0
        %2906 = vmatpush1.msra.mxu0 0.0
        %2907 = vmatprep.subr.mxu0 0.0
        %2908 = vmatpush1.msra.mxu0 0.0
        %2909 = vmatprep.subr.mxu0 0.0
        %2910 = vmatpush1.msra.mxu0 0.0
        %2911 = vmatprep.subr.mxu0 0.0
        %2912 = vmatpush1.msra.mxu0 0.0
        %2913 = vmatprep.subr.mxu0 0.0
        %2914 = vmatpush1.msra.mxu0 0.0
        %2915 = vmatprep.subr.mxu0 0.0
        %2916 = vmatpush1.msra.mxu0 0.0
        %2917 = vmatprep.subr.mxu0 0.0
        %2918 = vmatpush1.msra.mxu0 0.0
        %2919 = vmatprep.subr.mxu0 0.0
        %2920 = vmatpush1.msra.mxu0 0.0
        %2921 = vmatprep.subr.mxu0 0.0
        %2922 = vmatpush1.msra.mxu0 0.0
        %2923 = vmatprep.subr.mxu0 0.0
        %2924 = vmatpush1.msra.mxu0 0.0
        %2925 = vmatprep.subr.mxu0 0.0
        %2926 = vmatpush1.msra.mxu0 0.0
        %2927 = vmatprep.subr.mxu0 0.0
        %2928 = vmatpush1.msra.mxu0 0.0
        %2929 = vmatprep.subr.mxu0 0.0
        %2930 = vmatpush1.msra.mxu0 0.0
        %2931 = vmatprep.subr.mxu0 0.0
        %2932 = vmatpush1.msra.mxu0 0.0
        %2933 = vmatprep.subr.mxu0 0.0
        %2934 = vmatpush1.msra.mxu0 0.0
        %2935 = vmatprep.subr.mxu0 0.0
        %2936 = vmatpush1.msra.mxu0 0.0
        %2937 = vmatprep.subr.mxu0 0.0
        %2938 = vmatpush1.msra.mxu0 0.0
        %2939 = vmatprep.subr.mxu0 0.0
        %2940 = vmatpush1.msra.mxu0 0.0
        %2941 = vmatprep.subr.mxu0 0.0
        %2942 = vmatpush1.msra.mxu0 0.0
        %2943 = vmatprep.subr.mxu0 0.0
        %2944 = vmatpush1.msra.mxu0 0.0
        %2945 = vmatprep.subr.mxu0 0.0
        %2946 = vmatpush1.msra.mxu0 0.0
        %2947 = vmatprep.subr.mxu0 0.0
        %2948 = vmatpush1.msra.mxu0 0.0
        %2949 = vmatprep.subr.mxu0 0.0
        %2950 = vmatpush1.msra.mxu0 0.0
        %2951 = vmatprep.mubr.f32.mxu0 0.0
        %2952 = vmatmul.mubr.f32.gmra.mrb[0].mxu0 %v2882
        %v2953 = vpop.f32.mrb[0].mxu0
        %v2954 = vadd.f32 0.0, %v2953
        %v2955 = vpop.f32.mrb[0].mxu0
        %2956 = vmatprep.mubr.f32.mxu0 0.0
        %2957 = vmatmul.mubr.f32.gmra.mrb[0].mxu0 %v2885
        %v2958 = vpop.f32.mrb[0].mxu0
        %v2959 = vadd.f32 0.0, %v2958
        %v2960 = vpop.f32.mrb[0].mxu0
        %2961 = vdwg.mxu0
        %v2962 = vadd.f32 %v2792, %v2954
        %v2963 = vadd.f32 %v2797, %v2959
        %v2964 = vld [vmem:[%s882 + $0x30] sm:$0xff]
        %v2965 = vld [vmem:[%s882 + $0x38] sm:$0xff]
        %2966 = vmatprep.subr.mxu0 0.0
        %2967 = vmatpush1.msra.mxu0 %v2461
        %2968 = vmatprep.subr.mxu0 0.0
        %2969 = vmatpush1.msra.mxu0 %v2462
        %2970 = vmatprep.subr.mxu0 0.0
        %2971 = vmatpush1.msra.mxu0 %v2463
        %2972 = vmatprep.subr.mxu0 0.0
        %2973 = vmatpush1.msra.mxu0 %v2464
        %2974 = vmatprep.subr.mxu0 0.0
        %2975 = vmatpush1.msra.mxu0 %v2465
        %2976 = vmatprep.subr.mxu0 0.0
        %2977 = vmatpush1.msra.mxu0 %v2466
        %2978 = vmatprep.subr.mxu0 0.0
        %2979 = vmatpush1.msra.mxu0 %v2467
        %2980 = vmatprep.subr.mxu0 0.0
        %2981 = vmatpush1.msra.mxu0 %v2468
        %2982 = vmatprep.subr.mxu0 0.0
        %2983 = vmatpush1.msra.mxu0 %v2469
        %2984 = vmatprep.subr.mxu0 0.0
        %2985 = vmatpush1.msra.mxu0 %v2470
        %2986 = vmatprep.subr.mxu0 0.0
        %2987 = vmatpush1.msra.mxu0 %v2471
        %2988 = vmatprep.subr.mxu0 0.0
        %2989 = vmatpush1.msra.mxu0 %v2472
        %2990 = vmatprep.subr.mxu0 0.0
        %2991 = vmatpush1.msra.mxu0 %v2473
        %2992 = vmatprep.subr.mxu0 0.0
        %2993 = vmatpush1.msra.mxu0 %v2474
        %2994 = vmatprep.subr.mxu0 0.0
        %2995 = vmatpush1.msra.mxu0 %v2475
        %2996 = vmatprep.subr.mxu0 0.0
        %2997 = vmatpush1.msra.mxu0 %v2476
        %2998 = vmatprep.subr.mxu0 0.0
        %2999 = vmatpush1.msra.mxu0 0.0
        %3000 = vmatprep.subr.mxu0 0.0
        %3001 = vmatpush1.msra.mxu0 0.0
        %3002 = vmatprep.subr.mxu0 0.0
        %3003 = vmatpush1.msra.mxu0 0.0
        %3004 = vmatprep.subr.mxu0 0.0
        %3005 = vmatpush1.msra.mxu0 0.0
        %3006 = vmatprep.subr.mxu0 0.0
        %3007 = vmatpush1.msra.mxu0 0.0
        %3008 = vmatprep.subr.mxu0 0.0
        %3009 = vmatpush1.msra.mxu0 0.0
        %3010 = vmatprep.subr.mxu0 0.0
        %3011 = vmatpush1.msra.mxu0 0.0
        %3012 = vmatprep.subr.mxu0 0.0
        %3013 = vmatpush1.msra.mxu0 0.0
        %3014 = vmatprep.subr.mxu0 0.0
        %3015 = vmatpush1.msra.mxu0 0.0
        %3016 = vmatprep.subr.mxu0 0.0
        %3017 = vmatpush1.msra.mxu0 0.0
        %3018 = vmatprep.subr.mxu0 0.0
        %3019 = vmatpush1.msra.mxu0 0.0
        %3020 = vmatprep.subr.mxu0 0.0
        %3021 = vmatpush1.msra.mxu0 0.0
        %3022 = vmatprep.subr.mxu0 0.0
        %3023 = vmatpush1.msra.mxu0 0.0
        %3024 = vmatprep.subr.mxu0 0.0
        %3025 = vmatpush1.msra.mxu0 0.0
        %3026 = vmatprep.subr.mxu0 0.0
        %3027 = vmatpush1.msra.mxu0 0.0
        %3028 = vmatprep.subr.mxu0 0.0
        %3029 = vmatpush1.msra.mxu0 0.0
        %3030 = vmatprep.mubr.f32.mxu0 0.0
        %3031 = vmatmul.mubr.f32.gmra.mrb[0].mxu0 %v2964
        %v3032 = vpop.f32.mrb[0].mxu0
        %v3033 = vadd.f32 0.0, %v3032
        %v3034 = vpop.f32.mrb[0].mxu0
        %3035 = vmatprep.mubr.f32.mxu0 0.0
        %3036 = vmatmul.mubr.f32.gmra.mrb[0].mxu0 %v2965
        %v3037 = vpop.f32.mrb[0].mxu0
        %v3038 = vadd.f32 0.0, %v3037
        %v3039 = vpop.f32.mrb[0].mxu0
        %3040 = vdwg.mxu0
        %v3041 = vmax.f32 %v3033, 0.0
        %v3042 = vmax.f32 %v3038, 0.0
        %v3043 = vld [vmem:[%s14 + $0x30] sm:$0xff]
        %v3044 = vld [vmem:[%s14 + $0x38] sm:$0xff]
        %v3046 = vsel %vm2637, %v3041, 0
        %v3049 = vsel %vm2637, %v3042, 0
        %3051 = vmatprep.subr.mxu0 0.0
        %3052 = vmatpush1.msra.mxu0 %v3043
        %3053 = vmatprep.subr.mxu0 0.0
        %3054 = vmatpush1.msra.mxu0 %v3044
        %3055 = vmatprep.subr.mxu0 0.0
        %3056 = vmatpush1.msra.mxu0 0.0
        %3057 = vmatprep.subr.mxu0 0.0
        %3058 = vmatpush1.msra.mxu0 0.0
        %3059 = vmatprep.subr.mxu0 0.0
        %3060 = vmatpush1.msra.mxu0 0.0
        %3061 = vmatprep.subr.mxu0 0.0
        %3062 = vmatpush1.msra.mxu0 0.0
        %3063 = vmatprep.subr.mxu0 0.0
        %3064 = vmatpush1.msra.mxu0 0.0
        %3065 = vmatprep.subr.mxu0 0.0
        %3066 = vmatpush1.msra.mxu0 0.0
        %3067 = vmatprep.subr.mxu0 0.0
        %3068 = vmatpush1.msra.mxu0 0.0
        %3069 = vmatprep.subr.mxu0 0.0
        %3070 = vmatpush1.msra.mxu0 0.0
        %3071 = vmatprep.subr.mxu0 0.0
        %3072 = vmatpush1.msra.mxu0 0.0
        %3073 = vmatprep.subr.mxu0 0.0
        %3074 = vmatpush1.msra.mxu0 0.0
        %3075 = vmatprep.subr.mxu0 0.0
        %3076 = vmatpush1.msra.mxu0 0.0
        %3077 = vmatprep.subr.mxu0 0.0
        %3078 = vmatpush1.msra.mxu0 0.0
        %3079 = vmatprep.subr.mxu0 0.0
        %3080 = vmatpush1.msra.mxu0 0.0
        %3081 = vmatprep.subr.mxu0 0.0
        %3082 = vmatpush1.msra.mxu0 0.0
        %3083 = vmatprep.subr.mxu0 0.0
        %3084 = vmatpush1.msra.mxu0 0.0
        %3085 = vmatprep.subr.mxu0 0.0
        %3086 = vmatpush1.msra.mxu0 0.0
        %3087 = vmatprep.subr.mxu0 0.0
        %3088 = vmatpush1.msra.mxu0 0.0
        %3089 = vmatprep.subr.mxu0 0.0
        %3090 = vmatpush1.msra.mxu0 0.0
        %3091 = vmatprep.subr.mxu0 0.0
        %3092 = vmatpush1.msra.mxu0 0.0
        %3093 = vmatprep.subr.mxu0 0.0
        %3094 = vmatpush1.msra.mxu0 0.0
        %3095 = vmatprep.subr.mxu0 0.0
        %3096 = vmatpush1.msra.mxu0 0.0
        %3097 = vmatprep.subr.mxu0 0.0
        %3098 = vmatpush1.msra.mxu0 0.0
        %3099 = vmatprep.subr.mxu0 0.0
        %3100 = vmatpush1.msra.mxu0 0.0
        %3101 = vmatprep.subr.mxu0 0.0
        %3102 = vmatpush1.msra.mxu0 0.0
        %3103 = vmatprep.subr.mxu0 0.0
        %3104 = vmatpush1.msra.mxu0 0.0
        %3105 = vmatprep.subr.mxu0 0.0
        %3106 = vmatpush1.msra.mxu0 0.0
        %3107 = vmatprep.subr.mxu0 0.0
        %3108 = vmatpush1.msra.mxu0 0.0
        %3109 = vmatprep.subr.mxu0 0.0
        %3110 = vmatpush1.msra.mxu0 0.0
        %3111 = vmatprep.subr.mxu0 0.0
        %3112 = vmatpush1.msra.mxu0 0.0
        %3113 = vmatprep.subr.mxu0 0.0
        %3114 = vmatpush1.msra.mxu0 0.0
        %3115 = vmatprep.mubr.f32.mxu0 0.0
        %3116 = vmatmul.mubr.f32.gmra.mrb[0].mxu0 %v3046
        %v3117 = vpop.f32.mrb[0].mxu0
        %v3118 = vadd.f32 0.0, %v3117
        %v3119 = vpop.f32.mrb[0].mxu0
        %3120 = vmatprep.mubr.f32.mxu0 0.0
        %3121 = vmatmul.mubr.f32.gmra.mrb[0].mxu0 %v3049
        %v3122 = vpop.f32.mrb[0].mxu0
        %v3123 = vadd.f32 0.0, %v3122
        %v3124 = vpop.f32.mrb[0].mxu0
        %3125 = vdwg.mxu0
        %v3126 = vadd.f32 %v2962, %v3118
        %v3127 = vadd.f32 %v2963, %v3123
        %v3128 = vld [vmem:[%s882 + $0x40] sm:$0xff]
        %v3129 = vld [vmem:[%s882 + $0x48] sm:$0xff]
        %3130 = vmatprep.subr.mxu0 0.0
        %3131 = vmatpush1.msra.mxu0 %v2461
        %3132 = vmatprep.subr.mxu0 0.0
        %3133 = vmatpush1.msra.mxu0 %v2462
        %3134 = vmatprep.subr.mxu0 0.0
        %3135 = vmatpush1.msra.mxu0 %v2463
        %3136 = vmatprep.subr.mxu0 0.0
        %3137 = vmatpush1.msra.mxu0 %v2464
        %3138 = vmatprep.subr.mxu0 0.0
        %3139 = vmatpush1.msra.mxu0 %v2465
        %3140 = vmatprep.subr.mxu0 0.0
        %3141 = vmatpush1.msra.mxu0 %v2466
        %3142 = vmatprep.subr.mxu0 0.0
        %3143 = vmatpush1.msra.mxu0 %v2467
        %3144 = vmatprep.subr.mxu0 0.0
        %3145 = vmatpush1.msra.mxu0 %v2468
        %3146 = vmatprep.subr.mxu0 0.0
        %3147 = vmatpush1.msra.mxu0 %v2469
        %3148 = vmatprep.subr.mxu0 0.0
        %3149 = vmatpush1.msra.mxu0 %v2470
        %3150 = vmatprep.subr.mxu0 0.0
        %3151 = vmatpush1.msra.mxu0 %v2471
        %3152 = vmatprep.subr.mxu0 0.0
        %3153 = vmatpush1.msra.mxu0 %v2472
        %3154 = vmatprep.subr.mxu0 0.0
        %3155 = vmatpush1.msra.mxu0 %v2473
        %3156 = vmatprep.subr.mxu0 0.0
        %3157 = vmatpush1.msra.mxu0 %v2474
        %3158 = vmatprep.subr.mxu0 0.0
        %3159 = vmatpush1.msra.mxu0 %v2475
        %3160 = vmatprep.subr.mxu0 0.0
        %3161 = vmatpush1.msra.mxu0 %v2476
        %3162 = vmatprep.subr.mxu0 0.0
        %3163 = vmatpush1.msra.mxu0 0.0
        %3164 = vmatprep.subr.mxu0 0.0
        %3165 = vmatpush1.msra.mxu0 0.0
        %3166 = vmatprep.subr.mxu0 0.0
        %3167 = vmatpush1.msra.mxu0 0.0
        %3168 = vmatprep.subr.mxu0 0.0
        %3169 = vmatpush1.msra.mxu0 0.0
        %3170 = vmatprep.subr.mxu0 0.0
        %3171 = vmatpush1.msra.mxu0 0.0
        %3172 = vmatprep.subr.mxu0 0.0
        %3173 = vmatpush1.msra.mxu0 0.0
        %3174 = vmatprep.subr.mxu0 0.0
        %3175 = vmatpush1.msra.mxu0 0.0
        %3176 = vmatprep.subr.mxu0 0.0
        %3177 = vmatpush1.msra.mxu0 0.0
        %3178 = vmatprep.subr.mxu0 0.0
        %3179 = vmatpush1.msra.mxu0 0.0
        %3180 = vmatprep.subr.mxu0 0.0
        %3181 = vmatpush1.msra.mxu0 0.0
        %3182 = vmatprep.subr.mxu0 0.0
        %3183 = vmatpush1.msra.mxu0 0.0
        %3184 = vmatprep.subr.mxu0 0.0
        %3185 = vmatpush1.msra.mxu0 0.0
        %3186 = vmatprep.subr.mxu0 0.0
        %3187 = vmatpush1.msra.mxu0 0.0
        %3188 = vmatprep.subr.mxu0 0.0
        %3189 = vmatpush1.msra.mxu0 0.0
        %3190 = vmatprep.subr.mxu0 0.0
        %3191 = vmatpush1.msra.mxu0 0.0
        %3192 = vmatprep.subr.mxu0 0.0
        %3193 = vmatpush1.msra.mxu0 0.0
        %3194 = vmatprep.mubr.f32.mxu0 0.0
        %3195 = vmatmul.mubr.f32.gmra.mrb[0].mxu0 %v3128
        %v3196 = vpop.f32.mrb[0].mxu0
        %v3197 = vadd.f32 0.0, %v3196
        %v3198 = vpop.f32.mrb[0].mxu0
        %3199 = vmatprep.mubr.f32.mxu0 0.0
        %3200 = vmatmul.mubr.f32.gmra.mrb[0].mxu0 %v3129
        %v3201 = vpop.f32.mrb[0].mxu0
        %v3202 = vadd.f32 0.0, %v3201
        %v3203 = vpop.f32.mrb[0].mxu0
        %3204 = vdwg.mxu0
        %v3205 = vmax.f32 %v3197, 0.0
        %v3206 = vmax.f32 %v3202, 0.0
        %v3207 = vld [vmem:[%s14 + $0x40] sm:$0xff]
        %v3208 = vld [vmem:[%s14 + $0x48] sm:$0xff]
        %v3210 = vsel %vm2637, %v3205, 0
        %v3213 = vsel %vm2637, %v3206, 0
        %3215 = vmatprep.subr.mxu0 0.0
        %3216 = vmatpush1.msra.mxu0 %v3207
        %3217 = vmatprep.subr.mxu0 0.0
        %3218 = vmatpush1.msra.mxu0 %v3208
        %3219 = vmatprep.subr.mxu0 0.0
        %3220 = vmatpush1.msra.mxu0 0.0
        %3221 = vmatprep.subr.mxu0 0.0
        %3222 = vmatpush1.msra.mxu0 0.0
        %3223 = vmatprep.subr.mxu0 0.0
        %3224 = vmatpush1.msra.mxu0 0.0
        %3225 = vmatprep.subr.mxu0 0.0
        %3226 = vmatpush1.msra.mxu0 0.0
        %3227 = vmatprep.subr.mxu0 0.0
        %3228 = vmatpush1.msra.mxu0 0.0
        %3229 = vmatprep.subr.mxu0 0.0
        %3230 = vmatpush1.msra.mxu0 0.0
        %3231 = vmatprep.subr.mxu0 0.0
        %3232 = vmatpush1.msra.mxu0 0.0
        %3233 = vmatprep.subr.mxu0 0.0
        %3234 = vmatpush1.msra.mxu0 0.0
        %3235 = vmatprep.subr.mxu0 0.0
        %3236 = vmatpush1.msra.mxu0 0.0
        %3237 = vmatprep.subr.mxu0 0.0
        %3238 = vmatpush1.msra.mxu0 0.0
        %3239 = vmatprep.subr.mxu0 0.0
        %3240 = vmatpush1.msra.mxu0 0.0
        %3241 = vmatprep.subr.mxu0 0.0
        %3242 = vmatpush1.msra.mxu0 0.0
        %3243 = vmatprep.subr.mxu0 0.0
        %3244 = vmatpush1.msra.mxu0 0.0
        %3245 = vmatprep.subr.mxu0 0.0
        %3246 = vmatpush1.msra.mxu0 0.0
        %3247 = vmatprep.subr.mxu0 0.0
        %3248 = vmatpush1.msra.mxu0 0.0
        %3249 = vmatprep.subr.mxu0 0.0
        %3250 = vmatpush1.msra.mxu0 0.0
        %3251 = vmatprep.subr.mxu0 0.0
        %3252 = vmatpush1.msra.mxu0 0.0
        %3253 = vmatprep.subr.mxu0 0.0
        %3254 = vmatpush1.msra.mxu0 0.0
        %3255 = vmatprep.subr.mxu0 0.0
        %3256 = vmatpush1.msra.mxu0 0.0
        %3257 = vmatprep.subr.mxu0 0.0
        %3258 = vmatpush1.msra.mxu0 0.0
        %3259 = vmatprep.subr.mxu0 0.0
        %3260 = vmatpush1.msra.mxu0 0.0
        %3261 = vmatprep.subr.mxu0 0.0
        %3262 = vmatpush1.msra.mxu0 0.0
        %3263 = vmatprep.subr.mxu0 0.0
        %3264 = vmatpush1.msra.mxu0 0.0
        %3265 = vmatprep.subr.mxu0 0.0
        %3266 = vmatpush1.msra.mxu0 0.0
        %3267 = vmatprep.subr.mxu0 0.0
        %3268 = vmatpush1.msra.mxu0 0.0
        %3269 = vmatprep.subr.mxu0 0.0
        %3270 = vmatpush1.msra.mxu0 0.0
        %3271 = vmatprep.subr.mxu0 0.0
        %3272 = vmatpush1.msra.mxu0 0.0
        %3273 = vmatprep.subr.mxu0 0.0
        %3274 = vmatpush1.msra.mxu0 0.0
        %3275 = vmatprep.subr.mxu0 0.0
        %3276 = vmatpush1.msra.mxu0 0.0
        %3277 = vmatprep.subr.mxu0 0.0
        %3278 = vmatpush1.msra.mxu0 0.0
        %3279 = vmatprep.mubr.f32.mxu0 0.0
        %3280 = vmatmul.mubr.f32.gmra.mrb[0].mxu0 %v3210
        %v3281 = vpop.f32.mrb[0].mxu0
        %v3282 = vadd.f32 0.0, %v3281
        %v3283 = vpop.f32.mrb[0].mxu0
        %3284 = vmatprep.mubr.f32.mxu0 0.0
        %3285 = vmatmul.mubr.f32.gmra.mrb[0].mxu0 %v3213
        %v3286 = vpop.f32.mrb[0].mxu0
        %v3287 = vadd.f32 0.0, %v3286
        %v3288 = vpop.f32.mrb[0].mxu0
        %3289 = vdwg.mxu0
        %v3290 = vadd.f32 %v3126, %v3282
        %v3291 = vadd.f32 %v3127, %v3287
        %v3292 = vld [vmem:[%s882 + $0x50] sm:$0xff]
        %v3293 = vld [vmem:[%s882 + $0x58] sm:$0xff]
        %3294 = vmatprep.subr.mxu0 0.0
        %3295 = vmatpush1.msra.mxu0 %v2461
        %3296 = vmatprep.subr.mxu0 0.0
        %3297 = vmatpush1.msra.mxu0 %v2462
        %3298 = vmatprep.subr.mxu0 0.0
        %3299 = vmatpush1.msra.mxu0 %v2463
        %3300 = vmatprep.subr.mxu0 0.0
        %3301 = vmatpush1.msra.mxu0 %v2464
        %3302 = vmatprep.subr.mxu0 0.0
        %3303 = vmatpush1.msra.mxu0 %v2465
        %3304 = vmatprep.subr.mxu0 0.0
        %3305 = vmatpush1.msra.mxu0 %v2466
        %3306 = vmatprep.subr.mxu0 0.0
        %3307 = vmatpush1.msra.mxu0 %v2467
        %3308 = vmatprep.subr.mxu0 0.0
        %3309 = vmatpush1.msra.mxu0 %v2468
        %3310 = vmatprep.subr.mxu0 0.0
        %3311 = vmatpush1.msra.mxu0 %v2469
        %3312 = vmatprep.subr.mxu0 0.0
        %3313 = vmatpush1.msra.mxu0 %v2470
        %3314 = vmatprep.subr.mxu0 0.0
        %3315 = vmatpush1.msra.mxu0 %v2471
        %3316 = vmatprep.subr.mxu0 0.0
        %3317 = vmatpush1.msra.mxu0 %v2472
        %3318 = vmatprep.subr.mxu0 0.0
        %3319 = vmatpush1.msra.mxu0 %v2473
        %3320 = vmatprep.subr.mxu0 0.0
        %3321 = vmatpush1.msra.mxu0 %v2474
        %3322 = vmatprep.subr.mxu0 0.0
        %3323 = vmatpush1.msra.mxu0 %v2475
        %3324 = vmatprep.subr.mxu0 0.0
        %3325 = vmatpush1.msra.mxu0 %v2476
        %3326 = vmatprep.subr.mxu0 0.0
        %3327 = vmatpush1.msra.mxu0 0.0
        %3328 = vmatprep.subr.mxu0 0.0
        %3329 = vmatpush1.msra.mxu0 0.0
        %3330 = vmatprep.subr.mxu0 0.0
        %3331 = vmatpush1.msra.mxu0 0.0
        %3332 = vmatprep.subr.mxu0 0.0
        %3333 = vmatpush1.msra.mxu0 0.0
        %3334 = vmatprep.subr.mxu0 0.0
        %3335 = vmatpush1.msra.mxu0 0.0
        %3336 = vmatprep.subr.mxu0 0.0
        %3337 = vmatpush1.msra.mxu0 0.0
        %3338 = vmatprep.subr.mxu0 0.0
        %3339 = vmatpush1.msra.mxu0 0.0
        %3340 = vmatprep.subr.mxu0 0.0
        %3341 = vmatpush1.msra.mxu0 0.0
        %3342 = vmatprep.subr.mxu0 0.0
        %3343 = vmatpush1.msra.mxu0 0.0
        %3344 = vmatprep.subr.mxu0 0.0
        %3345 = vmatpush1.msra.mxu0 0.0
        %3346 = vmatprep.subr.mxu0 0.0
        %3347 = vmatpush1.msra.mxu0 0.0
        %3348 = vmatprep.subr.mxu0 0.0
        %3349 = vmatpush1.msra.mxu0 0.0
        %3350 = vmatprep.subr.mxu0 0.0
        %3351 = vmatpush1.msra.mxu0 0.0
        %3352 = vmatprep.subr.mxu0 0.0
        %3353 = vmatpush1.msra.mxu0 0.0
        %3354 = vmatprep.subr.mxu0 0.0
        %3355 = vmatpush1.msra.mxu0 0.0
        %3356 = vmatprep.subr.mxu0 0.0
        %3357 = vmatpush1.msra.mxu0 0.0
        %3358 = vmatprep.mubr.f32.mxu0 0.0
        %3359 = vmatmul.mubr.f32.gmra.mrb[0].mxu0 %v3292
        %v3360 = vpop.f32.mrb[0].mxu0
        %v3361 = vadd.f32 0.0, %v3360
        %v3362 = vpop.f32.mrb[0].mxu0
        %3363 = vmatprep.mubr.f32.mxu0 0.0
        %3364 = vmatmul.mubr.f32.gmra.mrb[0].mxu0 %v3293
        %v3365 = vpop.f32.mrb[0].mxu0
        %v3366 = vadd.f32 0.0, %v3365
        %v3367 = vpop.f32.mrb[0].mxu0
        %3368 = vdwg.mxu0
        %v3369 = vmax.f32 %v3361, 0.0
        %v3370 = vmax.f32 %v3366, 0.0
        %v3371 = vld [vmem:[%s14 + $0x50] sm:$0xff]
        %v3372 = vld [vmem:[%s14 + $0x58] sm:$0xff]
        %v3374 = vsel %vm2637, %v3369, 0
        %v3377 = vsel %vm2637, %v3370, 0
        %3379 = vmatprep.subr.mxu0 0.0
        %3380 = vmatpush1.msra.mxu0 %v3371
        %3381 = vmatprep.subr.mxu0 0.0
        %3382 = vmatpush1.msra.mxu0 %v3372
        %3383 = vmatprep.subr.mxu0 0.0
        %3384 = vmatpush1.msra.mxu0 0.0
        %3385 = vmatprep.subr.mxu0 0.0
        %3386 = vmatpush1.msra.mxu0 0.0
        %3387 = vmatprep.subr.mxu0 0.0
        %3388 = vmatpush1.msra.mxu0 0.0
        %3389 = vmatprep.subr.mxu0 0.0
        %3390 = vmatpush1.msra.mxu0 0.0
        %3391 = vmatprep.subr.mxu0 0.0
        %3392 = vmatpush1.msra.mxu0 0.0
        %3393 = vmatprep.subr.mxu0 0.0
        %3394 = vmatpush1.msra.mxu0 0.0
        %3395 = vmatprep.subr.mxu0 0.0
        %3396 = vmatpush1.msra.mxu0 0.0
        %3397 = vmatprep.subr.mxu0 0.0
        %3398 = vmatpush1.msra.mxu0 0.0
        %3399 = vmatprep.subr.mxu0 0.0
        %3400 = vmatpush1.msra.mxu0 0.0
        %3401 = vmatprep.subr.mxu0 0.0
        %3402 = vmatpush1.msra.mxu0 0.0
        %3403 = vmatprep.subr.mxu0 0.0
        %3404 = vmatpush1.msra.mxu0 0.0
        %3405 = vmatprep.subr.mxu0 0.0
        %3406 = vmatpush1.msra.mxu0 0.0
        %3407 = vmatprep.subr.mxu0 0.0
        %3408 = vmatpush1.msra.mxu0 0.0
        %3409 = vmatprep.subr.mxu0 0.0
        %3410 = vmatpush1.msra.mxu0 0.0
        %3411 = vmatprep.subr.mxu0 0.0
        %3412 = vmatpush1.msra.mxu0 0.0
        %3413 = vmatprep.subr.mxu0 0.0
        %3414 = vmatpush1.msra.mxu0 0.0
        %3415 = vmatprep.subr.mxu0 0.0
        %3416 = vmatpush1.msra.mxu0 0.0
        %3417 = vmatprep.subr.mxu0 0.0
        %3418 = vmatpush1.msra.mxu0 0.0
        %3419 = vmatprep.subr.mxu0 0.0
        %3420 = vmatpush1.msra.mxu0 0.0
        %3421 = vmatprep.subr.mxu0 0.0
        %3422 = vmatpush1.msra.mxu0 0.0
        %3423 = vmatprep.subr.mxu0 0.0
        %3424 = vmatpush1.msra.mxu0 0.0
        %3425 = vmatprep.subr.mxu0 0.0
        %3426 = vmatpush1.msra.mxu0 0.0
        %3427 = vmatprep.subr.mxu0 0.0
        %3428 = vmatpush1.msra.mxu0 0.0
        %3429 = vmatprep.subr.mxu0 0.0
        %3430 = vmatpush1.msra.mxu0 0.0
        %3431 = vmatprep.subr.mxu0 0.0
        %3432 = vmatpush1.msra.mxu0 0.0
        %3433 = vmatprep.subr.mxu0 0.0
        %3434 = vmatpush1.msra.mxu0 0.0
        %3435 = vmatprep.subr.mxu0 0.0
        %3436 = vmatpush1.msra.mxu0 0.0
        %3437 = vmatprep.subr.mxu0 0.0
        %3438 = vmatpush1.msra.mxu0 0.0
        %3439 = vmatprep.subr.mxu0 0.0
        %3440 = vmatpush1.msra.mxu0 0.0
        %3441 = vmatprep.subr.mxu0 0.0
        %3442 = vmatpush1.msra.mxu0 0.0
        %3443 = vmatprep.mubr.f32.mxu0 0.0
        %3444 = vmatmul.mubr.f32.gmra.mrb[0].mxu0 %v3374
        %v3445 = vpop.f32.mrb[0].mxu0
        %v3446 = vadd.f32 0.0, %v3445
        %v3447 = vpop.f32.mrb[0].mxu0
        %3448 = vmatprep.mubr.f32.mxu0 0.0
        %3449 = vmatmul.mubr.f32.gmra.mrb[0].mxu0 %v3377
        %v3450 = vpop.f32.mrb[0].mxu0
        %v3451 = vadd.f32 0.0, %v3450
        %v3452 = vpop.f32.mrb[0].mxu0
        %3453 = vdwg.mxu0
        %v3454 = vadd.f32 %v3290, %v3446
        %v3455 = vadd.f32 %v3291, %v3451
        %v3456 = vld [vmem:[%s882 + $0x60] sm:$0xff]
        %v3457 = vld [vmem:[%s882 + $0x68] sm:$0xff]
        %3458 = vmatprep.subr.mxu0 0.0
        %3459 = vmatpush1.msra.mxu0 %v2461
        %3460 = vmatprep.subr.mxu0 0.0
        %3461 = vmatpush1.msra.mxu0 %v2462
        %3462 = vmatprep.subr.mxu0 0.0
        %3463 = vmatpush1.msra.mxu0 %v2463
        %3464 = vmatprep.subr.mxu0 0.0
        %3465 = vmatpush1.msra.mxu0 %v2464
        %3466 = vmatprep.subr.mxu0 0.0
        %3467 = vmatpush1.msra.mxu0 %v2465
        %3468 = vmatprep.subr.mxu0 0.0
        %3469 = vmatpush1.msra.mxu0 %v2466
        %3470 = vmatprep.subr.mxu0 0.0
        %3471 = vmatpush1.msra.mxu0 %v2467
        %3472 = vmatprep.subr.mxu0 0.0
        %3473 = vmatpush1.msra.mxu0 %v2468
        %3474 = vmatprep.subr.mxu0 0.0
        %3475 = vmatpush1.msra.mxu0 %v2469
        %3476 = vmatprep.subr.mxu0 0.0
        %3477 = vmatpush1.msra.mxu0 %v2470
        %3478 = vmatprep.subr.mxu0 0.0
        %3479 = vmatpush1.msra.mxu0 %v2471
        %3480 = vmatprep.subr.mxu0 0.0
        %3481 = vmatpush1.msra.mxu0 %v2472
        %3482 = vmatprep.subr.mxu0 0.0
        %3483 = vmatpush1.msra.mxu0 %v2473
        %3484 = vmatprep.subr.mxu0 0.0
        %3485 = vmatpush1.msra.mxu0 %v2474
        %3486 = vmatprep.subr.mxu0 0.0
        %3487 = vmatpush1.msra.mxu0 %v2475
        %3488 = vmatprep.subr.mxu0 0.0
        %3489 = vmatpush1.msra.mxu0 %v2476
        %3490 = vmatprep.subr.mxu0 0.0
        %3491 = vmatpush1.msra.mxu0 0.0
        %3492 = vmatprep.subr.mxu0 0.0
        %3493 = vmatpush1.msra.mxu0 0.0
        %3494 = vmatprep.subr.mxu0 0.0
        %3495 = vmatpush1.msra.mxu0 0.0
        %3496 = vmatprep.subr.mxu0 0.0
        %3497 = vmatpush1.msra.mxu0 0.0
        %3498 = vmatprep.subr.mxu0 0.0
        %3499 = vmatpush1.msra.mxu0 0.0
        %3500 = vmatprep.subr.mxu0 0.0
        %3501 = vmatpush1.msra.mxu0 0.0
        %3502 = vmatprep.subr.mxu0 0.0
        %3503 = vmatpush1.msra.mxu0 0.0
        %3504 = vmatprep.subr.mxu0 0.0
        %3505 = vmatpush1.msra.mxu0 0.0
        %3506 = vmatprep.subr.mxu0 0.0
        %3507 = vmatpush1.msra.mxu0 0.0
        %3508 = vmatprep.subr.mxu0 0.0
        %3509 = vmatpush1.msra.mxu0 0.0
        %3510 = vmatprep.subr.mxu0 0.0
        %3511 = vmatpush1.msra.mxu0 0.0
        %3512 = vmatprep.subr.mxu0 0.0
        %3513 = vmatpush1.msra.mxu0 0.0
        %3514 = vmatprep.subr.mxu0 0.0
        %3515 = vmatpush1.msra.mxu0 0.0
        %3516 = vmatprep.subr.mxu0 0.0
        %3517 = vmatpush1.msra.mxu0 0.0
        %3518 = vmatprep.subr.mxu0 0.0
        %3519 = vmatpush1.msra.mxu0 0.0
        %3520 = vmatprep.subr.mxu0 0.0
        %3521 = vmatpush1.msra.mxu0 0.0
        %3522 = vmatprep.mubr.f32.mxu0 0.0
        %3523 = vmatmul.mubr.f32.gmra.mrb[0].mxu0 %v3456
        %v3524 = vpop.f32.mrb[0].mxu0
        %v3525 = vadd.f32 0.0, %v3524
        %v3526 = vpop.f32.mrb[0].mxu0
        %3527 = vmatprep.mubr.f32.mxu0 0.0
        %3528 = vmatmul.mubr.f32.gmra.mrb[0].mxu0 %v3457
        %v3529 = vpop.f32.mrb[0].mxu0
        %v3530 = vadd.f32 0.0, %v3529
        %v3531 = vpop.f32.mrb[0].mxu0
        %3532 = vdwg.mxu0
        %v3533 = vmax.f32 %v3525, 0.0
        %v3534 = vmax.f32 %v3530, 0.0
        %v3535 = vld [vmem:[%s14 + $0x60] sm:$0xff]
        %v3536 = vld [vmem:[%s14 + $0x68] sm:$0xff]
        %v3538 = vsel %vm2637, %v3533, 0
        %v3541 = vsel %vm2637, %v3534, 0
        %3543 = vmatprep.subr.mxu0 0.0
        %3544 = vmatpush1.msra.mxu0 %v3535
        %3545 = vmatprep.subr.mxu0 0.0
        %3546 = vmatpush1.msra.mxu0 %v3536
        %3547 = vmatprep.subr.mxu0 0.0
        %3548 = vmatpush1.msra.mxu0 0.0
        %3549 = vmatprep.subr.mxu0 0.0
        %3550 = vmatpush1.msra.mxu0 0.0
        %3551 = vmatprep.subr.mxu0 0.0
        %3552 = vmatpush1.msra.mxu0 0.0
        %3553 = vmatprep.subr.mxu0 0.0
        %3554 = vmatpush1.msra.mxu0 0.0
        %3555 = vmatprep.subr.mxu0 0.0
        %3556 = vmatpush1.msra.mxu0 0.0
        %3557 = vmatprep.subr.mxu0 0.0
        %3558 = vmatpush1.msra.mxu0 0.0
        %3559 = vmatprep.subr.mxu0 0.0
        %3560 = vmatpush1.msra.mxu0 0.0
        %3561 = vmatprep.subr.mxu0 0.0
        %3562 = vmatpush1.msra.mxu0 0.0
        %3563 = vmatprep.subr.mxu0 0.0
        %3564 = vmatpush1.msra.mxu0 0.0
        %3565 = vmatprep.subr.mxu0 0.0
        %3566 = vmatpush1.msra.mxu0 0.0
        %3567 = vmatprep.subr.mxu0 0.0
        %3568 = vmatpush1.msra.mxu0 0.0
        %3569 = vmatprep.subr.mxu0 0.0
        %3570 = vmatpush1.msra.mxu0 0.0
        %3571 = vmatprep.subr.mxu0 0.0
        %3572 = vmatpush1.msra.mxu0 0.0
        %3573 = vmatprep.subr.mxu0 0.0
        %3574 = vmatpush1.msra.mxu0 0.0
        %3575 = vmatprep.subr.mxu0 0.0
        %3576 = vmatpush1.msra.mxu0 0.0
        %3577 = vmatprep.subr.mxu0 0.0
        %3578 = vmatpush1.msra.mxu0 0.0
        %3579 = vmatprep.subr.mxu0 0.0
        %3580 = vmatpush1.msra.mxu0 0.0
        %3581 = vmatprep.subr.mxu0 0.0
        %3582 = vmatpush1.msra.mxu0 0.0
        %3583 = vmatprep.subr.mxu0 0.0
        %3584 = vmatpush1.msra.mxu0 0.0
        %3585 = vmatprep.subr.mxu0 0.0
        %3586 = vmatpush1.msra.mxu0 0.0
        %3587 = vmatprep.subr.mxu0 0.0
        %3588 = vmatpush1.msra.mxu0 0.0
        %3589 = vmatprep.subr.mxu0 0.0
        %3590 = vmatpush1.msra.mxu0 0.0
        %3591 = vmatprep.subr.mxu0 0.0
        %3592 = vmatpush1.msra.mxu0 0.0
        %3593 = vmatprep.subr.mxu0 0.0
        %3594 = vmatpush1.msra.mxu0 0.0
        %3595 = vmatprep.subr.mxu0 0.0
        %3596 = vmatpush1.msra.mxu0 0.0
        %3597 = vmatprep.subr.mxu0 0.0
        %3598 = vmatpush1.msra.mxu0 0.0
        %3599 = vmatprep.subr.mxu0 0.0
        %3600 = vmatpush1.msra.mxu0 0.0
        %3601 = vmatprep.subr.mxu0 0.0
        %3602 = vmatpush1.msra.mxu0 0.0
        %3603 = vmatprep.subr.mxu0 0.0
        %3604 = vmatpush1.msra.mxu0 0.0
        %3605 = vmatprep.subr.mxu0 0.0
        %3606 = vmatpush1.msra.mxu0 0.0
        %3607 = vmatprep.mubr.f32.mxu0 0.0
        %3608 = vmatmul.mubr.f32.gmra.mrb[0].mxu0 %v3538
        %v3609 = vpop.f32.mrb[0].mxu0
        %v3610 = vadd.f32 0.0, %v3609
        %v3611 = vpop.f32.mrb[0].mxu0
        %3612 = vmatprep.mubr.f32.mxu0 0.0
        %3613 = vmatmul.mubr.f32.gmra.mrb[0].mxu0 %v3541
        %v3614 = vpop.f32.mrb[0].mxu0
        %v3615 = vadd.f32 0.0, %v3614
        %v3616 = vpop.f32.mrb[0].mxu0
        %3617 = vdwg.mxu0
        %v3618 = vadd.f32 %v3454, %v3610
        %v3619 = vadd.f32 %v3455, %v3615
        %v3620 = vld [vmem:[%s882 + $0x70] sm:$0xff]
        %v3621 = vld [vmem:[%s882 + $0x78] sm:$0xff]
        %3622 = vmatprep.subr.mxu0 0.0
        %3623 = vmatpush1.msra.mxu0 %v2461
        %3624 = vmatprep.subr.mxu0 0.0
        %3625 = vmatpush1.msra.mxu0 %v2462
        %3626 = vmatprep.subr.mxu0 0.0
        %3627 = vmatpush1.msra.mxu0 %v2463
        %3628 = vmatprep.subr.mxu0 0.0
        %3629 = vmatpush1.msra.mxu0 %v2464
        %3630 = vmatprep.subr.mxu0 0.0
        %3631 = vmatpush1.msra.mxu0 %v2465
        %3632 = vmatprep.subr.mxu0 0.0
        %3633 = vmatpush1.msra.mxu0 %v2466
        %3634 = vmatprep.subr.mxu0 0.0
        %3635 = vmatpush1.msra.mxu0 %v2467
        %3636 = vmatprep.subr.mxu0 0.0
        %3637 = vmatpush1.msra.mxu0 %v2468
        %3638 = vmatprep.subr.mxu0 0.0
        %3639 = vmatpush1.msra.mxu0 %v2469
        %3640 = vmatprep.subr.mxu0 0.0
        %3641 = vmatpush1.msra.mxu0 %v2470
        %3642 = vmatprep.subr.mxu0 0.0
        %3643 = vmatpush1.msra.mxu0 %v2471
        %3644 = vmatprep.subr.mxu0 0.0
        %3645 = vmatpush1.msra.mxu0 %v2472
        %3646 = vmatprep.subr.mxu0 0.0
        %3647 = vmatpush1.msra.mxu0 %v2473
        %3648 = vmatprep.subr.mxu0 0.0
        %3649 = vmatpush1.msra.mxu0 %v2474
        %3650 = vmatprep.subr.mxu0 0.0
        %3651 = vmatpush1.msra.mxu0 %v2475
        %3652 = vmatprep.subr.mxu0 0.0
        %3653 = vmatpush1.msra.mxu0 %v2476
        %3654 = vmatprep.subr.mxu0 0.0
        %3655 = vmatpush1.msra.mxu0 0.0
        %3656 = vmatprep.subr.mxu0 0.0
        %3657 = vmatpush1.msra.mxu0 0.0
        %3658 = vmatprep.subr.mxu0 0.0
        %3659 = vmatpush1.msra.mxu0 0.0
        %3660 = vmatprep.subr.mxu0 0.0
        %3661 = vmatpush1.msra.mxu0 0.0
        %3662 = vmatprep.subr.mxu0 0.0
        %3663 = vmatpush1.msra.mxu0 0.0
        %3664 = vmatprep.subr.mxu0 0.0
        %3665 = vmatpush1.msra.mxu0 0.0
        %3666 = vmatprep.subr.mxu0 0.0
        %3667 = vmatpush1.msra.mxu0 0.0
        %3668 = vmatprep.subr.mxu0 0.0
        %3669 = vmatpush1.msra.mxu0 0.0
        %3670 = vmatprep.subr.mxu0 0.0
        %3671 = vmatpush1.msra.mxu0 0.0
        %3672 = vmatprep.subr.mxu0 0.0
        %3673 = vmatpush1.msra.mxu0 0.0
        %3674 = vmatprep.subr.mxu0 0.0
        %3675 = vmatpush1.msra.mxu0 0.0
        %3676 = vmatprep.subr.mxu0 0.0
        %3677 = vmatpush1.msra.mxu0 0.0
        %3678 = vmatprep.subr.mxu0 0.0
        %3679 = vmatpush1.msra.mxu0 0.0
        %3680 = vmatprep.subr.mxu0 0.0
        %3681 = vmatpush1.msra.mxu0 0.0
        %3682 = vmatprep.subr.mxu0 0.0
        %3683 = vmatpush1.msra.mxu0 0.0
        %3684 = vmatprep.subr.mxu0 0.0
        %3685 = vmatpush1.msra.mxu0 0.0
        %3686 = vmatprep.mubr.f32.mxu0 0.0
        %3687 = vmatmul.mubr.f32.gmra.mrb[0].mxu0 %v3620
        %v3688 = vpop.f32.mrb[0].mxu0
        %v3689 = vadd.f32 0.0, %v3688
        %v3690 = vpop.f32.mrb[0].mxu0
        %3691 = vmatprep.mubr.f32.mxu0 0.0
        %3692 = vmatmul.mubr.f32.gmra.mrb[0].mxu0 %v3621
        %v3693 = vpop.f32.mrb[0].mxu0
        %v3694 = vadd.f32 0.0, %v3693
        %v3695 = vpop.f32.mrb[0].mxu0
        %3696 = vdwg.mxu0
        %v3697 = vmax.f32 %v3689, 0.0
        %v3698 = vmax.f32 %v3694, 0.0
        %v3699 = vld [vmem:[%s14 + $0x70] sm:$0xff]
        %v3700 = vld [vmem:[%s14 + $0x78] sm:$0xff]
        %v3702 = vsel %vm2637, %v3697, 0
        %v3705 = vsel %vm2637, %v3698, 0
        %3707 = vmatprep.subr.mxu0 0.0
        %3708 = vmatpush1.msra.mxu0 %v3699
        %3709 = vmatprep.subr.mxu0 0.0
        %3710 = vmatpush1.msra.mxu0 %v3700
        %3711 = vmatprep.subr.mxu0 0.0
        %3712 = vmatpush1.msra.mxu0 0.0
        %3713 = vmatprep.subr.mxu0 0.0
        %3714 = vmatpush1.msra.mxu0 0.0
        %3715 = vmatprep.subr.mxu0 0.0
        %3716 = vmatpush1.msra.mxu0 0.0
        %3717 = vmatprep.subr.mxu0 0.0
        %3718 = vmatpush1.msra.mxu0 0.0
        %3719 = vmatprep.subr.mxu0 0.0
        %3720 = vmatpush1.msra.mxu0 0.0
        %3721 = vmatprep.subr.mxu0 0.0
        %3722 = vmatpush1.msra.mxu0 0.0
        %3723 = vmatprep.subr.mxu0 0.0
        %3724 = vmatpush1.msra.mxu0 0.0
        %3725 = vmatprep.subr.mxu0 0.0
        %3726 = vmatpush1.msra.mxu0 0.0
        %3727 = vmatprep.subr.mxu0 0.0
        %3728 = vmatpush1.msra.mxu0 0.0
        %3729 = vmatprep.subr.mxu0 0.0
        %3730 = vmatpush1.msra.mxu0 0.0
        %3731 = vmatprep.subr.mxu0 0.0
        %3732 = vmatpush1.msra.mxu0 0.0
        %3733 = vmatprep.subr.mxu0 0.0
        %3734 = vmatpush1.msra.mxu0 0.0
        %3735 = vmatprep.subr.mxu0 0.0
        %3736 = vmatpush1.msra.mxu0 0.0
        %3737 = vmatprep.subr.mxu0 0.0
        %3738 = vmatpush1.msra.mxu0 0.0
        %3739 = vmatprep.subr.mxu0 0.0
        %3740 = vmatpush1.msra.mxu0 0.0
        %3741 = vmatprep.subr.mxu0 0.0
        %3742 = vmatpush1.msra.mxu0 0.0
        %3743 = vmatprep.subr.mxu0 0.0
        %3744 = vmatpush1.msra.mxu0 0.0
        %3745 = vmatprep.subr.mxu0 0.0
        %3746 = vmatpush1.msra.mxu0 0.0
        %3747 = vmatprep.subr.mxu0 0.0
        %3748 = vmatpush1.msra.mxu0 0.0
        %3749 = vmatprep.subr.mxu0 0.0
        %3750 = vmatpush1.msra.mxu0 0.0
        %3751 = vmatprep.subr.mxu0 0.0
        %3752 = vmatpush1.msra.mxu0 0.0
        %3753 = vmatprep.subr.mxu0 0.0
        %3754 = vmatpush1.msra.mxu0 0.0
        %3755 = vmatprep.subr.mxu0 0.0
        %3756 = vmatpush1.msra.mxu0 0.0
        %3757 = vmatprep.subr.mxu0 0.0
        %3758 = vmatpush1.msra.mxu0 0.0
        %3759 = vmatprep.subr.mxu0 0.0
        %3760 = vmatpush1.msra.mxu0 0.0
        %3761 = vmatprep.subr.mxu0 0.0
        %3762 = vmatpush1.msra.mxu0 0.0
        %3763 = vmatprep.subr.mxu0 0.0
        %3764 = vmatpush1.msra.mxu0 0.0
        %3765 = vmatprep.subr.mxu0 0.0
        %3766 = vmatpush1.msra.mxu0 0.0
        %3767 = vmatprep.subr.mxu0 0.0
        %3768 = vmatpush1.msra.mxu0 0.0
        %3769 = vmatprep.subr.mxu0 0.0
        %3770 = vmatpush1.msra.mxu0 0.0
        %3771 = vmatprep.mubr.f32.mxu0 0.0
        %3772 = vmatmul.mubr.f32.gmra.mrb[0].mxu0 %v3702
        %v3773 = vpop.f32.mrb[0].mxu0
        %v3774 = vadd.f32 0.0, %v3773
        %v3775 = vpop.f32.mrb[0].mxu0
        %3776 = vmatprep.mubr.f32.mxu0 0.0
        %3777 = vmatmul.mubr.f32.gmra.mrb[0].mxu0 %v3705
        %v3778 = vpop.f32.mrb[0].mxu0
        %v3779 = vadd.f32 0.0, %v3778
        %v3780 = vpop.f32.mrb[0].mxu0
        %3781 = vdwg.mxu0
        %v3782 = vadd.f32 %v3618, %v3774
        %v3783 = vadd.f32 %v3619, %v3779
        %v3784 = vld [vmem:[%s882 + $0x80] sm:$0xff]
        %v3785 = vld [vmem:[%s882 + $0x88] sm:$0xff]
        %3786 = vmatprep.subr.mxu0 0.0
        %3787 = vmatpush1.msra.mxu0 %v2461
        %3788 = vmatprep.subr.mxu0 0.0
        %3789 = vmatpush1.msra.mxu0 %v2462
        %3790 = vmatprep.subr.mxu0 0.0
        %3791 = vmatpush1.msra.mxu0 %v2463
        %3792 = vmatprep.subr.mxu0 0.0
        %3793 = vmatpush1.msra.mxu0 %v2464
        %3794 = vmatprep.subr.mxu0 0.0
        %3795 = vmatpush1.msra.mxu0 %v2465
        %3796 = vmatprep.subr.mxu0 0.0
        %3797 = vmatpush1.msra.mxu0 %v2466
        %3798 = vmatprep.subr.mxu0 0.0
        %3799 = vmatpush1.msra.mxu0 %v2467
        %3800 = vmatprep.subr.mxu0 0.0
        %3801 = vmatpush1.msra.mxu0 %v2468
        %3802 = vmatprep.subr.mxu0 0.0
        %3803 = vmatpush1.msra.mxu0 %v2469
        %3804 = vmatprep.subr.mxu0 0.0
        %3805 = vmatpush1.msra.mxu0 %v2470
        %3806 = vmatprep.subr.mxu0 0.0
        %3807 = vmatpush1.msra.mxu0 %v2471
        %3808 = vmatprep.subr.mxu0 0.0
        %3809 = vmatpush1.msra.mxu0 %v2472
        %3810 = vmatprep.subr.mxu0 0.0
        %3811 = vmatpush1.msra.mxu0 %v2473
        %3812 = vmatprep.subr.mxu0 0.0
        %3813 = vmatpush1.msra.mxu0 %v2474
        %3814 = vmatprep.subr.mxu0 0.0
        %3815 = vmatpush1.msra.mxu0 %v2475
        %3816 = vmatprep.subr.mxu0 0.0
        %3817 = vmatpush1.msra.mxu0 %v2476
        %3818 = vmatprep.subr.mxu0 0.0
        %3819 = vmatpush1.msra.mxu0 0.0
        %3820 = vmatprep.subr.mxu0 0.0
        %3821 = vmatpush1.msra.mxu0 0.0
        %3822 = vmatprep.subr.mxu0 0.0
        %3823 = vmatpush1.msra.mxu0 0.0
        %3824 = vmatprep.subr.mxu0 0.0
        %3825 = vmatpush1.msra.mxu0 0.0
        %3826 = vmatprep.subr.mxu0 0.0
        %3827 = vmatpush1.msra.mxu0 0.0
        %3828 = vmatprep.subr.mxu0 0.0
        %3829 = vmatpush1.msra.mxu0 0.0
        %3830 = vmatprep.subr.mxu0 0.0
        %3831 = vmatpush1.msra.mxu0 0.0
        %3832 = vmatprep.subr.mxu0 0.0
        %3833 = vmatpush1.msra.mxu0 0.0
        %3834 = vmatprep.subr.mxu0 0.0
        %3835 = vmatpush1.msra.mxu0 0.0
        %3836 = vmatprep.subr.mxu0 0.0
        %3837 = vmatpush1.msra.mxu0 0.0
        %3838 = vmatprep.subr.mxu0 0.0
        %3839 = vmatpush1.msra.mxu0 0.0
        %3840 = vmatprep.subr.mxu0 0.0
        %3841 = vmatpush1.msra.mxu0 0.0
        %3842 = vmatprep.subr.mxu0 0.0
        %3843 = vmatpush1.msra.mxu0 0.0
        %3844 = vmatprep.subr.mxu0 0.0
        %3845 = vmatpush1.msra.mxu0 0.0
        %3846 = vmatprep.subr.mxu0 0.0
        %3847 = vmatpush1.msra.mxu0 0.0
        %3848 = vmatprep.subr.mxu0 0.0
        %3849 = vmatpush1.msra.mxu0 0.0
        %3850 = vmatprep.mubr.f32.mxu0 0.0
        %3851 = vmatmul.mubr.f32.gmra.mrb[0].mxu0 %v3784
        %v3852 = vpop.f32.mrb[0].mxu0
        %v3853 = vadd.f32 0.0, %v3852
        %v3854 = vpop.f32.mrb[0].mxu0
        %3855 = vmatprep.mubr.f32.mxu0 0.0
        %3856 = vmatmul.mubr.f32.gmra.mrb[0].mxu0 %v3785
        %v3857 = vpop.f32.mrb[0].mxu0
        %v3858 = vadd.f32 0.0, %v3857
        %v3859 = vpop.f32.mrb[0].mxu0
        %3860 = vdwg.mxu0
        %v3861 = vmax.f32 %v3853, 0.0
        %v3862 = vmax.f32 %v3858, 0.0
        %v3863 = vld [vmem:[%s14 + $0x80] sm:$0xff]
        %v3864 = vld [vmem:[%s14 + $0x88] sm:$0xff]
        %v3866 = vsel %vm2637, %v3861, 0
        %v3869 = vsel %vm2637, %v3862, 0
        %3871 = vmatprep.subr.mxu0 0.0
        %3872 = vmatpush1.msra.mxu0 %v3863
        %3873 = vmatprep.subr.mxu0 0.0
        %3874 = vmatpush1.msra.mxu0 %v3864
        %3875 = vmatprep.subr.mxu0 0.0
        %3876 = vmatpush1.msra.mxu0 0.0
        %3877 = vmatprep.subr.mxu0 0.0
        %3878 = vmatpush1.msra.mxu0 0.0
        %3879 = vmatprep.subr.mxu0 0.0
        %3880 = vmatpush1.msra.mxu0 0.0
        %3881 = vmatprep.subr.mxu0 0.0
        %3882 = vmatpush1.msra.mxu0 0.0
        %3883 = vmatprep.subr.mxu0 0.0
        %3884 = vmatpush1.msra.mxu0 0.0
        %3885 = vmatprep.subr.mxu0 0.0
        %3886 = vmatpush1.msra.mxu0 0.0
        %3887 = vmatprep.subr.mxu0 0.0
        %3888 = vmatpush1.msra.mxu0 0.0
        %3889 = vmatprep.subr.mxu0 0.0
        %3890 = vmatpush1.msra.mxu0 0.0
        %3891 = vmatprep.subr.mxu0 0.0
        %3892 = vmatpush1.msra.mxu0 0.0
        %3893 = vmatprep.subr.mxu0 0.0
        %3894 = vmatpush1.msra.mxu0 0.0
        %3895 = vmatprep.subr.mxu0 0.0
        %3896 = vmatpush1.msra.mxu0 0.0
        %3897 = vmatprep.subr.mxu0 0.0
        %3898 = vmatpush1.msra.mxu0 0.0
        %3899 = vmatprep.subr.mxu0 0.0
        %3900 = vmatpush1.msra.mxu0 0.0
        %3901 = vmatprep.subr.mxu0 0.0
        %3902 = vmatpush1.msra.mxu0 0.0
        %3903 = vmatprep.subr.mxu0 0.0
        %3904 = vmatpush1.msra.mxu0 0.0
        %3905 = vmatprep.subr.mxu0 0.0
        %3906 = vmatpush1.msra.mxu0 0.0
        %3907 = vmatprep.subr.mxu0 0.0
        %3908 = vmatpush1.msra.mxu0 0.0
        %3909 = vmatprep.subr.mxu0 0.0
        %3910 = vmatpush1.msra.mxu0 0.0
        %3911 = vmatprep.subr.mxu0 0.0
        %3912 = vmatpush1.msra.mxu0 0.0
        %3913 = vmatprep.subr.mxu0 0.0
        %3914 = vmatpush1.msra.mxu0 0.0
        %3915 = vmatprep.subr.mxu0 0.0
        %3916 = vmatpush1.msra.mxu0 0.0
        %3917 = vmatprep.subr.mxu0 0.0
        %3918 = vmatpush1.msra.mxu0 0.0
        %3919 = vmatprep.subr.mxu0 0.0
        %3920 = vmatpush1.msra.mxu0 0.0
        %3921 = vmatprep.subr.mxu0 0.0
        %3922 = vmatpush1.msra.mxu0 0.0
        %3923 = vmatprep.subr.mxu0 0.0
        %3924 = vmatpush1.msra.mxu0 0.0
        %3925 = vmatprep.subr.mxu0 0.0
        %3926 = vmatpush1.msra.mxu0 0.0
        %3927 = vmatprep.subr.mxu0 0.0
        %3928 = vmatpush1.msra.mxu0 0.0
        %3929 = vmatprep.subr.mxu0 0.0
        %3930 = vmatpush1.msra.mxu0 0.0
        %3931 = vmatprep.subr.mxu0 0.0
        %3932 = vmatpush1.msra.mxu0 0.0
        %3933 = vmatprep.subr.mxu0 0.0
        %3934 = vmatpush1.msra.mxu0 0.0
        %3935 = vmatprep.mubr.f32.mxu0 0.0
        %3936 = vmatmul.mubr.f32.gmra.mrb[0].mxu0 %v3866
        %v3937 = vpop.f32.mrb[0].mxu0
        %v3938 = vadd.f32 0.0, %v3937
        %v3939 = vpop.f32.mrb[0].mxu0
        %3940 = vmatprep.mubr.f32.mxu0 0.0
        %3941 = vmatmul.mubr.f32.gmra.mrb[0].mxu0 %v3869
        %v3942 = vpop.f32.mrb[0].mxu0
        %v3943 = vadd.f32 0.0, %v3942
        %v3944 = vpop.f32.mrb[0].mxu0
        %3945 = vdwg.mxu0
        %v3946 = vadd.f32 %v3782, %v3938
        %v3947 = vadd.f32 %v3783, %v3943
        %v3948 = vld [vmem:[%s17] ss:$0 sm:$0xff]
        %v3949 = vadd.f32 %v3946, %v3948
        %v3950 = vadd.f32 %v3947, %v3948
        %v3951 = vmax.f32 %v3949, 0.0
        %v3952 = vmax.f32 %v3950, 0.0
        %v3953 = vsel %vm1081, %v3951, 0.0
        %v3954 = vsel %vm1081, %v3952, 0.0
        %v3955 = vadd.f32 %v3953, %v3954
        %v3956 = vrot.slane %v3955, 4
        %v3957 = vadd.f32 %v3955, %v3956
        %v3958 = vrot.slane %v3957, 2
        %v3959 = vadd.f32 %v3957, %v3958
        %v3960 = vrot.slane %v3959, 1
        %v3961 = vadd.f32 %v3959, %v3960
        %v3962 = vrcp.pop 16.0
        %v3963 = vmul.f32 %v3961, %v3962
        %v3964 = vld [vmem:[%s15] sm:$0xff]
        %v3965 = vld [vmem:[%s15 + $0x8] sm:$0xff]
        %v3966 = vld [vmem:[%s15 + $0x10] sm:$0xff]
        %v3967 = vld [vmem:[%s15 + $0x18] sm:$0xff]
        %v3968 = vld [vmem:[%s15 + $0x20] sm:$0xff]
        %v3969 = vld [vmem:[%s15 + $0x28] sm:$0xff]
        %v3970 = vld [vmem:[%s15 + $0x30] sm:$0xff]
        %v3971 = vld [vmem:[%s15 + $0x38] sm:$0xff]
        %v3972 = vld [vmem:[%s15 + $0x40] sm:$0xff]
        %v3973 = vld [vmem:[%s15 + $0x48] sm:$0xff]
        %v3974 = vld [vmem:[%s15 + $0x50] sm:$0xff]
        %v3975 = vld [vmem:[%s15 + $0x58] sm:$0xff]
        %v3976 = vld [vmem:[%s15 + $0x60] sm:$0xff]
        %v3977 = vld [vmem:[%s15 + $0x68] sm:$0xff]
        %v3978 = vld [vmem:[%s15 + $0x70] sm:$0xff]
        %v3979 = vld [vmem:[%s15 + $0x78] sm:$0xff]
        %s3980 = scalar_lea.vmem %s17, 1
        %v3981 = vld [vmem:[%s3980] ss:$8 sm:$0xf]
        %v3983 = vlaneseq
        %v3984 = vshrl.u32 %v3983, 7
        %v3985 = vsub.s32 0, %v3984
        %v3986 = vrot.slane %v3981, %v3985
        %v3987 = vlaneseq
        %v3988 = vshrl.u32 %v3987, 7
        %v3989 = vsub.s32 1, %v3988
        %v3990 = vrot.slane %v3981, %v3989
        %v3991 = vlaneseq
        %v3992 = vshrl.u32 %v3991, 7
        %v3993 = vsub.s32 2, %v3992
        %v3994 = vrot.slane %v3981, %v3993
        %v3995 = vlaneseq
        %v3996 = vshrl.u32 %v3995, 7
        %v3997 = vsub.s32 3, %v3996
        %v3998 = vrot.slane %v3981, %v3997
        %v4004 = vsel %vm1081, %v3963, 0
        %4006 = vmatprep.subr.mxu0 %v3965
        %4007 = vmatpush1.msra.mxu0 %v3964
        %4008 = vmatprep.subr.mxu0 %v3969
        %4009 = vmatpush1.msra.mxu0 %v3968
        %4010 = vmatprep.subr.mxu0 %v3973
        %4011 = vmatpush1.msra.mxu0 %v3972
        %4012 = vmatprep.subr.mxu0 %v3977
        %4013 = vmatpush1.msra.mxu0 %v3976
        %4014 = vmatprep.subr.mxu0 0.0
        %4015 = vmatpush1.msra.mxu0 0.0
        %4016 = vmatprep.subr.mxu0 0.0
        %4017 = vmatpush1.msra.mxu0 0.0
        %4018 = vmatprep.subr.mxu0 0.0
        %4019 = vmatpush1.msra.mxu0 0.0
        %4020 = vmatprep.subr.mxu0 0.0
        %4021 = vmatpush1.msra.mxu0 0.0
        %4022 = vmatprep.subr.mxu0 0.0
        %4023 = vmatpush1.msra.mxu0 0.0
        %4024 = vmatprep.subr.mxu0 0.0
        %4025 = vmatpush1.msra.mxu0 0.0
        %4026 = vmatprep.subr.mxu0 0.0
        %4027 = vmatpush1.msra.mxu0 0.0
        %4028 = vmatprep.subr.mxu0 0.0
        %4029 = vmatpush1.msra.mxu0 0.0
        %4030 = vmatprep.subr.mxu0 0.0
        %4031 = vmatpush1.msra.mxu0 0.0
        %4032 = vmatprep.subr.mxu0 0.0
        %4033 = vmatpush1.msra.mxu0 0.0
        %4034 = vmatprep.subr.mxu0 0.0
        %4035 = vmatpush1.msra.mxu0 0.0
        %4036 = vmatprep.subr.mxu0 0.0
        %4037 = vmatpush1.msra.mxu0 0.0
        %4038 = vmatprep.subr.mxu0 0.0
        %4039 = vmatpush1.msra.mxu0 0.0
        %4040 = vmatprep.subr.mxu0 0.0
        %4041 = vmatpush1.msra.mxu0 0.0
        %4042 = vmatprep.subr.mxu0 0.0
        %4043 = vmatpush1.msra.mxu0 0.0
        %4044 = vmatprep.subr.mxu0 0.0
        %4045 = vmatpush1.msra.mxu0 0.0
        %4046 = vmatprep.subr.mxu0 0.0
        %4047 = vmatpush1.msra.mxu0 0.0
        %4048 = vmatprep.subr.mxu0 0.0
        %4049 = vmatpush1.msra.mxu0 0.0
        %4050 = vmatprep.subr.mxu0 0.0
        %4051 = vmatpush1.msra.mxu0 0.0
        %4052 = vmatprep.subr.mxu0 0.0
        %4053 = vmatpush1.msra.mxu0 0.0
        %4054 = vmatprep.subr.mxu0 0.0
        %4055 = vmatpush1.msra.mxu0 0.0
        %4056 = vmatprep.subr.mxu0 0.0
        %4057 = vmatpush1.msra.mxu0 0.0
        %4058 = vmatprep.subr.mxu0 0.0
        %4059 = vmatpush1.msra.mxu0 0.0
        %4060 = vmatprep.subr.mxu0 0.0
        %4061 = vmatpush1.msra.mxu0 0.0
        %4062 = vmatprep.subr.mxu0 0.0
        %4063 = vmatpush1.msra.mxu0 0.0
        %4064 = vmatprep.subr.mxu0 0.0
        %4065 = vmatpush1.msra.mxu0 0.0
        %4066 = vmatprep.subr.mxu0 0.0
        %4067 = vmatpush1.msra.mxu0 0.0
        %4068 = vmatprep.subr.mxu0 0.0
        %4069 = vmatpush1.msra.mxu0 0.0
        %4070 = vmatprep.mubr.f32.mxu0 0.0
        %4071 = vmatmul.mubr.f32.gmra.mrb[0].mxu0 %v4004
        %v4072 = vpop.f32.mrb[0].mxu0
        %v4073 = vadd.f32 %v3986, %v4072
        %v4074 = vpop.f32.mrb[0].mxu0
        %v4075 = vadd.f32 %v3990, %v4074
        %4076 = vdwg.mxu0
        %4077 = vmatprep.subr.mxu0 %v3967
        %4078 = vmatpush1.msra.mxu0 %v3966
        %4079 = vmatprep.subr.mxu0 %v3971
        %4080 = vmatpush1.msra.mxu0 %v3970
        %4081 = vmatprep.subr.mxu0 %v3975
        %4082 = vmatpush1.msra.mxu0 %v3974
        %4083 = vmatprep.subr.mxu0 %v3979
        %4084 = vmatpush1.msra.mxu0 %v3978
        %4085 = vmatprep.subr.mxu0 0.0
        %4086 = vmatpush1.msra.mxu0 0.0
        %4087 = vmatprep.subr.mxu0 0.0
        %4088 = vmatpush1.msra.mxu0 0.0
        %4089 = vmatprep.subr.mxu0 0.0
        %4090 = vmatpush1.msra.mxu0 0.0
        %4091 = vmatprep.subr.mxu0 0.0
        %4092 = vmatpush1.msra.mxu0 0.0
        %4093 = vmatprep.subr.mxu0 0.0
        %4094 = vmatpush1.msra.mxu0 0.0
        %4095 = vmatprep.subr.mxu0 0.0
        %4096 = vmatpush1.msra.mxu0 0.0
        %4097 = vmatprep.subr.mxu0 0.0
        %4098 = vmatpush1.msra.mxu0 0.0
        %4099 = vmatprep.subr.mxu0 0.0
        %4100 = vmatpush1.msra.mxu0 0.0
        %4101 = vmatprep.subr.mxu0 0.0
        %4102 = vmatpush1.msra.mxu0 0.0
        %4103 = vmatprep.subr.mxu0 0.0
        %4104 = vmatpush1.msra.mxu0 0.0
        %4105 = vmatprep.subr.mxu0 0.0
        %4106 = vmatpush1.msra.mxu0 0.0
        %4107 = vmatprep.subr.mxu0 0.0
        %4108 = vmatpush1.msra.mxu0 0.0
        %4109 = vmatprep.subr.mxu0 0.0
        %4110 = vmatpush1.msra.mxu0 0.0
        %4111 = vmatprep.subr.mxu0 0.0
        %4112 = vmatpush1.msra.mxu0 0.0
        %4113 = vmatprep.subr.mxu0 0.0
        %4114 = vmatpush1.msra.mxu0 0.0
        %4115 = vmatprep.subr.mxu0 0.0
        %4116 = vmatpush1.msra.mxu0 0.0
        %4117 = vmatprep.subr.mxu0 0.0
        %4118 = vmatpush1.msra.mxu0 0.0
        %4119 = vmatprep.subr.mxu0 0.0
        %4120 = vmatpush1.msra.mxu0 0.0
        %4121 = vmatprep.subr.mxu0 0.0
        %4122 = vmatpush1.msra.mxu0 0.0
        %4123 = vmatprep.subr.mxu0 0.0
        %4124 = vmatpush1.msra.mxu0 0.0
        %4125 = vmatprep.subr.mxu0 0.0
        %4126 = vmatpush1.msra.mxu0 0.0
        %4127 = vmatprep.subr.mxu0 0.0
        %4128 = vmatpush1.msra.mxu0 0.0
        %4129 = vmatprep.subr.mxu0 0.0
        %4130 = vmatpush1.msra.mxu0 0.0
        %4131 = vmatprep.subr.mxu0 0.0
        %4132 = vmatpush1.msra.mxu0 0.0
        %4133 = vmatprep.subr.mxu0 0.0
        %4134 = vmatpush1.msra.mxu0 0.0
        %4135 = vmatprep.subr.mxu0 0.0
        %4136 = vmatpush1.msra.mxu0 0.0
        %4137 = vmatprep.subr.mxu0 0.0
        %4138 = vmatpush1.msra.mxu0 0.0
        %4139 = vmatprep.subr.mxu0 0.0
        %4140 = vmatpush1.msra.mxu0 0.0
        %4141 = vmatprep.mubr.f32.mxu0 0.0
        %4142 = vmatmul.mubr.f32.gmra.mrb[0].mxu0 %v4004
        %v4143 = vpop.f32.mrb[0].mxu0
        %v4144 = vadd.f32 %v3994, %v4143
        %v4145 = vpop.f32.mrb[0].mxu0
        %v4146 = vadd.f32 %v3998, %v4145
        %4147 = vdwg.mxu0
        %v4148 = vld [vmem:[%s16] sm:$0xff]
        %v4149 = vld [vmem:[%s16 + $0x8] sm:$0xff]
        %v4150 = vld [vmem:[%s16 + $0x10] sm:$0xff]
        %v4151 = vld [vmem:[%s16 + $0x18] sm:$0xff]
        %v4152 = vld [vmem:[%s16 + $0x20] sm:$0xff]
        %v4153 = vld [vmem:[%s16 + $0x28] sm:$0xff]
        %v4154 = vld [vmem:[%s16 + $0x30] sm:$0xff]
        %v4155 = vld [vmem:[%s16 + $0x38] sm:$0xff]
        %v4156 = vld [vmem:[%s16 + $0x40] sm:$0xff]
        %v4157 = vld [vmem:[%s16 + $0x48] sm:$0xff]
        %v4158 = vld [vmem:[%s16 + $0x50] sm:$0xff]
        %v4159 = vld [vmem:[%s16 + $0x58] sm:$0xff]
        %v4160 = vld [vmem:[%s16 + $0x60] sm:$0xff]
        %v4161 = vld [vmem:[%s16 + $0x68] sm:$0xff]
        %v4162 = vld [vmem:[%s16 + $0x70] sm:$0xff]
        %v4163 = vld [vmem:[%s16 + $0x78] sm:$0xff]
        %v4164 = vld [vmem:[%s16 + $0x80] sm:$0xff]
        %v4165 = vld [vmem:[%s16 + $0x88] sm:$0xff]
        %v4166 = vld [vmem:[%s16 + $0x90] sm:$0xff]
        %v4167 = vld [vmem:[%s16 + $0x98] sm:$0xff]
        %v4168 = vld [vmem:[%s16 + $0xa0] sm:$0xff]
        %v4169 = vld [vmem:[%s16 + $0xa8] sm:$0xff]
        %v4170 = vld [vmem:[%s16 + $0xb0] sm:$0xff]
        %v4171 = vld [vmem:[%s16 + $0xb8] sm:$0xff]
        %v4172 = vld [vmem:[%s16 + $0xc0] sm:$0xff]
        %v4173 = vld [vmem:[%s16 + $0xc8] sm:$0xff]
        %v4174 = vld [vmem:[%s16 + $0xd0] sm:$0xff]
        %v4175 = vld [vmem:[%s16 + $0xd8] sm:$0xff]
        %v4176 = vld [vmem:[%s16 + $0xe0] sm:$0xff]
        %v4177 = vld [vmem:[%s16 + $0xe8] sm:$0xff]
        %v4178 = vld [vmem:[%s16 + $0xf0] sm:$0xff]
        %v4179 = vld [vmem:[%s16 + $0xf8] sm:$0xff]
        %v4180 = vld [vmem:[%s16 + $0x100] sm:$0xff]
        %v4181 = vld [vmem:[%s16 + $0x108] sm:$0xff]
        %v4182 = vld [vmem:[%s16 + $0x110] sm:$0xff]
        %v4183 = vld [vmem:[%s16 + $0x118] sm:$0xff]
        %v4184 = vld [vmem:[%s16 + $0x120] sm:$0xff]
        %v4185 = vld [vmem:[%s16 + $0x128] sm:$0xff]
        %v4186 = vld [vmem:[%s16 + $0x130] sm:$0xff]
        %v4187 = vld [vmem:[%s16 + $0x138] sm:$0xff]
        %v4188 = vld [vmem:[%s16 + $0x140] sm:$0xff]
        %v4189 = vld [vmem:[%s16 + $0x148] sm:$0xff]
        %v4190 = vld [vmem:[%s16 + $0x150] sm:$0xff]
        %v4191 = vld [vmem:[%s16 + $0x158] sm:$0xff]
        %v4192 = vld [vmem:[%s16 + $0x160] sm:$0xff]
        %v4193 = vld [vmem:[%s16 + $0x168] sm:$0xff]
        %v4194 = vld [vmem:[%s16 + $0x170] sm:$0xff]
        %v4195 = vld [vmem:[%s16 + $0x178] sm:$0xff]
        %v4196 = vld [vmem:[%s16 + $0x180] sm:$0xff]
        %v4197 = vld [vmem:[%s16 + $0x188] sm:$0xff]
        %v4198 = vld [vmem:[%s16 + $0x190] sm:$0xff]
        %v4199 = vld [vmem:[%s16 + $0x198] sm:$0xff]
        %v4200 = vld [vmem:[%s16 + $0x1a0] sm:$0xff]
        %v4201 = vld [vmem:[%s16 + $0x1a8] sm:$0xff]
        %v4202 = vld [vmem:[%s16 + $0x1b0] sm:$0xff]
        %v4203 = vld [vmem:[%s16 + $0x1b8] sm:$0xff]
        %v4204 = vld [vmem:[%s16 + $0x1c0] sm:$0xff]
        %v4205 = vld [vmem:[%s16 + $0x1c8] sm:$0xff]
        %v4206 = vld [vmem:[%s16 + $0x1d0] sm:$0xff]
        %v4207 = vld [vmem:[%s16 + $0x1d8] sm:$0xff]
        %v4208 = vld [vmem:[%s16 + $0x1e0] sm:$0xff]
        %v4209 = vld [vmem:[%s16 + $0x1e8] sm:$0xff]
        %v4210 = vld [vmem:[%s16 + $0x1f0] sm:$0xff]
        %v4211 = vld [vmem:[%s16 + $0x1f8] sm:$0xff]
        %4212 = vmatprep.subr.mxu0 0.0
        %4213 = vmatpush1.msra.mxu0 %v4148
        %4214 = vmatprep.subr.mxu0 0.0
        %4215 = vmatpush1.msra.mxu0 %v4149
        %4216 = vmatprep.subr.mxu0 0.0
        %4217 = vmatpush1.msra.mxu0 %v4150
        %4218 = vmatprep.subr.mxu0 0.0
        %4219 = vmatpush1.msra.mxu0 %v4151
        %4220 = vmatprep.subr.mxu0 0.0
        %4221 = vmatpush1.msra.mxu0 %v4152
        %4222 = vmatprep.subr.mxu0 0.0
        %4223 = vmatpush1.msra.mxu0 %v4153
        %4224 = vmatprep.subr.mxu0 0.0
        %4225 = vmatpush1.msra.mxu0 %v4154
        %4226 = vmatprep.subr.mxu0 0.0
        %4227 = vmatpush1.msra.mxu0 %v4155
        %4228 = vmatprep.subr.mxu0 0.0
        %4229 = vmatpush1.msra.mxu0 %v4156
        %4230 = vmatprep.subr.mxu0 0.0
        %4231 = vmatpush1.msra.mxu0 %v4157
        %4232 = vmatprep.subr.mxu0 0.0
        %4233 = vmatpush1.msra.mxu0 %v4158
        %4234 = vmatprep.subr.mxu0 0.0
        %4235 = vmatpush1.msra.mxu0 %v4159
        %4236 = vmatprep.subr.mxu0 0.0
        %4237 = vmatpush1.msra.mxu0 %v4160
        %4238 = vmatprep.subr.mxu0 0.0
        %4239 = vmatpush1.msra.mxu0 %v4161
        %4240 = vmatprep.subr.mxu0 0.0
        %4241 = vmatpush1.msra.mxu0 %v4162
        %4242 = vmatprep.subr.mxu0 0.0
        %4243 = vmatpush1.msra.mxu0 %v4163
        %4244 = vmatprep.subr.mxu0 0.0
        %4245 = vmatpush1.msra.mxu0 %v4164
        %4246 = vmatprep.subr.mxu0 0.0
        %4247 = vmatpush1.msra.mxu0 %v4165
        %4248 = vmatprep.subr.mxu0 0.0
        %4249 = vmatpush1.msra.mxu0 %v4166
        %4250 = vmatprep.subr.mxu0 0.0
        %4251 = vmatpush1.msra.mxu0 %v4167
        %4252 = vmatprep.subr.mxu0 0.0
        %4253 = vmatpush1.msra.mxu0 %v4168
        %4254 = vmatprep.subr.mxu0 0.0
        %4255 = vmatpush1.msra.mxu0 %v4169
        %4256 = vmatprep.subr.mxu0 0.0
        %4257 = vmatpush1.msra.mxu0 %v4170
        %4258 = vmatprep.subr.mxu0 0.0
        %4259 = vmatpush1.msra.mxu0 %v4171
        %4260 = vmatprep.subr.mxu0 0.0
        %4261 = vmatpush1.msra.mxu0 %v4172
        %4262 = vmatprep.subr.mxu0 0.0
        %4263 = vmatpush1.msra.mxu0 %v4173
        %4264 = vmatprep.subr.mxu0 0.0
        %4265 = vmatpush1.msra.mxu0 %v4174
        %4266 = vmatprep.subr.mxu0 0.0
        %4267 = vmatpush1.msra.mxu0 %v4175
        %4268 = vmatprep.subr.mxu0 0.0
        %4269 = vmatpush1.msra.mxu0 %v4176
        %4270 = vmatprep.subr.mxu0 0.0
        %4271 = vmatpush1.msra.mxu0 %v4177
        %4272 = vmatprep.subr.mxu0 0.0
        %4273 = vmatpush1.msra.mxu0 %v4178
        %4274 = vmatprep.subr.mxu0 0.0
        %4275 = vmatpush1.msra.mxu0 %v4179
        %4276 = vmatprep.mubr.f32.mxu0 %v4075
        %4277 = vmatmul.mubr.f32.gmra.mrb[0].mxu0 %v4073
        %v4278 = vpop.f32.mrb[0].mxu0
        %v4279 = vadd.f32 0.0, %v4278
        %v4280 = vpop.f32.mrb[0].mxu0
        %4281 = vdwg.mxu0
        %4282 = vmatprep.subr.mxu0 0.0
        %4283 = vmatpush1.msra.mxu0 %v4180
        %4284 = vmatprep.subr.mxu0 0.0
        %4285 = vmatpush1.msra.mxu0 %v4181
        %4286 = vmatprep.subr.mxu0 0.0
        %4287 = vmatpush1.msra.mxu0 %v4182
        %4288 = vmatprep.subr.mxu0 0.0
        %4289 = vmatpush1.msra.mxu0 %v4183
        %4290 = vmatprep.subr.mxu0 0.0
        %4291 = vmatpush1.msra.mxu0 %v4184
        %4292 = vmatprep.subr.mxu0 0.0
        %4293 = vmatpush1.msra.mxu0 %v4185
        %4294 = vmatprep.subr.mxu0 0.0
        %4295 = vmatpush1.msra.mxu0 %v4186
        %4296 = vmatprep.subr.mxu0 0.0
        %4297 = vmatpush1.msra.mxu0 %v4187
        %4298 = vmatprep.subr.mxu0 0.0
        %4299 = vmatpush1.msra.mxu0 %v4188
        %4300 = vmatprep.subr.mxu0 0.0
        %4301 = vmatpush1.msra.mxu0 %v4189
        %4302 = vmatprep.subr.mxu0 0.0
        %4303 = vmatpush1.msra.mxu0 %v4190
        %4304 = vmatprep.subr.mxu0 0.0
        %4305 = vmatpush1.msra.mxu0 %v4191
        %4306 = vmatprep.subr.mxu0 0.0
        %4307 = vmatpush1.msra.mxu0 %v4192
        %4308 = vmatprep.subr.mxu0 0.0
        %4309 = vmatpush1.msra.mxu0 %v4193
        %4310 = vmatprep.subr.mxu0 0.0
        %4311 = vmatpush1.msra.mxu0 %v4194
        %4312 = vmatprep.subr.mxu0 0.0
        %4313 = vmatpush1.msra.mxu0 %v4195
        %4314 = vmatprep.subr.mxu0 0.0
        %4315 = vmatpush1.msra.mxu0 %v4196
        %4316 = vmatprep.subr.mxu0 0.0
        %4317 = vmatpush1.msra.mxu0 %v4197
        %4318 = vmatprep.subr.mxu0 0.0
        %4319 = vmatpush1.msra.mxu0 %v4198
        %4320 = vmatprep.subr.mxu0 0.0
        %4321 = vmatpush1.msra.mxu0 %v4199
        %4322 = vmatprep.subr.mxu0 0.0
        %4323 = vmatpush1.msra.mxu0 %v4200
        %4324 = vmatprep.subr.mxu0 0.0
        %4325 = vmatpush1.msra.mxu0 %v4201
        %4326 = vmatprep.subr.mxu0 0.0
        %4327 = vmatpush1.msra.mxu0 %v4202
        %4328 = vmatprep.subr.mxu0 0.0
        %4329 = vmatpush1.msra.mxu0 %v4203
        %4330 = vmatprep.subr.mxu0 0.0
        %4331 = vmatpush1.msra.mxu0 %v4204
        %4332 = vmatprep.subr.mxu0 0.0
        %4333 = vmatpush1.msra.mxu0 %v4205
        %4334 = vmatprep.subr.mxu0 0.0
        %4335 = vmatpush1.msra.mxu0 %v4206
        %4336 = vmatprep.subr.mxu0 0.0
        %4337 = vmatpush1.msra.mxu0 %v4207
        %4338 = vmatprep.subr.mxu0 0.0
        %4339 = vmatpush1.msra.mxu0 %v4208
        %4340 = vmatprep.subr.mxu0 0.0
        %4341 = vmatpush1.msra.mxu0 %v4209
        %4342 = vmatprep.subr.mxu0 0.0
        %4343 = vmatpush1.msra.mxu0 %v4210
        %4344 = vmatprep.subr.mxu0 0.0
        %4345 = vmatpush1.msra.mxu0 %v4211
        %4346 = vmatprep.mubr.f32.mxu0 %v4146
        %4347 = vmatmul.mubr.f32.gmra.mrb[0].mxu0 %v4144
        %v4348 = vpop.f32.mrb[0].mxu0
        %v4349 = vadd.f32 %v4279, %v4348
        %v4350 = vpop.f32.mrb[0].mxu0
        %4351 = vdwg.mxu0
        %v4352 = vld [vmem:[%s886] sm:$0x1]
        %v4353 = vld [vmem:[%s889] sm:$0x1]
        %v4354 = vld [vmem:[%s18] sm:$0xf]
        %v4355 = vld [vmem:[%s27] ss:$8 sm:$0x3]
        %v4358 = vunpack.c.l.s4 1983009808
        %v4359 = vunpack.c.0.s8 %v4358
        %v4360 = vlaneseq
        %v4361 = vshrl.u32 %v4360, 7
        %v4362 = vsub.s32 %v4359, %v4361
        %v4363 = vrot.slane %v4354, %v4362
        %v4364 = vcombine.high %v4363, %v4363
        %v4366 = vlaneseq
        %v4367 = vshrl.u32 %v4366, 7
        %v4368 = vsub.s32 0, %v4367
        %v4369 = vrot.slane %v4355, %v4368
        %v4370 = vlaneseq
        %v4371 = vshrl.u32 %v4370, 7
        %v4372 = vsub.s32 1, %v4371
        %v4373 = vrot.slane %v4355, %v4372
        %vm4376 = vcmask 15360
        %v4378 = vsel %vm4376, %v4352, 0
        %vm4380 = vcmask 1041408
        %v4381 = vsel %vm4380, %v4363, 0
        %v4383 = vsel %vm4380, %v4364, 0
        %4385 = vmatprep.subr.mxu0 %v4383
        %4386 = vmatpush1.msra.mxu0 %v4381
        %4387 = vmatprep.subr.mxu0 0.0
        %4388 = vmatpush1.msra.mxu0 0.0
        %4389 = vmatprep.subr.mxu0 0.0
        %4390 = vmatpush1.msra.mxu0 0.0
        %4391 = vmatprep.subr.mxu0 0.0
        %4392 = vmatpush1.msra.mxu0 0.0
        %4393 = vmatprep.subr.mxu0 0.0
        %4394 = vmatpush1.msra.mxu0 0.0
        %4395 = vmatprep.subr.mxu0 0.0
        %4396 = vmatpush1.msra.mxu0 0.0
        %4397 = vmatprep.subr.mxu0 0.0
        %4398 = vmatpush1.msra.mxu0 0.0
        %4399 = vmatprep.subr.mxu0 0.0
        %4400 = vmatpush1.msra.mxu0 0.0
        %4401 = vmatprep.subr.mxu0 0.0
        %4402 = vmatpush1.msra.mxu0 0.0
        %4403 = vmatprep.subr.mxu0 0.0
        %4404 = vmatpush1.msra.mxu0 0.0
        %4405 = vmatprep.subr.mxu0 0.0
        %4406 = vmatpush1.msra.mxu0 0.0
        %4407 = vmatprep.subr.mxu0 0.0
        %4408 = vmatpush1.msra.mxu0 0.0
        %4409 = vmatprep.subr.mxu0 0.0
        %4410 = vmatpush1.msra.mxu0 0.0
        %4411 = vmatprep.subr.mxu0 0.0
        %4412 = vmatpush1.msra.mxu0 0.0
        %4413 = vmatprep.subr.mxu0 0.0
        %4414 = vmatpush1.msra.mxu0 0.0
        %4415 = vmatprep.subr.mxu0 0.0
        %4416 = vmatpush1.msra.mxu0 0.0
        %4417 = vmatprep.subr.mxu0 0.0
        %4418 = vmatpush1.msra.mxu0 0.0
        %4419 = vmatprep.subr.mxu0 0.0
        %4420 = vmatpush1.msra.mxu0 0.0
        %4421 = vmatprep.subr.mxu0 0.0
        %4422 = vmatpush1.msra.mxu0 0.0
        %4423 = vmatprep.subr.mxu0 0.0
        %4424 = vmatpush1.msra.mxu0 0.0
        %4425 = vmatprep.subr.mxu0 0.0
        %4426 = vmatpush1.msra.mxu0 0.0
        %4427 = vmatprep.subr.mxu0 0.0
        %4428 = vmatpush1.msra.mxu0 0.0
        %4429 = vmatprep.subr.mxu0 0.0
        %4430 = vmatpush1.msra.mxu0 0.0
        %4431 = vmatprep.subr.mxu0 0.0
        %4432 = vmatpush1.msra.mxu0 0.0
        %4433 = vmatprep.subr.mxu0 0.0
        %4434 = vmatpush1.msra.mxu0 0.0
        %4435 = vmatprep.subr.mxu0 0.0
        %4436 = vmatpush1.msra.mxu0 0.0
        %4437 = vmatprep.subr.mxu0 0.0
        %4438 = vmatpush1.msra.mxu0 0.0
        %4439 = vmatprep.subr.mxu0 0.0
        %4440 = vmatpush1.msra.mxu0 0.0
        %4441 = vmatprep.subr.mxu0 0.0
        %4442 = vmatpush1.msra.mxu0 0.0
        %4443 = vmatprep.subr.mxu0 0.0
        %4444 = vmatpush1.msra.mxu0 0.0
        %4445 = vmatprep.subr.mxu0 0.0
        %4446 = vmatpush1.msra.mxu0 0.0
        %4447 = vmatprep.subr.mxu0 0.0
        %4448 = vmatpush1.msra.mxu0 0.0
        %4449 = vmatprep.mubr.f32.mxu0 0.0
        %4450 = vmatmul.mubr.f32.gmra.mrb[0].mxu0 %v4378
        %v4451 = vpop.f32.mrb[0].mxu0
        %v4452 = vadd.f32 %v4369, %v4451
        %v4453 = vpop.f32.mrb[0].mxu0
        %v4454 = vadd.f32 %v4373, %v4453
        %4455 = vdwg.mxu0
        %v4456 = vmax.f32 %v4452, 0.0
        %v4457 = vmax.f32 %v4454, 0.0
        %v4458 = vld [vmem:[%s19] sm:$0xff]
        %v4459 = vld [vmem:[%s19 + $0x8] sm:$0xff]
        %v4460 = vld [vmem:[%s19 + $0x10] sm:$0xff]
        %v4461 = vld [vmem:[%s19 + $0x18] sm:$0xff]
        %v4462 = vld [vmem:[%s19 + $0x20] sm:$0xff]
        %v4463 = vld [vmem:[%s19 + $0x28] sm:$0xff]
        %v4464 = vld [vmem:[%s19 + $0x30] sm:$0xff]
        %v4465 = vld [vmem:[%s19 + $0x38] sm:$0xff]
        %v4466 = vld [vmem:[%s19 + $0x40] sm:$0xff]
        %v4467 = vld [vmem:[%s19 + $0x48] sm:$0xff]
        %v4468 = vld [vmem:[%s19 + $0x50] sm:$0xff]
        %v4469 = vld [vmem:[%s19 + $0x58] sm:$0xff]
        %v4470 = vld [vmem:[%s19 + $0x60] sm:$0xff]
        %v4471 = vld [vmem:[%s19 + $0x68] sm:$0xff]
        %v4472 = vld [vmem:[%s19 + $0x70] sm:$0xff]
        %v4473 = vld [vmem:[%s19 + $0x78] sm:$0xff]
        %v4474 = vld [vmem:[%s19 + $0x80] sm:$0xff]
        %v4475 = vld [vmem:[%s19 + $0x88] sm:$0xff]
        %v4476 = vld [vmem:[%s19 + $0x90] sm:$0xff]
        %v4477 = vld [vmem:[%s19 + $0x98] sm:$0xff]
        %v4478 = vld [vmem:[%s19 + $0xa0] sm:$0xff]
        %v4479 = vld [vmem:[%s19 + $0xa8] sm:$0xff]
        %v4480 = vld [vmem:[%s19 + $0xb0] sm:$0xff]
        %v4481 = vld [vmem:[%s19 + $0xb8] sm:$0xff]
        %v4482 = vld [vmem:[%s19 + $0xc0] sm:$0xff]
        %v4483 = vld [vmem:[%s19 + $0xc8] sm:$0xff]
        %v4484 = vld [vmem:[%s19 + $0xd0] sm:$0xff]
        %v4485 = vld [vmem:[%s19 + $0xd8] sm:$0xff]
        %v4486 = vld [vmem:[%s19 + $0xe0] sm:$0xff]
        %v4487 = vld [vmem:[%s19 + $0xe8] sm:$0xff]
        %v4488 = vld [vmem:[%s19 + $0xf0] sm:$0xff]
        %v4489 = vld [vmem:[%s19 + $0xf8] sm:$0xff]
        %v4490 = vld [vmem:[%s27 + $0x1] ss:$0 sm:$0xff]
        %4491 = vmatprep.subr.mxu0 0.0
        %4492 = vmatpush1.msra.mxu0 %v4458
        %4493 = vmatprep.subr.mxu0 0.0
        %4494 = vmatpush1.msra.mxu0 %v4459
        %4495 = vmatprep.subr.mxu0 0.0
        %4496 = vmatpush1.msra.mxu0 %v4460
        %4497 = vmatprep.subr.mxu0 0.0
        %4498 = vmatpush1.msra.mxu0 %v4461
        %4499 = vmatprep.subr.mxu0 0.0
        %4500 = vmatpush1.msra.mxu0 %v4462
        %4501 = vmatprep.subr.mxu0 0.0
        %4502 = vmatpush1.msra.mxu0 %v4463
        %4503 = vmatprep.subr.mxu0 0.0
        %4504 = vmatpush1.msra.mxu0 %v4464
        %4505 = vmatprep.subr.mxu0 0.0
        %4506 = vmatpush1.msra.mxu0 %v4465
        %4507 = vmatprep.subr.mxu0 0.0
        %4508 = vmatpush1.msra.mxu0 %v4466
        %4509 = vmatprep.subr.mxu0 0.0
        %4510 = vmatpush1.msra.mxu0 %v4467
        %4511 = vmatprep.subr.mxu0 0.0
        %4512 = vmatpush1.msra.mxu0 %v4468
        %4513 = vmatprep.subr.mxu0 0.0
        %4514 = vmatpush1.msra.mxu0 %v4469
        %4515 = vmatprep.subr.mxu0 0.0
        %4516 = vmatpush1.msra.mxu0 %v4470
        %4517 = vmatprep.subr.mxu0 0.0
        %4518 = vmatpush1.msra.mxu0 %v4471
        %4519 = vmatprep.subr.mxu0 0.0
        %4520 = vmatpush1.msra.mxu0 %v4472
        %4521 = vmatprep.subr.mxu0 0.0
        %4522 = vmatpush1.msra.mxu0 %v4473
        %4523 = vmatprep.subr.mxu0 0.0
        %4524 = vmatpush1.msra.mxu0 %v4474
        %4525 = vmatprep.subr.mxu0 0.0
        %4526 = vmatpush1.msra.mxu0 %v4475
        %4527 = vmatprep.subr.mxu0 0.0
        %4528 = vmatpush1.msra.mxu0 %v4476
        %4529 = vmatprep.subr.mxu0 0.0
        %4530 = vmatpush1.msra.mxu0 %v4477
        %4531 = vmatprep.subr.mxu0 0.0
        %4532 = vmatpush1.msra.mxu0 %v4478
        %4533 = vmatprep.subr.mxu0 0.0
        %4534 = vmatpush1.msra.mxu0 %v4479
        %4535 = vmatprep.subr.mxu0 0.0
        %4536 = vmatpush1.msra.mxu0 %v4480
        %4537 = vmatprep.subr.mxu0 0.0
        %4538 = vmatpush1.msra.mxu0 %v4481
        %4539 = vmatprep.subr.mxu0 0.0
        %4540 = vmatpush1.msra.mxu0 %v4482
        %4541 = vmatprep.subr.mxu0 0.0
        %4542 = vmatpush1.msra.mxu0 %v4483
        %4543 = vmatprep.subr.mxu0 0.0
        %4544 = vmatpush1.msra.mxu0 %v4484
        %4545 = vmatprep.subr.mxu0 0.0
        %4546 = vmatpush1.msra.mxu0 %v4485
        %4547 = vmatprep.subr.mxu0 0.0
        %4548 = vmatpush1.msra.mxu0 %v4486
        %4549 = vmatprep.subr.mxu0 0.0
        %4550 = vmatpush1.msra.mxu0 %v4487
        %4551 = vmatprep.subr.mxu0 0.0
        %4552 = vmatpush1.msra.mxu0 %v4488
        %4553 = vmatprep.subr.mxu0 0.0
        %4554 = vmatpush1.msra.mxu0 %v4489
        %4555 = vmatprep.mubr.f32.mxu0 %v4457
        %4556 = vmatmul.mubr.f32.gmra.mrb[0].mxu0 %v4456
        %v4557 = vpop.f32.mrb[0].mxu0
        %v4558 = vadd.f32 %v4490, %v4557
        %v4559 = vpop.f32.mrb[0].mxu0
        %4560 = vdwg.mxu0
        %v4561 = vld [vmem:[%s20] sm:$0xff]
        %v4562 = vld [vmem:[%s20 + $0x8] sm:$0xff]
        %v4563 = vld [vmem:[%s20 + $0x10] sm:$0xff]
        %v4564 = vld [vmem:[%s20 + $0x18] sm:$0xff]
        %v4565 = vld [vmem:[%s20 + $0x20] sm:$0xff]
        %v4566 = vld [vmem:[%s27 + $0x2] ss:$0 sm:$0xff]
        %vm4567 = vcmask 326656
        %v4569 = vsel %vm4567, %v4353, 0
        %4571 = vmatprep.subr.mxu0 0.0
        %4572 = vmatpush1.msra.mxu0 %v4561
        %4573 = vmatprep.subr.mxu0 0.0
        %4574 = vmatpush1.msra.mxu0 %v4562
        %4575 = vmatprep.subr.mxu0 0.0
        %4576 = vmatpush1.msra.mxu0 %v4563
        %4577 = vmatprep.subr.mxu0 0.0
        %4578 = vmatpush1.msra.mxu0 %v4564
        %4579 = vmatprep.subr.mxu0 0.0
        %4580 = vmatpush1.msra.mxu0 %v4565
        %4581 = vmatprep.subr.mxu0 0.0
        %4582 = vmatpush1.msra.mxu0 0.0
        %4583 = vmatprep.subr.mxu0 0.0
        %4584 = vmatpush1.msra.mxu0 0.0
        %4585 = vmatprep.subr.mxu0 0.0
        %4586 = vmatpush1.msra.mxu0 0.0
        %4587 = vmatprep.subr.mxu0 0.0
        %4588 = vmatpush1.msra.mxu0 0.0
        %4589 = vmatprep.subr.mxu0 0.0
        %4590 = vmatpush1.msra.mxu0 0.0
        %4591 = vmatprep.subr.mxu0 0.0
        %4592 = vmatpush1.msra.mxu0 0.0
        %4593 = vmatprep.subr.mxu0 0.0
        %4594 = vmatpush1.msra.mxu0 0.0
        %4595 = vmatprep.subr.mxu0 0.0
        %4596 = vmatpush1.msra.mxu0 0.0
        %4597 = vmatprep.subr.mxu0 0.0
        %4598 = vmatpush1.msra.mxu0 0.0
        %4599 = vmatprep.subr.mxu0 0.0
        %4600 = vmatpush1.msra.mxu0 0.0
        %4601 = vmatprep.subr.mxu0 0.0
        %4602 = vmatpush1.msra.mxu0 0.0
        %4603 = vmatprep.subr.mxu0 0.0
        %4604 = vmatpush1.msra.mxu0 0.0
        %4605 = vmatprep.subr.mxu0 0.0
        %4606 = vmatpush1.msra.mxu0 0.0
        %4607 = vmatprep.subr.mxu0 0.0
        %4608 = vmatpush1.msra.mxu0 0.0
        %4609 = vmatprep.subr.mxu0 0.0
        %4610 = vmatpush1.msra.mxu0 0.0
        %4611 = vmatprep.subr.mxu0 0.0
        %4612 = vmatpush1.msra.mxu0 0.0
        %4613 = vmatprep.subr.mxu0 0.0
        %4614 = vmatpush1.msra.mxu0 0.0
        %4615 = vmatprep.subr.mxu0 0.0
        %4616 = vmatpush1.msra.mxu0 0.0
        %4617 = vmatprep.subr.mxu0 0.0
        %4618 = vmatpush1.msra.mxu0 0.0
        %4619 = vmatprep.subr.mxu0 0.0
        %4620 = vmatpush1.msra.mxu0 0.0
        %4621 = vmatprep.subr.mxu0 0.0
        %4622 = vmatpush1.msra.mxu0 0.0
        %4623 = vmatprep.subr.mxu0 0.0
        %4624 = vmatpush1.msra.mxu0 0.0
        %4625 = vmatprep.subr.mxu0 0.0
        %4626 = vmatpush1.msra.mxu0 0.0
        %4627 = vmatprep.subr.mxu0 0.0
        %4628 = vmatpush1.msra.mxu0 0.0
        %4629 = vmatprep.subr.mxu0 0.0
        %4630 = vmatpush1.msra.mxu0 0.0
        %4631 = vmatprep.subr.mxu0 0.0
        %4632 = vmatpush1.msra.mxu0 0.0
        %4633 = vmatprep.subr.mxu0 0.0
        %4634 = vmatpush1.msra.mxu0 0.0
        %4635 = vmatprep.mubr.f32.mxu0 0.0
        %4636 = vmatmul.mubr.f32.gmra.mrb[0].mxu0 %v4569
        %v4637 = vpop.f32.mrb[0].mxu0
        %v4638 = vadd.f32 %v4566, %v4637
        %v4639 = vpop.f32.mrb[0].mxu0
        %4640 = vdwg.mxu0
        %v4641 = vmax.f32 %v4638, 0.0
        %v4642 = vld [vmem:[%s21] sm:$0xff]
        %v4643 = vld [vmem:[%s21 + $0x8] sm:$0xff]
        %v4644 = vld [vmem:[%s21 + $0x10] sm:$0xff]
        %v4645 = vld [vmem:[%s21 + $0x18] sm:$0xff]
        %v4646 = vld [vmem:[%s21 + $0x20] sm:$0xff]
        %v4647 = vld [vmem:[%s21 + $0x28] sm:$0xff]
        %v4648 = vld [vmem:[%s21 + $0x30] sm:$0xff]
        %v4649 = vld [vmem:[%s21 + $0x38] sm:$0xff]
        %v4650 = vld [vmem:[%s27 + $0x3] ss:$0 sm:$0xff]
        %v4652 = vsel %vm1331, %v4641, 0
        %4654 = vmatprep.subr.mxu0 0.0
        %4655 = vmatpush1.msra.mxu0 %v4642
        %4656 = vmatprep.subr.mxu0 0.0
        %4657 = vmatpush1.msra.mxu0 %v4643
        %4658 = vmatprep.subr.mxu0 0.0
        %4659 = vmatpush1.msra.mxu0 %v4644
        %4660 = vmatprep.subr.mxu0 0.0
        %4661 = vmatpush1.msra.mxu0 %v4645
        %4662 = vmatprep.subr.mxu0 0.0
        %4663 = vmatpush1.msra.mxu0 %v4646
        %4664 = vmatprep.subr.mxu0 0.0
        %4665 = vmatpush1.msra.mxu0 %v4647
        %4666 = vmatprep.subr.mxu0 0.0
        %4667 = vmatpush1.msra.mxu0 %v4648
        %4668 = vmatprep.subr.mxu0 0.0
        %4669 = vmatpush1.msra.mxu0 %v4649
        %4670 = vmatprep.subr.mxu0 0.0
        %4671 = vmatpush1.msra.mxu0 0.0
        %4672 = vmatprep.subr.mxu0 0.0
        %4673 = vmatpush1.msra.mxu0 0.0
        %4674 = vmatprep.subr.mxu0 0.0
        %4675 = vmatpush1.msra.mxu0 0.0
        %4676 = vmatprep.subr.mxu0 0.0
        %4677 = vmatpush1.msra.mxu0 0.0
        %4678 = vmatprep.subr.mxu0 0.0
        %4679 = vmatpush1.msra.mxu0 0.0
        %4680 = vmatprep.subr.mxu0 0.0
        %4681 = vmatpush1.msra.mxu0 0.0
        %4682 = vmatprep.subr.mxu0 0.0
        %4683 = vmatpush1.msra.mxu0 0.0
        %4684 = vmatprep.subr.mxu0 0.0
        %4685 = vmatpush1.msra.mxu0 0.0
        %4686 = vmatprep.subr.mxu0 0.0
        %4687 = vmatpush1.msra.mxu0 0.0
        %4688 = vmatprep.subr.mxu0 0.0
        %4689 = vmatpush1.msra.mxu0 0.0
        %4690 = vmatprep.subr.mxu0 0.0
        %4691 = vmatpush1.msra.mxu0 0.0
        %4692 = vmatprep.subr.mxu0 0.0
        %4693 = vmatpush1.msra.mxu0 0.0
        %4694 = vmatprep.subr.mxu0 0.0
        %4695 = vmatpush1.msra.mxu0 0.0
        %4696 = vmatprep.subr.mxu0 0.0
        %4697 = vmatpush1.msra.mxu0 0.0
        %4698 = vmatprep.subr.mxu0 0.0
        %4699 = vmatpush1.msra.mxu0 0.0
        %4700 = vmatprep.subr.mxu0 0.0
        %4701 = vmatpush1.msra.mxu0 0.0
        %4702 = vmatprep.subr.mxu0 0.0
        %4703 = vmatpush1.msra.mxu0 0.0
        %4704 = vmatprep.subr.mxu0 0.0
        %4705 = vmatpush1.msra.mxu0 0.0
        %4706 = vmatprep.subr.mxu0 0.0
        %4707 = vmatpush1.msra.mxu0 0.0
        %4708 = vmatprep.subr.mxu0 0.0
        %4709 = vmatpush1.msra.mxu0 0.0
        %4710 = vmatprep.subr.mxu0 0.0
        %4711 = vmatpush1.msra.mxu0 0.0
        %4712 = vmatprep.subr.mxu0 0.0
        %4713 = vmatpush1.msra.mxu0 0.0
        %4714 = vmatprep.subr.mxu0 0.0
        %4715 = vmatpush1.msra.mxu0 0.0
        %4716 = vmatprep.subr.mxu0 0.0
        %4717 = vmatpush1.msra.mxu0 0.0
        %4718 = vmatprep.mubr.f32.mxu0 0.0
        %4719 = vmatmul.mubr.f32.gmra.mrb[0].mxu0 %v4652
        %v4720 = vpop.f32.mrb[0].mxu0
        %v4721 = vadd.f32 %v4650, %v4720
        %v4722 = vpop.f32.mrb[0].mxu0
        %4723 = vdwg.mxu0
        %v4724 = vadd.f32 %v2458, %v4349
        %v4725 = vld [vmem:[%s22] sm:$0xff]
        %v4726 = vld [vmem:[%s22 + $0x8] sm:$0xff]
        %v4727 = vld [vmem:[%s22 + $0x10] sm:$0xff]
        %v4728 = vld [vmem:[%s22 + $0x18] sm:$0xff]
        %v4729 = vld [vmem:[%s22 + $0x20] sm:$0xff]
        %v4730 = vld [vmem:[%s22 + $0x28] sm:$0xff]
        %v4731 = vld [vmem:[%s22 + $0x30] sm:$0xff]
        %v4732 = vld [vmem:[%s22 + $0x38] sm:$0xff]
        %v4733 = vld [vmem:[%s22 + $0x40] sm:$0xff]
        %v4734 = vld [vmem:[%s22 + $0x48] sm:$0xff]
        %v4735 = vld [vmem:[%s22 + $0x50] sm:$0xff]
        %v4736 = vld [vmem:[%s22 + $0x58] sm:$0xff]
        %v4737 = vld [vmem:[%s22 + $0x60] sm:$0xff]
        %v4738 = vld [vmem:[%s22 + $0x68] sm:$0xff]
        %v4739 = vld [vmem:[%s22 + $0x70] sm:$0xff]
        %v4740 = vld [vmem:[%s22 + $0x78] sm:$0xff]
        %4741 = vmatprep.subr.mxu0 0.0
        %4742 = vmatpush1.msra.mxu0 %v4725
        %4743 = vmatprep.subr.mxu0 0.0
        %4744 = vmatpush1.msra.mxu0 %v4726
        %4745 = vmatprep.subr.mxu0 0.0
        %4746 = vmatpush1.msra.mxu0 %v4727
        %4747 = vmatprep.subr.mxu0 0.0
        %4748 = vmatpush1.msra.mxu0 %v4728
        %4749 = vmatprep.subr.mxu0 0.0
        %4750 = vmatpush1.msra.mxu0 %v4729
        %4751 = vmatprep.subr.mxu0 0.0
        %4752 = vmatpush1.msra.mxu0 %v4730
        %4753 = vmatprep.subr.mxu0 0.0
        %4754 = vmatpush1.msra.mxu0 %v4731
        %4755 = vmatprep.subr.mxu0 0.0
        %4756 = vmatpush1.msra.mxu0 %v4732
        %4757 = vmatprep.subr.mxu0 0.0
        %4758 = vmatpush1.msra.mxu0 %v4733
        %4759 = vmatprep.subr.mxu0 0.0
        %4760 = vmatpush1.msra.mxu0 %v4734
        %4761 = vmatprep.subr.mxu0 0.0
        %4762 = vmatpush1.msra.mxu0 %v4735
        %4763 = vmatprep.subr.mxu0 0.0
        %4764 = vmatpush1.msra.mxu0 %v4736
        %4765 = vmatprep.subr.mxu0 0.0
        %4766 = vmatpush1.msra.mxu0 %v4737
        %4767 = vmatprep.subr.mxu0 0.0
        %4768 = vmatpush1.msra.mxu0 %v4738
        %4769 = vmatprep.subr.mxu0 0.0
        %4770 = vmatpush1.msra.mxu0 %v4739
        %4771 = vmatprep.subr.mxu0 0.0
        %4772 = vmatpush1.msra.mxu0 %v4740
        %4773 = vmatprep.subr.mxu0 0.0
        %4774 = vmatpush1.msra.mxu0 0.0
        %4775 = vmatprep.subr.mxu0 0.0
        %4776 = vmatpush1.msra.mxu0 0.0
        %4777 = vmatprep.subr.mxu0 0.0
        %4778 = vmatpush1.msra.mxu0 0.0
        %4779 = vmatprep.subr.mxu0 0.0
        %4780 = vmatpush1.msra.mxu0 0.0
        %4781 = vmatprep.subr.mxu0 0.0
        %4782 = vmatpush1.msra.mxu0 0.0
        %4783 = vmatprep.subr.mxu0 0.0
        %4784 = vmatpush1.msra.mxu0 0.0
        %4785 = vmatprep.subr.mxu0 0.0
        %4786 = vmatpush1.msra.mxu0 0.0
        %4787 = vmatprep.subr.mxu0 0.0
        %4788 = vmatpush1.msra.mxu0 0.0
        %4789 = vmatprep.subr.mxu0 0.0
        %4790 = vmatpush1.msra.mxu0 0.0
        %4791 = vmatprep.subr.mxu0 0.0
        %4792 = vmatpush1.msra.mxu0 0.0
        %4793 = vmatprep.subr.mxu0 0.0
        %4794 = vmatpush1.msra.mxu0 0.0
        %4795 = vmatprep.subr.mxu0 0.0
        %4796 = vmatpush1.msra.mxu0 0.0
        %4797 = vmatprep.subr.mxu0 0.0
        %4798 = vmatpush1.msra.mxu0 0.0
        %4799 = vmatprep.subr.mxu0 0.0
        %4800 = vmatpush1.msra.mxu0 0.0
        %4801 = vmatprep.subr.mxu0 0.0
        %4802 = vmatpush1.msra.mxu0 0.0
        %4803 = vmatprep.subr.mxu0 0.0
        %4804 = vmatpush1.msra.mxu0 0.0
        %4805 = vmatprep.mubr.f32.mxu0 0.0
        %4806 = vmatmul.mubr.f32.gmra.mrb[0].mxu0 %v4558
        %v4807 = vpop.f32.mrb[0].mxu0
        %v4808 = vadd.f32 0.0, %v4807
        %v4809 = vpop.f32.mrb[0].mxu0
        %4810 = vdwg.mxu0
        %v4811 = vadd.f32 %v4724, %v4808
        %v4812 = vld [vmem:[%s23] sm:$0xff]
        %v4813 = vld [vmem:[%s23 + $0x8] sm:$0xff]
        %v4814 = vld [vmem:[%s23 + $0x10] sm:$0xff]
        %v4815 = vld [vmem:[%s23 + $0x18] sm:$0xff]
        %v4816 = vld [vmem:[%s23 + $0x20] sm:$0xff]
        %v4817 = vld [vmem:[%s23 + $0x28] sm:$0xff]
        %v4818 = vld [vmem:[%s23 + $0x30] sm:$0xff]
        %v4819 = vld [vmem:[%s23 + $0x38] sm:$0xff]
        %v4820 = vld [vmem:[%s23 + $0x40] sm:$0xff]
        %v4821 = vld [vmem:[%s23 + $0x48] sm:$0xff]
        %v4822 = vld [vmem:[%s23 + $0x50] sm:$0xff]
        %v4823 = vld [vmem:[%s23 + $0x58] sm:$0xff]
        %v4824 = vld [vmem:[%s23 + $0x60] sm:$0xff]
        %v4825 = vld [vmem:[%s23 + $0x68] sm:$0xff]
        %v4826 = vld [vmem:[%s23 + $0x70] sm:$0xff]
        %v4827 = vld [vmem:[%s23 + $0x78] sm:$0xff]
        %4828 = vmatprep.subr.mxu0 0.0
        %4829 = vmatpush1.msra.mxu0 %v4812
        %4830 = vmatprep.subr.mxu0 0.0
        %4831 = vmatpush1.msra.mxu0 %v4813
        %4832 = vmatprep.subr.mxu0 0.0
        %4833 = vmatpush1.msra.mxu0 %v4814
        %4834 = vmatprep.subr.mxu0 0.0
        %4835 = vmatpush1.msra.mxu0 %v4815
        %4836 = vmatprep.subr.mxu0 0.0
        %4837 = vmatpush1.msra.mxu0 %v4816
        %4838 = vmatprep.subr.mxu0 0.0
        %4839 = vmatpush1.msra.mxu0 %v4817
        %4840 = vmatprep.subr.mxu0 0.0
        %4841 = vmatpush1.msra.mxu0 %v4818
        %4842 = vmatprep.subr.mxu0 0.0
        %4843 = vmatpush1.msra.mxu0 %v4819
        %4844 = vmatprep.subr.mxu0 0.0
        %4845 = vmatpush1.msra.mxu0 %v4820
        %4846 = vmatprep.subr.mxu0 0.0
        %4847 = vmatpush1.msra.mxu0 %v4821
        %4848 = vmatprep.subr.mxu0 0.0
        %4849 = vmatpush1.msra.mxu0 %v4822
        %4850 = vmatprep.subr.mxu0 0.0
        %4851 = vmatpush1.msra.mxu0 %v4823
        %4852 = vmatprep.subr.mxu0 0.0
        %4853 = vmatpush1.msra.mxu0 %v4824
        %4854 = vmatprep.subr.mxu0 0.0
        %4855 = vmatpush1.msra.mxu0 %v4825
        %4856 = vmatprep.subr.mxu0 0.0
        %4857 = vmatpush1.msra.mxu0 %v4826
        %4858 = vmatprep.subr.mxu0 0.0
        %4859 = vmatpush1.msra.mxu0 %v4827
        %4860 = vmatprep.subr.mxu0 0.0
        %4861 = vmatpush1.msra.mxu0 0.0
        %4862 = vmatprep.subr.mxu0 0.0
        %4863 = vmatpush1.msra.mxu0 0.0
        %4864 = vmatprep.subr.mxu0 0.0
        %4865 = vmatpush1.msra.mxu0 0.0
        %4866 = vmatprep.subr.mxu0 0.0
        %4867 = vmatpush1.msra.mxu0 0.0
        %4868 = vmatprep.subr.mxu0 0.0
        %4869 = vmatpush1.msra.mxu0 0.0
        %4870 = vmatprep.subr.mxu0 0.0
        %4871 = vmatpush1.msra.mxu0 0.0
        %4872 = vmatprep.subr.mxu0 0.0
        %4873 = vmatpush1.msra.mxu0 0.0
        %4874 = vmatprep.subr.mxu0 0.0
        %4875 = vmatpush1.msra.mxu0 0.0
        %4876 = vmatprep.subr.mxu0 0.0
        %4877 = vmatpush1.msra.mxu0 0.0
        %4878 = vmatprep.subr.mxu0 0.0
        %4879 = vmatpush1.msra.mxu0 0.0
        %4880 = vmatprep.subr.mxu0 0.0
        %4881 = vmatpush1.msra.mxu0 0.0
        %4882 = vmatprep.subr.mxu0 0.0
        %4883 = vmatpush1.msra.mxu0 0.0
        %4884 = vmatprep.subr.mxu0 0.0
        %4885 = vmatpush1.msra.mxu0 0.0
        %4886 = vmatprep.subr.mxu0 0.0
        %4887 = vmatpush1.msra.mxu0 0.0
        %4888 = vmatprep.subr.mxu0 0.0
        %4889 = vmatpush1.msra.mxu0 0.0
        %4890 = vmatprep.subr.mxu0 0.0
        %4891 = vmatpush1.msra.mxu0 0.0
        %4892 = vmatprep.mubr.f32.mxu0 0.0
        %4893 = vmatmul.mubr.f32.gmra.mrb[0].mxu0 %v4721
        %v4894 = vpop.f32.mrb[0].mxu0
        %v4895 = vadd.f32 0.0, %v4894
        %v4896 = vpop.f32.mrb[0].mxu0
        %4897 = vdwg.mxu0
        %v4898 = vadd.f32 %v4811, %v4895
        %v4899 = vld [vmem:[%s27 + $0x4] ss:$0 sm:$0xff]
        %v4900 = vadd.f32 %v4898, %v4899
        %v4901 = vmax.f32 %v4900, 0.0
        %v4902 = vld [vmem:[%s24] sm:$0xff]
        %v4903 = vld [vmem:[%s24 + $0x8] sm:$0xff]
        %v4904 = vld [vmem:[%s24 + $0x10] sm:$0xff]
        %v4905 = vld [vmem:[%s24 + $0x18] sm:$0xff]
        %v4906 = vld [vmem:[%s24 + $0x20] sm:$0xff]
        %v4907 = vld [vmem:[%s24 + $0x28] sm:$0xff]
        %v4908 = vld [vmem:[%s24 + $0x30] sm:$0xff]
        %v4909 = vld [vmem:[%s24 + $0x38] sm:$0xff]
        %v4910 = vld [vmem:[%s24 + $0x40] sm:$0xff]
        %v4911 = vld [vmem:[%s24 + $0x48] sm:$0xff]
        %v4912 = vld [vmem:[%s24 + $0x50] sm:$0xff]
        %v4913 = vld [vmem:[%s24 + $0x58] sm:$0xff]
        %v4914 = vld [vmem:[%s24 + $0x60] sm:$0xff]
        %v4915 = vld [vmem:[%s24 + $0x68] sm:$0xff]
        %v4916 = vld [vmem:[%s24 + $0x70] sm:$0xff]
        %v4917 = vld [vmem:[%s24 + $0x78] sm:$0xff]
        %v4918 = vld [vmem:[%s27 + $0x5] ss:$0 sm:$0xff]
        %4919 = vmatprep.subr.mxu0 0.0
        %4920 = vmatpush1.msra.mxu0 %v4902
        %4921 = vmatprep.subr.mxu0 0.0
        %4922 = vmatpush1.msra.mxu0 %v4903
        %4923 = vmatprep.subr.mxu0 0.0
        %4924 = vmatpush1.msra.mxu0 %v4904
        %4925 = vmatprep.subr.mxu0 0.0
        %4926 = vmatpush1.msra.mxu0 %v4905
        %4927 = vmatprep.subr.mxu0 0.0
        %4928 = vmatpush1.msra.mxu0 %v4906
        %4929 = vmatprep.subr.mxu0 0.0
        %4930 = vmatpush1.msra.mxu0 %v4907
        %4931 = vmatprep.subr.mxu0 0.0
        %4932 = vmatpush1.msra.mxu0 %v4908
        %4933 = vmatprep.subr.mxu0 0.0
        %4934 = vmatpush1.msra.mxu0 %v4909
        %4935 = vmatprep.subr.mxu0 0.0
        %4936 = vmatpush1.msra.mxu0 %v4910
        %4937 = vmatprep.subr.mxu0 0.0
        %4938 = vmatpush1.msra.mxu0 %v4911
        %4939 = vmatprep.subr.mxu0 0.0
        %4940 = vmatpush1.msra.mxu0 %v4912
        %4941 = vmatprep.subr.mxu0 0.0
        %4942 = vmatpush1.msra.mxu0 %v4913
        %4943 = vmatprep.subr.mxu0 0.0
        %4944 = vmatpush1.msra.mxu0 %v4914
        %4945 = vmatprep.subr.mxu0 0.0
        %4946 = vmatpush1.msra.mxu0 %v4915
        %4947 = vmatprep.subr.mxu0 0.0
        %4948 = vmatpush1.msra.mxu0 %v4916
        %4949 = vmatprep.subr.mxu0 0.0
        %4950 = vmatpush1.msra.mxu0 %v4917
        %4951 = vmatprep.subr.mxu0 0.0
        %4952 = vmatpush1.msra.mxu0 0.0
        %4953 = vmatprep.subr.mxu0 0.0
        %4954 = vmatpush1.msra.mxu0 0.0
        %4955 = vmatprep.subr.mxu0 0.0
        %4956 = vmatpush1.msra.mxu0 0.0
        %4957 = vmatprep.subr.mxu0 0.0
        %4958 = vmatpush1.msra.mxu0 0.0
        %4959 = vmatprep.subr.mxu0 0.0
        %4960 = vmatpush1.msra.mxu0 0.0
        %4961 = vmatprep.subr.mxu0 0.0
        %4962 = vmatpush1.msra.mxu0 0.0
        %4963 = vmatprep.subr.mxu0 0.0
        %4964 = vmatpush1.msra.mxu0 0.0
        %4965 = vmatprep.subr.mxu0 0.0
        %4966 = vmatpush1.msra.mxu0 0.0
        %4967 = vmatprep.subr.mxu0 0.0
        %4968 = vmatpush1.msra.mxu0 0.0
        %4969 = vmatprep.subr.mxu0 0.0
        %4970 = vmatpush1.msra.mxu0 0.0
        %4971 = vmatprep.subr.mxu0 0.0
        %4972 = vmatpush1.msra.mxu0 0.0
        %4973 = vmatprep.subr.mxu0 0.0
        %4974 = vmatpush1.msra.mxu0 0.0
        %4975 = vmatprep.subr.mxu0 0.0
        %4976 = vmatpush1.msra.mxu0 0.0
        %4977 = vmatprep.subr.mxu0 0.0
        %4978 = vmatpush1.msra.mxu0 0.0
        %4979 = vmatprep.subr.mxu0 0.0
        %4980 = vmatpush1.msra.mxu0 0.0
        %4981 = vmatprep.subr.mxu0 0.0
        %4982 = vmatpush1.msra.mxu0 0.0
        %4983 = vmatprep.mubr.f32.mxu0 0.0
        %4984 = vmatmul.mubr.f32.gmra.mrb[0].mxu0 %v4901
        %v4985 = vpop.f32.mrb[0].mxu0
        %v4986 = vadd.f32 %v4918, %v4985
        %v4987 = vpop.f32.mrb[0].mxu0
        %4988 = vdwg.mxu0
        %v4989 = vmax.f32 %v4986, 0.0
        %v4990 = vld [vmem:[%s25] sm:$0xff]
        %v4991 = vld [vmem:[%s25 + $0x8] sm:$0xff]
        %v4992 = vld [vmem:[%s25 + $0x10] sm:$0xff]
        %v4993 = vld [vmem:[%s25 + $0x18] sm:$0xff]
        %v4994 = vld [vmem:[%s25 + $0x20] sm:$0xff]
        %v4995 = vld [vmem:[%s25 + $0x28] sm:$0xff]
        %v4996 = vld [vmem:[%s25 + $0x30] sm:$0xff]
        %v4997 = vld [vmem:[%s25 + $0x38] sm:$0xff]
        %v4998 = vld [vmem:[%s27 + $0x6] ss:$0 sm:$0xff]
        %v5000 = vsel %vm1331, %v4989, 0
        %5002 = vmatprep.subr.mxu0 0.0
        %5003 = vmatpush1.msra.mxu0 %v4990
        %5004 = vmatprep.subr.mxu0 0.0
        %5005 = vmatpush1.msra.mxu0 %v4991
        %5006 = vmatprep.subr.mxu0 0.0
        %5007 = vmatpush1.msra.mxu0 %v4992
        %5008 = vmatprep.subr.mxu0 0.0
        %5009 = vmatpush1.msra.mxu0 %v4993
        %5010 = vmatprep.subr.mxu0 0.0
        %5011 = vmatpush1.msra.mxu0 %v4994
        %5012 = vmatprep.subr.mxu0 0.0
        %5013 = vmatpush1.msra.mxu0 %v4995
        %5014 = vmatprep.subr.mxu0 0.0
        %5015 = vmatpush1.msra.mxu0 %v4996
        %5016 = vmatprep.subr.mxu0 0.0
        %5017 = vmatpush1.msra.mxu0 %v4997
        %5018 = vmatprep.subr.mxu0 0.0
        %5019 = vmatpush1.msra.mxu0 0.0
        %5020 = vmatprep.subr.mxu0 0.0
        %5021 = vmatpush1.msra.mxu0 0.0
        %5022 = vmatprep.subr.mxu0 0.0
        %5023 = vmatpush1.msra.mxu0 0.0
        %5024 = vmatprep.subr.mxu0 0.0
        %5025 = vmatpush1.msra.mxu0 0.0
        %5026 = vmatprep.subr.mxu0 0.0
        %5027 = vmatpush1.msra.mxu0 0.0
        %5028 = vmatprep.subr.mxu0 0.0
        %5029 = vmatpush1.msra.mxu0 0.0
        %5030 = vmatprep.subr.mxu0 0.0
        %5031 = vmatpush1.msra.mxu0 0.0
        %5032 = vmatprep.subr.mxu0 0.0
        %5033 = vmatpush1.msra.mxu0 0.0
        %5034 = vmatprep.subr.mxu0 0.0
        %5035 = vmatpush1.msra.mxu0 0.0
        %5036 = vmatprep.subr.mxu0 0.0
        %5037 = vmatpush1.msra.mxu0 0.0
        %5038 = vmatprep.subr.mxu0 0.0
        %5039 = vmatpush1.msra.mxu0 0.0
        %5040 = vmatprep.subr.mxu0 0.0
        %5041 = vmatpush1.msra.mxu0 0.0
        %5042 = vmatprep.subr.mxu0 0.0
        %5043 = vmatpush1.msra.mxu0 0.0
        %5044 = vmatprep.subr.mxu0 0.0
        %5045 = vmatpush1.msra.mxu0 0.0
        %5046 = vmatprep.subr.mxu0 0.0
        %5047 = vmatpush1.msra.mxu0 0.0
        %5048 = vmatprep.subr.mxu0 0.0
        %5049 = vmatpush1.msra.mxu0 0.0
        %5050 = vmatprep.subr.mxu0 0.0
        %5051 = vmatpush1.msra.mxu0 0.0
        %5052 = vmatprep.subr.mxu0 0.0
        %5053 = vmatpush1.msra.mxu0 0.0
        %5054 = vmatprep.subr.mxu0 0.0
        %5055 = vmatpush1.msra.mxu0 0.0
        %5056 = vmatprep.subr.mxu0 0.0
        %5057 = vmatpush1.msra.mxu0 0.0
        %5058 = vmatprep.subr.mxu0 0.0
        %5059 = vmatpush1.msra.mxu0 0.0
        %5060 = vmatprep.subr.mxu0 0.0
        %5061 = vmatpush1.msra.mxu0 0.0
        %5062 = vmatprep.subr.mxu0 0.0
        %5063 = vmatpush1.msra.mxu0 0.0
        %5064 = vmatprep.subr.mxu0 0.0
        %5065 = vmatpush1.msra.mxu0 0.0
        %5066 = vmatprep.mubr.f32.mxu0 0.0
        %5067 = vmatmul.mubr.f32.gmra.mrb[0].mxu0 %v5000
        %v5068 = vpop.f32.mrb[0].mxu0
        %v5069 = vadd.f32 %v4998, %v5068
        %v5070 = vpop.f32.mrb[0].mxu0
        %5071 = vdwg.mxu0
        %v5072 = vmax.f32 %v5069, 0.0
        %v5073 = vld [vmem:[%s26] sm:$0xff]
        %v5074 = vld [vmem:[%s26 + $0x8] sm:$0xff]
        %v5075 = vld [vmem:[%s26 + $0x10] sm:$0xff]
        %v5076 = vld [vmem:[%s26 + $0x18] sm:$0xff]
        %v5077 = vld [vmem:[%s27 + $0x7] ss:$0 sm:$0xff]
        %v5079 = vsel %vm1081, %v5072, 0
        %5081 = vmatprep.subr.mxu0 0.0
        %5082 = vmatpush1.msra.mxu0 %v5073
        %5083 = vmatprep.subr.mxu0 0.0
        %5084 = vmatpush1.msra.mxu0 %v5074
        %5085 = vmatprep.subr.mxu0 0.0
        %5086 = vmatpush1.msra.mxu0 %v5075
        %5087 = vmatprep.subr.mxu0 0.0
        %5088 = vmatpush1.msra.mxu0 %v5076
        %5089 = vmatprep.subr.mxu0 0.0
        %5090 = vmatpush1.msra.mxu0 0.0
        %5091 = vmatprep.subr.mxu0 0.0
        %5092 = vmatpush1.msra.mxu0 0.0
        %5093 = vmatprep.subr.mxu0 0.0
        %5094 = vmatpush1.msra.mxu0 0.0
        %5095 = vmatprep.subr.mxu0 0.0
        %5096 = vmatpush1.msra.mxu0 0.0
        %5097 = vmatprep.subr.mxu0 0.0
        %5098 = vmatpush1.msra.mxu0 0.0
        %5099 = vmatprep.subr.mxu0 0.0
        %5100 = vmatpush1.msra.mxu0 0.0
        %5101 = vmatprep.subr.mxu0 0.0
        %5102 = vmatpush1.msra.mxu0 0.0
        %5103 = vmatprep.subr.mxu0 0.0
        %5104 = vmatpush1.msra.mxu0 0.0
        %5105 = vmatprep.subr.mxu0 0.0
        %5106 = vmatpush1.msra.mxu0 0.0
        %5107 = vmatprep.subr.mxu0 0.0
        %5108 = vmatpush1.msra.mxu0 0.0
        %5109 = vmatprep.subr.mxu0 0.0
        %5110 = vmatpush1.msra.mxu0 0.0
        %5111 = vmatprep.subr.mxu0 0.0
        %5112 = vmatpush1.msra.mxu0 0.0
        %5113 = vmatprep.subr.mxu0 0.0
        %5114 = vmatpush1.msra.mxu0 0.0
        %5115 = vmatprep.subr.mxu0 0.0
        %5116 = vmatpush1.msra.mxu0 0.0
        %5117 = vmatprep.subr.mxu0 0.0
        %5118 = vmatpush1.msra.mxu0 0.0
        %5119 = vmatprep.subr.mxu0 0.0
        %5120 = vmatpush1.msra.mxu0 0.0
        %5121 = vmatprep.subr.mxu0 0.0
        %5122 = vmatpush1.msra.mxu0 0.0
        %5123 = vmatprep.subr.mxu0 0.0
        %5124 = vmatpush1.msra.mxu0 0.0
        %5125 = vmatprep.subr.mxu0 0.0
        %5126 = vmatpush1.msra.mxu0 0.0
        %5127 = vmatprep.subr.mxu0 0.0
        %5128 = vmatpush1.msra.mxu0 0.0
        %5129 = vmatprep.subr.mxu0 0.0
        %5130 = vmatpush1.msra.mxu0 0.0
        %5131 = vmatprep.subr.mxu0 0.0
        %5132 = vmatpush1.msra.mxu0 0.0
        %5133 = vmatprep.subr.mxu0 0.0
        %5134 = vmatpush1.msra.mxu0 0.0
        %5135 = vmatprep.subr.mxu0 0.0
        %5136 = vmatpush1.msra.mxu0 0.0
        %5137 = vmatprep.subr.mxu0 0.0
        %5138 = vmatpush1.msra.mxu0 0.0
        %5139 = vmatprep.subr.mxu0 0.0
        %5140 = vmatpush1.msra.mxu0 0.0
        %5141 = vmatprep.subr.mxu0 0.0
        %5142 = vmatpush1.msra.mxu0 0.0
        %5143 = vmatprep.subr.mxu0 0.0
        %5144 = vmatpush1.msra.mxu0 0.0
        %5145 = vmatprep.mubr.f32.mxu0 0.0
        %5146 = vmatmul.mubr.f32.gmra.mrb[0].mxu0 %v5079
        %v5147 = vpop.f32.mrb[0].mxu0
        %v5148 = vadd.f32 %v5077, %v5147
        %v5149 = vpop.f32.mrb[0].mxu0
        %5150 = vdwg.mxu0
        %5151 = vst [vmem:[%s873] sm:$0x1] %v5148
        %s5152 = sand.u32 %s658, 1
        %s5153 = scalar_lea.sflag [#allocation3], %s5152
        %s5154 = sand.u32 %s658, 1
        %s5155 = scalar_lea.vmem [#allocation2], %s5154
        // Predicated region
        $region133: #{bc_model_pcl_forward.1} parent=131 // pred_check
          %p5156 = pneg %p668
        $region134: #{bc_model_pcl_forward.1} parent=131 // pred_check_branch
          %5158 = sbr.rel (%p5156) target = $region136
        $region135: #{bc_model_pcl_forward.1} parent=131 // pred_region
          %s5160 = ssub.s32 16, 16
          %5161 = vsyncadd %s5153, %s5160
          %s5162 = smul.addr %s42, 16
          %s5163 = scalar_lea.hbm %s28, %s5162
          %s5165 = sshll.u32 %s5155, 4
          %s5166 = int_to_ptr.vmem [resolvable:$true] %s5165
          %5168 = dma.vmem_to_hbm [thread:$0]  %s5166, 16, %s5163, %s5153
        $region136: #{bc_model_pcl_forward.1} parent=131 // pred_fallthru
          _
      $region132: #{bc_model_pcl_forward.1} parent=5 // pred_fallthru
        _
      %p5169 = scmp.le.s32.totalorder 2, %s37
      // Predicated region
      $region137: #{bc_model_pcl_forward.1} parent=5 // pred_check
        %p5170 = pneg %p5169
      $region138: #{bc_model_pcl_forward.1} parent=5 // pred_check_branch
        %5172 = sbr.rel (%p5170) target = $region140
      $region139: #{bc_model_pcl_forward.1} parent=5 // pred_region
        %s5173 = ssub.s32 %s37, 2
        // Predicated region
        $region141: #{bc_model_pcl_forward.1} parent=139 // pred_check
          %p5174 = pneg %p674
        $region142: #{bc_model_pcl_forward.1} parent=139 // pred_check_branch
          %5176 = sbr.rel (%p5174) target = $region144
        $region143: #{bc_model_pcl_forward.1} parent=139 // pred_region
          %s5177 = sand.u32 %s659, 1
          %s5178 = scalar_lea.sflag [#allocation3], %s5177
          %s5179 = sand.u32 %s659, 1
          %s5180 = scalar_lea.vmem [#allocation2], %s5179
          %5181 = dma.done %s5178, 16
        $region144: #{bc_model_pcl_forward.1} parent=139 // pred_fallthru
          _
      $region140: #{bc_model_pcl_forward.1} parent=5 // pred_fallthru
        _
    $region6: #{bc_model_pcl_forward.1} parent=1 // loop_footer
      %s41 = sadd.s32 1, %s37
    $region7: #{bc_model_pcl_forward.1} parent=1 // loop_footer_branch
      %36 = sbr.rel target = $region3
    $region8: #{bc_model_pcl_forward.1} parent=1 // loop_exit
      _
    %5182 = vsyncpa [#allocation3], 1
    %s5183 = scalar_lea.sflag [#allocation3], 1
    %5184 = vsyncpa %s5183, 1

</llo_original>
